<compile_context>
chip_gen: v5e
topology: v5e:2x2
jax: 0.10.0
libtpu: 0.0.40
codegen_flags: <defaults>
</compile_context>

<pallas_src>
import jax
import jax.numpy as jnp
from jax.experimental import pallas as pl
from jax.experimental.pallas import tpu as pltpu

D_MODEL = 256
D_FF = 512
N_HEADS = 4
N_LAYERS = 2
HEAD_DIM = D_MODEL // N_HEADS      # 64
LN_EPS = 1e-5
HEAD_PAD = 128                     # lane-dense padded head axis / padded output head
IN_PAD = 128                       # lane-dense padded fused-input feature axis
SMALL_W = 3 * D_MODEL              # width of the packed small-parameter slab (768)


def _erf(x):
    # Abramowitz & Stegun 7.1.26 rational approximation (max abs err ~1.5e-7),
    # built only from exp + elementary ops so it lowers cleanly on Mosaic.
    a1, a2, a3, a4, a5 = 0.254829592, -0.284496736, 1.421413741, -1.453152027, 1.061405429
    p = 0.3275911
    ax = jnp.abs(x)
    t = 1.0 / (1.0 + p * ax)
    poly = t * (a1 + t * (a2 + t * (a3 + t * (a4 + t * a5))))
    y = 1.0 - poly * jnp.exp(-ax * ax)
    return jnp.where(x >= 0, y, -y)


def _gelu_exact(x):
    # PyTorch activation='gelu' -> exact erf-based GELU.
    return 0.5 * x * (1.0 + _erf(x * 0.7071067811865476))


def _layernorm(x, w, b):
    mean = jnp.mean(x, axis=-1, keepdims=True)
    xc = x - mean
    var = jnp.mean(xc * xc, axis=-1, keepdims=True)
    return xc * jax.lax.rsqrt(var + LN_EPS) * w + b


def _mm_bf16(x_f32, w_bf16):
    # bf16 MXU operands, f32 accumulation.
    return jnp.dot(x_f32.astype(jnp.bfloat16), w_bf16, preferred_element_type=jnp.float32)


def transformer_prior_kernel(
    in_ref,        # (2B, 128) f32   fused zero-padded input features
    add_ref,       # (2B, 256) f32   time-emb + per-token input bias slab
    w_in_ref,      # (128, 256) f32  fused input projection weight
    hseg_ref,      # (256, 128) bf16 one-hot lane->head segment-sum matrix
    hbcast_ref,    # (128, 256) bf16 one-hot head->lane broadcast matrix
    small_ref,     # (N_LAYERS+1, 8, 768) f32 packed LN params + biases + b_out
    wqkv_ref,      # (N_LAYERS, 256, 768) bf16
    wo_ref,        # (N_LAYERS, 256, 256) bf16
    w1_ref,        # (N_LAYERS, 256, 512) bf16
    w2_ref,        # (N_LAYERS, 512, 256) bf16
    wout_ref,      # (256, 128) bf16 (zero-padded output head)
    out_ref,       # (B, 128) f32
):
    B = in_ref.shape[0] // 2
    scale = 1.0 / (HEAD_DIM ** 0.5)

    hseg = hseg_ref[...]
    hbcast = hbcast_ref[...]

    # Token slab: one fused input projection + (te + bias) slab.
    x = jnp.dot(in_ref[...], w_in_ref[...], preferred_element_type=jnp.float32) + add_ref[...]

    for l in range(N_LAYERS):
        ln1w = small_ref[l, 0:1, 0:D_MODEL]
        ln1b = small_ref[l, 1:2, 0:D_MODEL]
        ln2w = small_ref[l, 2:3, 0:D_MODEL]
        ln2b = small_ref[l, 3:4, 0:D_MODEL]
        b_qkv = small_ref[l, 4:5, :]
        bo = small_ref[l, 5:6, 0:D_MODEL]
        b1 = small_ref[l, 6:7, 0:D_FF]
        b2 = small_ref[l, 7:8, 0:D_MODEL]

        # ---------- self-attention block (norm_first) ----------
        n = _layernorm(x, ln1w, ln1b)
        qkv = _mm_bf16(n, wqkv_ref[l]) + b_qkv                  # (2B, 768) f32
        q = qkv[:, :D_MODEL]
        k = qkv[:, D_MODEL:2 * D_MODEL]
        v = qkv[:, 2 * D_MODEL:]
        # Swap the two tokens (rows [0,B) <-> [B,2B)) with one XLU sublane rotate.
        k_sw = pltpu.roll(k, shift=B, axis=0)
        v_sw = pltpu.roll(v, shift=B, axis=0)

        # Per-(row, head) logits via lane-dense segment-sum matmul (bf16 operands).
        s_same = _mm_bf16(q * k, hseg) * scale                  # (2B, 128)
        s_swap = _mm_bf16(q * k_sw, hseg) * scale

        # Softmax over the 2 keys (same token vs. other token), max-stabilized, f32 math.
        m = jnp.maximum(s_same, s_swap)
        e_same = jnp.exp(s_same - m)
        e_swap = jnp.exp(s_swap - m)
        inv = pl.reciprocal(e_same + e_swap, approx=True)
        p_same = e_same * inv
        p_swap = e_swap * inv

        # Broadcast per-head probabilities back to 256 lanes and combine with V.
        attn = (_mm_bf16(p_same, hbcast) * v + _mm_bf16(p_swap, hbcast) * v_sw)

        x = x + _mm_bf16(attn, wo_ref[l]) + bo

        # ---------- feed-forward block (norm_first) ----------
        f = _layernorm(x, ln2w, ln2b)
        h = _gelu_exact(_mm_bf16(f, w1_ref[l]) + b1)
        x = x + _mm_bf16(h, w2_ref[l]) + b2

    # z0_pred = out(h[:, 1]) -> output head on the latent-token rows, lane-dense padded.
    b_out = small_ref[N_LAYERS, 0:1, 0:HEAD_PAD]
    out_ref[...] = _mm_bf16(x[B:], wout_ref[...]) + b_out


def transformer_prior_forward(z_t, s, t, params):
    B, latent_dim = z_t.shape
    state_dim = s.shape[1]
    assert state_dim + latent_dim <= IN_PAD
    Bp = ((B + 7) // 8) * 8  # keep mid-slab row slices / roll (8,128)-tile aligned

    # time-embedding gather is glue (plain JAX); everything else runs in the kernel.
    te = jnp.take(params["time_emb"], t - 1, axis=0)            # (B, D_MODEL)
    pad = Bp - B
    if pad:
        z_t = jnp.pad(z_t, ((0, pad), (0, 0)))
        s = jnp.pad(s, ((0, pad), (0, 0)))
        te = jnp.pad(te, ((0, pad), (0, 0)))

    # Fused-input slab: state features in lanes [0:state_dim] (rows [0,Bp)),
    # latent features in lanes [state_dim:state_dim+latent_dim] (rows [Bp,2Bp)).
    in_slab = jnp.zeros((2 * Bp, IN_PAD), jnp.float32)
    in_slab = in_slab.at[:Bp, :state_dim].set(s)
    in_slab = in_slab.at[Bp:, state_dim:state_dim + latent_dim].set(z_t)
    # te + per-token input-projection bias, added once to the whole slab in-kernel.
    add_slab = jnp.concatenate([te + params["b_state"], te + params["b_lat"]], axis=0)

    inputs = [
        in_slab, add_slab, params["w_in"],
        params["hseg"], params["hbcast"], params["small"],
        params["w_qkv"], params["wo"], params["w1"], params["w2"], params["w_out"],
    ]
    vmem = pl.BlockSpec(memory_space=pltpu.MemorySpace.VMEM)
    out_padded = pl.pallas_call(
        transformer_prior_kernel,
        out_shape=jax.ShapeDtypeStruct((Bp, HEAD_PAD), jnp.float32),
        in_specs=[vmem] * len(inputs),
        out_specs=vmem,
    )(*inputs)
    return out_padded[:B, :latent_dim]


def init_params(key, latent_dim, state_dim):
    ks = iter(jax.random.split(key, 32))

    def w(shape, scale=0.02):
        return scale * jax.random.normal(next(ks), shape, dtype=jnp.float32)

    # --- fused input projection (stored transposed: (in, out)), zero-padded rows ---
    w_state = w((state_dim, D_MODEL))
    b_state = w((1, D_MODEL))
    w_lat = w((latent_dim, D_MODEL))
    b_lat = w((1, D_MODEL))
    w_in = jnp.zeros((IN_PAD, D_MODEL), jnp.float32)
    w_in = w_in.at[:state_dim].set(w_state)
    w_in = w_in.at[state_dim:state_dim + latent_dim].set(w_lat)

    time_emb = w((200, D_MODEL))

    # --- packed small params: LN scales/offsets (PyTorch defaults ones/zeros) + biases ---
    # per layer rows: 0 ln1_w | 1 ln1_b | 2 ln2_w | 3 ln2_b | 4 b_qkv | 5 bo | 6 b1 | 7 b2
    # extra "layer" N_LAYERS, row 0, lanes [0:HEAD_PAD]: b_out (zero-padded).
    small = jnp.zeros((N_LAYERS + 1, 8, SMALL_W), jnp.float32)
    for l in range(N_LAYERS):
        small = small.at[l, 0, :D_MODEL].set(jnp.ones((D_MODEL,), jnp.float32))
        small = small.at[l, 2, :D_MODEL].set(jnp.ones((D_MODEL,), jnp.float32))
        small = small.at[l, 4, :].set(w((3 * D_MODEL,)))
        small = small.at[l, 5, :D_MODEL].set(w((D_MODEL,)))
        small = small.at[l, 6, :D_FF].set(w((D_FF,)))
        small = small.at[l, 7, :D_MODEL].set(w((D_MODEL,)))
    small = small.at[N_LAYERS, 0, :latent_dim].set(w((latent_dim,)))

    # --- output head, zero-padded to a lane-dense 128-wide slab ---
    w_out = jnp.zeros((D_MODEL, HEAD_PAD), jnp.float32).at[:, :latent_dim].set(
        w((D_MODEL, latent_dim)))

    # --- big per-layer weights, bf16 in HBM (f32 accumulation in-kernel) ---
    w_qkv = jnp.stack([w((D_MODEL, 3 * D_MODEL)) for _ in range(N_LAYERS)]).astype(jnp.bfloat16)
    wo = jnp.stack([w((D_MODEL, D_MODEL)) for _ in range(N_LAYERS)]).astype(jnp.bfloat16)
    w1 = jnp.stack([w((D_MODEL, D_FF)) for _ in range(N_LAYERS)]).astype(jnp.bfloat16)
    w2 = jnp.stack([w((D_FF, D_MODEL)) for _ in range(N_LAYERS)]).astype(jnp.bfloat16)

    # --- hoisted one-hot head segment-sum / broadcast constants (exact in bf16) ---
    lane_head = jnp.arange(D_MODEL, dtype=jnp.int32) // HEAD_DIM          # (256,)
    head_idx = jnp.arange(HEAD_PAD, dtype=jnp.int32)                      # (128,)
    hseg = (lane_head[:, None] == head_idx[None, :]).astype(jnp.bfloat16)  # (256, 128)
    hbcast = jnp.transpose(hseg)                                           # (128, 256)

    return {
        "w_in": w_in, "b_state": b_state, "b_lat": b_lat,
        "time_emb": time_emb,
        "hseg": hseg, "hbcast": hbcast,
        "small": small,
        "w_qkv": w_qkv, "wo": wo, "w1": w1, "w2": w2,
        "w_out": w_out.astype(jnp.bfloat16),
    }


if __name__ == "__main__":
    key = jax.random.PRNGKey(0)
    latent_dim, state_dim, B = 16, 8, 8
    kp, kz, ks_, kt = jax.random.split(key, 4)

    params = init_params(kp, latent_dim, state_dim)
    z_t = jax.random.normal(kz, (B, latent_dim), dtype=jnp.float32)
    s = jax.random.normal(ks_, (B, state_dim), dtype=jnp.float32)
    t = jax.random.randint(kt, (B,), 1, 201)  # integer timesteps 1..200

    out = transformer_prior_forward(z_t, s, t, params)
    out = jax.block_until_ready(out)
    assert out.shape == (B, latent_dim) and out.dtype == jnp.float32
    print("KERNEL_OK")
</pallas_src>

<mosaic_0001>
module attributes {stable_mosaic.version = 11 : i64} {
  func.func @transformer_prior_kernel(%arg0: memref<16x128xf32, #tpu.memory_space<vmem>>, %arg1: memref<16x256xf32, #tpu.memory_space<vmem>>, %arg2: memref<128x256xf32, #tpu.memory_space<vmem>>, %arg3: memref<256x128xbf16, #tpu.memory_space<vmem>>, %arg4: memref<128x256xbf16, #tpu.memory_space<vmem>>, %arg5: memref<3x8x768xf32, #tpu.memory_space<vmem>>, %arg6: memref<2x256x768xbf16, #tpu.memory_space<vmem>>, %arg7: memref<2x256x256xbf16, #tpu.memory_space<vmem>>, %arg8: memref<2x256x512xbf16, #tpu.memory_space<vmem>>, %arg9: memref<2x512x256xbf16, #tpu.memory_space<vmem>>, %arg10: memref<256x128xbf16, #tpu.memory_space<vmem>>, %arg11: memref<8x128xf32, #tpu.memory_space<vmem>>) attributes {dimension_semantics = [], scalar_prefetch = 0 : i64, scratch_operands = 0 : i64, tpu.core_type = #tpu.core_type<tc>} {
    %c0 = arith.constant 0 : index
    %c0_0 = arith.constant 0 : index
    %0 = vector.load %arg3[%c0, %c0_0] : memref<256x128xbf16, #tpu.memory_space<vmem>>, vector<256x128xbf16>
    %c0_1 = arith.constant 0 : index
    %c0_2 = arith.constant 0 : index
    %1 = vector.load %arg4[%c0_1, %c0_2] : memref<128x256xbf16, #tpu.memory_space<vmem>>, vector<128x256xbf16>
    %c0_3 = arith.constant 0 : index
    %c0_4 = arith.constant 0 : index
    %2 = vector.load %arg0[%c0_3, %c0_4] : memref<16x128xf32, #tpu.memory_space<vmem>>, vector<16x128xf32>
    %c0_5 = arith.constant 0 : index
    %c0_6 = arith.constant 0 : index
    %3 = vector.load %arg2[%c0_5, %c0_6] : memref<128x256xf32, #tpu.memory_space<vmem>>, vector<128x256xf32>
    %cst = arith.constant dense<0.000000e+00> : vector<16x256xf32>
    %4 = tpu.matmul %2, %3, %cst {dimension_numbers = #tpu.dot_dimension_numbers<[1], [0], [0], [1], [0, 0, 1, 1], [], []>} : vector<16x128xf32>, vector<128x256xf32>, vector<16x256xf32> -> vector<16x256xf32>
    %c0_7 = arith.constant 0 : index
    %c0_8 = arith.constant 0 : index
    %5 = vector.load %arg1[%c0_7, %c0_8] : memref<16x256xf32, #tpu.memory_space<vmem>>, vector<16x256xf32>
    %6 = arith.addf %4, %5 : vector<16x256xf32>
    %c0_9 = arith.constant 0 : index
    %c0_10 = arith.constant 0 : index
    %c0_11 = arith.constant 0 : index
    %7 = vector.load %arg5[%c0_9, %c0_10, %c0_11] : memref<3x8x768xf32, #tpu.memory_space<vmem>>, vector<1x1x256xf32>
    %8 = vector.shape_cast %7 : vector<1x1x256xf32> to vector<1x256xf32>
    %c0_12 = arith.constant 0 : index
    %c1 = arith.constant 1 : index
    %c0_13 = arith.constant 0 : index
    %9 = vector.load %arg5[%c0_12, %c1, %c0_13] : memref<3x8x768xf32, #tpu.memory_space<vmem>>, vector<1x1x256xf32>
    %10 = vector.shape_cast %9 : vector<1x1x256xf32> to vector<1x256xf32>
    %c0_14 = arith.constant 0 : index
    %c2 = arith.constant 2 : index
    %c0_15 = arith.constant 0 : index
    %11 = vector.load %arg5[%c0_14, %c2, %c0_15] : memref<3x8x768xf32, #tpu.memory_space<vmem>>, vector<1x1x256xf32>
    %12 = vector.shape_cast %11 : vector<1x1x256xf32> to vector<1x256xf32>
    %c0_16 = arith.constant 0 : index
    %c3 = arith.constant 3 : index
    %c0_17 = arith.constant 0 : index
    %13 = vector.load %arg5[%c0_16, %c3, %c0_17] : memref<3x8x768xf32, #tpu.memory_space<vmem>>, vector<1x1x256xf32>
    %14 = vector.shape_cast %13 : vector<1x1x256xf32> to vector<1x256xf32>
    %c0_18 = arith.constant 0 : index
    %c4 = arith.constant 4 : index
    %c0_19 = arith.constant 0 : index
    %15 = vector.load %arg5[%c0_18, %c4, %c0_19] : memref<3x8x768xf32, #tpu.memory_space<vmem>>, vector<1x1x768xf32>
    %16 = vector.shape_cast %15 : vector<1x1x768xf32> to vector<1x768xf32>
    %c0_20 = arith.constant 0 : index
    %c5 = arith.constant 5 : index
    %c0_21 = arith.constant 0 : index
    %17 = vector.load %arg5[%c0_20, %c5, %c0_21] : memref<3x8x768xf32, #tpu.memory_space<vmem>>, vector<1x1x256xf32>
    %18 = vector.shape_cast %17 : vector<1x1x256xf32> to vector<1x256xf32>
    %c0_22 = arith.constant 0 : index
    %c6 = arith.constant 6 : index
    %c0_23 = arith.constant 0 : index
    %19 = vector.load %arg5[%c0_22, %c6, %c0_23] : memref<3x8x768xf32, #tpu.memory_space<vmem>>, vector<1x1x512xf32>
    %20 = vector.shape_cast %19 : vector<1x1x512xf32> to vector<1x512xf32>
    %c0_24 = arith.constant 0 : index
    %c7 = arith.constant 7 : index
    %c0_25 = arith.constant 0 : index
    %21 = vector.load %arg5[%c0_24, %c7, %c0_25] : memref<3x8x768xf32, #tpu.memory_space<vmem>>, vector<1x1x256xf32>
    %22 = vector.shape_cast %21 : vector<1x1x256xf32> to vector<1x256xf32>
    %cst_26 = arith.constant dense<0.000000e+00> : vector<16xf32>
    %23 = vector.multi_reduction <add>, %6, %cst_26 [1] : vector<16x256xf32> to vector<16xf32>
    %24 = vector.shape_cast %23 : vector<16xf32> to vector<16x1xf32>
    %cst_27 = arith.constant 2.560000e+02 : f32
    %25 = vector.broadcast %cst_27 : f32 to vector<16x1xf32>
    %26 = arith.divf %24, %25 : vector<16x1xf32>
    %27 = vector.broadcast %26 : vector<16x1xf32> to vector<16x256xf32>
    %28 = arith.subf %6, %27 : vector<16x256xf32>
    %29 = arith.mulf %28, %28 : vector<16x256xf32>
    %cst_28 = arith.constant dense<0.000000e+00> : vector<16xf32>
    %30 = vector.multi_reduction <add>, %29, %cst_28 [1] : vector<16x256xf32> to vector<16xf32>
    %31 = vector.shape_cast %30 : vector<16xf32> to vector<16x1xf32>
    %cst_29 = arith.constant 2.560000e+02 : f32
    %32 = vector.broadcast %cst_29 : f32 to vector<16x1xf32>
    %33 = arith.divf %31, %32 : vector<16x1xf32>
    %cst_30 = arith.constant 9.99999974E-6 : f32
    %34 = vector.broadcast %cst_30 : f32 to vector<16x1xf32>
    %35 = arith.addf %33, %34 : vector<16x1xf32>
    %36 = math.rsqrt %35 : vector<16x1xf32>
    %37 = vector.broadcast %36 : vector<16x1xf32> to vector<16x256xf32>
    %38 = arith.mulf %28, %37 : vector<16x256xf32>
    %39 = vector.broadcast %8 : vector<1x256xf32> to vector<16x256xf32>
    %40 = arith.mulf %38, %39 : vector<16x256xf32>
    %41 = vector.broadcast %10 : vector<1x256xf32> to vector<16x256xf32>
    %42 = arith.addf %40, %41 : vector<16x256xf32>
    %c0_31 = arith.constant 0 : index
    %c0_32 = arith.constant 0 : index
    %c0_33 = arith.constant 0 : index
    %43 = vector.load %arg6[%c0_31, %c0_32, %c0_33] : memref<2x256x768xbf16, #tpu.memory_space<vmem>>, vector<1x256x768xbf16>
    %44 = vector.shape_cast %43 : vector<1x256x768xbf16> to vector<256x768xbf16>
    %45 = arith.truncf %42 : vector<16x256xf32> to vector<16x256xbf16>
    %cst_34 = arith.constant dense<0.000000e+00> : vector<16x768xf32>
    %46 = tpu.matmul %45, %44, %cst_34 {dimension_numbers = #tpu.dot_dimension_numbers<[1], [0], [0], [1], [0, 0, 1, 1], [], []>} : vector<16x256xbf16>, vector<256x768xbf16>, vector<16x768xf32> -> vector<16x768xf32>
    %47 = vector.broadcast %16 : vector<1x768xf32> to vector<16x768xf32>
    %48 = arith.addf %46, %47 : vector<16x768xf32>
    %49 = vector.extract_strided_slice %48 {offsets = [0, 0], sizes = [16, 256], strides = [1, 1]} : vector<16x768xf32> to vector<16x256xf32>
    %50 = vector.extract_strided_slice %48 {offsets = [0, 256], sizes = [16, 256], strides = [1, 1]} : vector<16x768xf32> to vector<16x256xf32>
    %51 = vector.extract_strided_slice %48 {offsets = [0, 512], sizes = [16, 256], strides = [1, 1]} : vector<16x768xf32> to vector<16x256xf32>
    %c8_i32 = arith.constant 8 : i32
    %52 = tpu.dynamic_rotate %50 by %c8_i32 dim 0 : vector<16x256xf32>, i32 -> vector<16x256xf32>
    %c8_i32_35 = arith.constant 8 : i32
    %53 = tpu.dynamic_rotate %51 by %c8_i32_35 dim 0 : vector<16x256xf32>, i32 -> vector<16x256xf32>
    %54 = arith.mulf %49, %50 : vector<16x256xf32>
    %55 = arith.truncf %54 : vector<16x256xf32> to vector<16x256xbf16>
    %cst_36 = arith.constant dense<0.000000e+00> : vector<16x128xf32>
    %56 = tpu.matmul %55, %0, %cst_36 {dimension_numbers = #tpu.dot_dimension_numbers<[1], [0], [0], [1], [0, 0, 1, 1], [], []>} : vector<16x256xbf16>, vector<256x128xbf16>, vector<16x128xf32> -> vector<16x128xf32>
    %cst_37 = arith.constant 1.250000e-01 : f32
    %57 = vector.broadcast %cst_37 : f32 to vector<16x128xf32>
    %58 = arith.mulf %56, %57 : vector<16x128xf32>
    %59 = arith.mulf %49, %52 : vector<16x256xf32>
    %60 = arith.truncf %59 : vector<16x256xf32> to vector<16x256xbf16>
    %cst_38 = arith.constant dense<0.000000e+00> : vector<16x128xf32>
    %61 = tpu.matmul %60, %0, %cst_38 {dimension_numbers = #tpu.dot_dimension_numbers<[1], [0], [0], [1], [0, 0, 1, 1], [], []>} : vector<16x256xbf16>, vector<256x128xbf16>, vector<16x128xf32> -> vector<16x128xf32>
    %cst_39 = arith.constant 1.250000e-01 : f32
    %62 = vector.broadcast %cst_39 : f32 to vector<16x128xf32>
    %63 = arith.mulf %61, %62 : vector<16x128xf32>
    %64 = arith.maximumf %58, %63 : vector<16x128xf32>
    %65 = arith.subf %58, %64 : vector<16x128xf32>
    %66 = math.exp %65 : vector<16x128xf32>
    %67 = arith.subf %63, %64 : vector<16x128xf32>
    %68 = math.exp %67 : vector<16x128xf32>
    %69 = arith.addf %66, %68 : vector<16x128xf32>
    %70 = tpu.reciprocal %69 {approx = true} : vector<16x128xf32> -> vector<16x128xf32>
    %71 = arith.mulf %66, %70 : vector<16x128xf32>
    %72 = arith.mulf %68, %70 : vector<16x128xf32>
    %73 = arith.truncf %71 : vector<16x128xf32> to vector<16x128xbf16>
    %cst_40 = arith.constant dense<0.000000e+00> : vector<16x256xf32>
    %74 = tpu.matmul %73, %1, %cst_40 {dimension_numbers = #tpu.dot_dimension_numbers<[1], [0], [0], [1], [0, 0, 1, 1], [], []>} : vector<16x128xbf16>, vector<128x256xbf16>, vector<16x256xf32> -> vector<16x256xf32>
    %75 = arith.mulf %74, %51 : vector<16x256xf32>
    %76 = arith.truncf %72 : vector<16x128xf32> to vector<16x128xbf16>
    %cst_41 = arith.constant dense<0.000000e+00> : vector<16x256xf32>
    %77 = tpu.matmul %76, %1, %cst_41 {dimension_numbers = #tpu.dot_dimension_numbers<[1], [0], [0], [1], [0, 0, 1, 1], [], []>} : vector<16x128xbf16>, vector<128x256xbf16>, vector<16x256xf32> -> vector<16x256xf32>
    %78 = arith.mulf %77, %53 : vector<16x256xf32>
    %79 = arith.addf %75, %78 : vector<16x256xf32>
    %c0_42 = arith.constant 0 : index
    %c0_43 = arith.constant 0 : index
    %c0_44 = arith.constant 0 : index
    %80 = vector.load %arg7[%c0_42, %c0_43, %c0_44] : memref<2x256x256xbf16, #tpu.memory_space<vmem>>, vector<1x256x256xbf16>
    %81 = vector.shape_cast %80 : vector<1x256x256xbf16> to vector<256x256xbf16>
    %82 = arith.truncf %79 : vector<16x256xf32> to vector<16x256xbf16>
    %cst_45 = arith.constant dense<0.000000e+00> : vector<16x256xf32>
    %83 = tpu.matmul %82, %81, %cst_45 {dimension_numbers = #tpu.dot_dimension_numbers<[1], [0], [0], [1], [0, 0, 1, 1], [], []>} : vector<16x256xbf16>, vector<256x256xbf16>, vector<16x256xf32> -> vector<16x256xf32>
    %84 = arith.addf %6, %83 : vector<16x256xf32>
    %85 = vector.broadcast %18 : vector<1x256xf32> to vector<16x256xf32>
    %86 = arith.addf %84, %85 : vector<16x256xf32>
    %cst_46 = arith.constant dense<0.000000e+00> : vector<16xf32>
    %87 = vector.multi_reduction <add>, %86, %cst_46 [1] : vector<16x256xf32> to vector<16xf32>
    %88 = vector.shape_cast %87 : vector<16xf32> to vector<16x1xf32>
    %cst_47 = arith.constant 2.560000e+02 : f32
    %89 = vector.broadcast %cst_47 : f32 to vector<16x1xf32>
    %90 = arith.divf %88, %89 : vector<16x1xf32>
    %91 = vector.broadcast %90 : vector<16x1xf32> to vector<16x256xf32>
    %92 = arith.subf %86, %91 : vector<16x256xf32>
    %93 = arith.mulf %92, %92 : vector<16x256xf32>
    %cst_48 = arith.constant dense<0.000000e+00> : vector<16xf32>
    %94 = vector.multi_reduction <add>, %93, %cst_48 [1] : vector<16x256xf32> to vector<16xf32>
    %95 = vector.shape_cast %94 : vector<16xf32> to vector<16x1xf32>
    %cst_49 = arith.constant 2.560000e+02 : f32
    %96 = vector.broadcast %cst_49 : f32 to vector<16x1xf32>
    %97 = arith.divf %95, %96 : vector<16x1xf32>
    %cst_50 = arith.constant 9.99999974E-6 : f32
    %98 = vector.broadcast %cst_50 : f32 to vector<16x1xf32>
    %99 = arith.addf %97, %98 : vector<16x1xf32>
    %100 = math.rsqrt %99 : vector<16x1xf32>
    %101 = vector.broadcast %100 : vector<16x1xf32> to vector<16x256xf32>
    %102 = arith.mulf %92, %101 : vector<16x256xf32>
    %103 = vector.broadcast %12 : vector<1x256xf32> to vector<16x256xf32>
    %104 = arith.mulf %102, %103 : vector<16x256xf32>
    %105 = vector.broadcast %14 : vector<1x256xf32> to vector<16x256xf32>
    %106 = arith.addf %104, %105 : vector<16x256xf32>
    %c0_51 = arith.constant 0 : index
    %c0_52 = arith.constant 0 : index
    %c0_53 = arith.constant 0 : index
    %107 = vector.load %arg8[%c0_51, %c0_52, %c0_53] : memref<2x256x512xbf16, #tpu.memory_space<vmem>>, vector<1x256x512xbf16>
    %108 = vector.shape_cast %107 : vector<1x256x512xbf16> to vector<256x512xbf16>
    %109 = arith.truncf %106 : vector<16x256xf32> to vector<16x256xbf16>
    %cst_54 = arith.constant dense<0.000000e+00> : vector<16x512xf32>
    %110 = tpu.matmul %109, %108, %cst_54 {dimension_numbers = #tpu.dot_dimension_numbers<[1], [0], [0], [1], [0, 0, 1, 1], [], []>} : vector<16x256xbf16>, vector<256x512xbf16>, vector<16x512xf32> -> vector<16x512xf32>
    %111 = vector.broadcast %20 : vector<1x512xf32> to vector<16x512xf32>
    %112 = arith.addf %110, %111 : vector<16x512xf32>
    %cst_55 = arith.constant 5.000000e-01 : f32
    %113 = vector.broadcast %cst_55 : f32 to vector<16x512xf32>
    %114 = arith.mulf %113, %112 : vector<16x512xf32>
    %cst_56 = arith.constant 0.707106769 : f32
    %115 = vector.broadcast %cst_56 : f32 to vector<16x512xf32>
    %116 = arith.mulf %112, %115 : vector<16x512xf32>
    %117 = math.absf %116 : vector<16x512xf32>
    %cst_57 = arith.constant 0.327591091 : f32
    %118 = vector.broadcast %cst_57 : f32 to vector<16x512xf32>
    %119 = arith.mulf %118, %117 : vector<16x512xf32>
    %cst_58 = arith.constant 1.000000e+00 : f32
    %120 = vector.broadcast %cst_58 : f32 to vector<16x512xf32>
    %121 = arith.addf %120, %119 : vector<16x512xf32>
    %cst_59 = arith.constant 1.000000e+00 : f32
    %122 = vector.broadcast %cst_59 : f32 to vector<16x512xf32>
    %123 = arith.divf %122, %121 : vector<16x512xf32>
    %cst_60 = arith.constant 1.06140542 : f32
    %124 = vector.broadcast %cst_60 : f32 to vector<16x512xf32>
    %125 = arith.mulf %123, %124 : vector<16x512xf32>
    %cst_61 = arith.constant -1.45315206 : f32
    %126 = vector.broadcast %cst_61 : f32 to vector<16x512xf32>
    %127 = arith.addf %126, %125 : vector<16x512xf32>
    %128 = arith.mulf %123, %127 : vector<16x512xf32>
    %cst_62 = arith.constant 1.42141378 : f32
    %129 = vector.broadcast %cst_62 : f32 to vector<16x512xf32>
    %130 = arith.addf %129, %128 : vector<16x512xf32>
    %131 = arith.mulf %123, %130 : vector<16x512xf32>
    %cst_63 = arith.constant -0.284496725 : f32
    %132 = vector.broadcast %cst_63 : f32 to vector<16x512xf32>
    %133 = arith.addf %132, %131 : vector<16x512xf32>
    %134 = arith.mulf %123, %133 : vector<16x512xf32>
    %cst_64 = arith.constant 0.254829586 : f32
    %135 = vector.broadcast %cst_64 : f32 to vector<16x512xf32>
    %136 = arith.addf %135, %134 : vector<16x512xf32>
    %137 = arith.mulf %123, %136 : vector<16x512xf32>
    %cst_65 = arith.constant 0.000000e+00 : f32
    %138 = vector.broadcast %cst_65 : f32 to vector<16x512xf32>
    %139 = arith.subf %138, %117 : vector<16x512xf32>
    %140 = arith.mulf %139, %117 : vector<16x512xf32>
    %141 = math.exp %140 : vector<16x512xf32>
    %142 = arith.mulf %137, %141 : vector<16x512xf32>
    %cst_66 = arith.constant 1.000000e+00 : f32
    %143 = vector.broadcast %cst_66 : f32 to vector<16x512xf32>
    %144 = arith.subf %143, %142 : vector<16x512xf32>
    %cst_67 = arith.constant 0.000000e+00 : f32
    %145 = vector.broadcast %cst_67 : f32 to vector<16x512xf32>
    %146 = arith.cmpf oge, %116, %145 : vector<16x512xf32>
    %cst_68 = arith.constant 0.000000e+00 : f32
    %147 = vector.broadcast %cst_68 : f32 to vector<16x512xf32>
    %148 = arith.subf %147, %144 : vector<16x512xf32>
    %149 = arith.select %146, %144, %148 : vector<16x512xi1>, vector<16x512xf32>
    %cst_69 = arith.constant 1.000000e+00 : f32
    %150 = vector.broadcast %cst_69 : f32 to vector<16x512xf32>
    %151 = arith.addf %150, %149 : vector<16x512xf32>
    %152 = arith.mulf %114, %151 : vector<16x512xf32>
    %c0_70 = arith.constant 0 : index
    %c0_71 = arith.constant 0 : index
    %c0_72 = arith.constant 0 : index
    %153 = vector.load %arg9[%c0_70, %c0_71, %c0_72] : memref<2x512x256xbf16, #tpu.memory_space<vmem>>, vector<1x512x256xbf16>
    %154 = vector.shape_cast %153 : vector<1x512x256xbf16> to vector<512x256xbf16>
    %155 = arith.truncf %152 : vector<16x512xf32> to vector<16x512xbf16>
    %cst_73 = arith.constant dense<0.000000e+00> : vector<16x256xf32>
    %156 = tpu.matmul %155, %154, %cst_73 {dimension_numbers = #tpu.dot_dimension_numbers<[1], [0], [0], [1], [0, 0, 1, 1], [], []>} : vector<16x512xbf16>, vector<512x256xbf16>, vector<16x256xf32> -> vector<16x256xf32>
    %157 = arith.addf %86, %156 : vector<16x256xf32>
    %158 = vector.broadcast %22 : vector<1x256xf32> to vector<16x256xf32>
    %159 = arith.addf %157, %158 : vector<16x256xf32>
    %c1_74 = arith.constant 1 : index
    %c0_75 = arith.constant 0 : index
    %c0_76 = arith.constant 0 : index
    %160 = vector.load %arg5[%c1_74, %c0_75, %c0_76] : memref<3x8x768xf32, #tpu.memory_space<vmem>>, vector<1x1x256xf32>
    %161 = vector.shape_cast %160 : vector<1x1x256xf32> to vector<1x256xf32>
    %c1_77 = arith.constant 1 : index
    %c1_78 = arith.constant 1 : index
    %c0_79 = arith.constant 0 : index
    %162 = vector.load %arg5[%c1_77, %c1_78, %c0_79] : memref<3x8x768xf32, #tpu.memory_space<vmem>>, vector<1x1x256xf32>
    %163 = vector.shape_cast %162 : vector<1x1x256xf32> to vector<1x256xf32>
    %c1_80 = arith.constant 1 : index
    %c2_81 = arith.constant 2 : index
    %c0_82 = arith.constant 0 : index
    %164 = vector.load %arg5[%c1_80, %c2_81, %c0_82] : memref<3x8x768xf32, #tpu.memory_space<vmem>>, vector<1x1x256xf32>
    %165 = vector.shape_cast %164 : vector<1x1x256xf32> to vector<1x256xf32>
    %c1_83 = arith.constant 1 : index
    %c3_84 = arith.constant 3 : index
    %c0_85 = arith.constant 0 : index
    %166 = vector.load %arg5[%c1_83, %c3_84, %c0_85] : memref<3x8x768xf32, #tpu.memory_space<vmem>>, vector<1x1x256xf32>
    %167 = vector.shape_cast %166 : vector<1x1x256xf32> to vector<1x256xf32>
    %c1_86 = arith.constant 1 : index
    %c4_87 = arith.constant 4 : index
    %c0_88 = arith.constant 0 : index
    %168 = vector.load %arg5[%c1_86, %c4_87, %c0_88] : memref<3x8x768xf32, #tpu.memory_space<vmem>>, vector<1x1x768xf32>
    %169 = vector.shape_cast %168 : vector<1x1x768xf32> to vector<1x768xf32>
    %c1_89 = arith.constant 1 : index
    %c5_90 = arith.constant 5 : index
    %c0_91 = arith.constant 0 : index
    %170 = vector.load %arg5[%c1_89, %c5_90, %c0_91] : memref<3x8x768xf32, #tpu.memory_space<vmem>>, vector<1x1x256xf32>
    %171 = vector.shape_cast %170 : vector<1x1x256xf32> to vector<1x256xf32>
    %c1_92 = arith.constant 1 : index
    %c6_93 = arith.constant 6 : index
    %c0_94 = arith.constant 0 : index
    %172 = vector.load %arg5[%c1_92, %c6_93, %c0_94] : memref<3x8x768xf32, #tpu.memory_space<vmem>>, vector<1x1x512xf32>
    %173 = vector.shape_cast %172 : vector<1x1x512xf32> to vector<1x512xf32>
    %c1_95 = arith.constant 1 : index
    %c7_96 = arith.constant 7 : index
    %c0_97 = arith.constant 0 : index
    %174 = vector.load %arg5[%c1_95, %c7_96, %c0_97] : memref<3x8x768xf32, #tpu.memory_space<vmem>>, vector<1x1x256xf32>
    %175 = vector.shape_cast %174 : vector<1x1x256xf32> to vector<1x256xf32>
    %cst_98 = arith.constant dense<0.000000e+00> : vector<16xf32>
    %176 = vector.multi_reduction <add>, %159, %cst_98 [1] : vector<16x256xf32> to vector<16xf32>
    %177 = vector.shape_cast %176 : vector<16xf32> to vector<16x1xf32>
    %cst_99 = arith.constant 2.560000e+02 : f32
    %178 = vector.broadcast %cst_99 : f32 to vector<16x1xf32>
    %179 = arith.divf %177, %178 : vector<16x1xf32>
    %180 = vector.broadcast %179 : vector<16x1xf32> to vector<16x256xf32>
    %181 = arith.subf %159, %180 : vector<16x256xf32>
    %182 = arith.mulf %181, %181 : vector<16x256xf32>
    %cst_100 = arith.constant dense<0.000000e+00> : vector<16xf32>
    %183 = vector.multi_reduction <add>, %182, %cst_100 [1] : vector<16x256xf32> to vector<16xf32>
    %184 = vector.shape_cast %183 : vector<16xf32> to vector<16x1xf32>
    %cst_101 = arith.constant 2.560000e+02 : f32
    %185 = vector.broadcast %cst_101 : f32 to vector<16x1xf32>
    %186 = arith.divf %184, %185 : vector<16x1xf32>
    %cst_102 = arith.constant 9.99999974E-6 : f32
    %187 = vector.broadcast %cst_102 : f32 to vector<16x1xf32>
    %188 = arith.addf %186, %187 : vector<16x1xf32>
    %189 = math.rsqrt %188 : vector<16x1xf32>
    %190 = vector.broadcast %189 : vector<16x1xf32> to vector<16x256xf32>
    %191 = arith.mulf %181, %190 : vector<16x256xf32>
    %192 = vector.broadcast %161 : vector<1x256xf32> to vector<16x256xf32>
    %193 = arith.mulf %191, %192 : vector<16x256xf32>
    %194 = vector.broadcast %163 : vector<1x256xf32> to vector<16x256xf32>
    %195 = arith.addf %193, %194 : vector<16x256xf32>
    %c1_103 = arith.constant 1 : index
    %c0_104 = arith.constant 0 : index
    %c0_105 = arith.constant 0 : index
    %196 = vector.load %arg6[%c1_103, %c0_104, %c0_105] : memref<2x256x768xbf16, #tpu.memory_space<vmem>>, vector<1x256x768xbf16>
    %197 = vector.shape_cast %196 : vector<1x256x768xbf16> to vector<256x768xbf16>
    %198 = arith.truncf %195 : vector<16x256xf32> to vector<16x256xbf16>
    %cst_106 = arith.constant dense<0.000000e+00> : vector<16x768xf32>
    %199 = tpu.matmul %198, %197, %cst_106 {dimension_numbers = #tpu.dot_dimension_numbers<[1], [0], [0], [1], [0, 0, 1, 1], [], []>} : vector<16x256xbf16>, vector<256x768xbf16>, vector<16x768xf32> -> vector<16x768xf32>
    %200 = vector.broadcast %169 : vector<1x768xf32> to vector<16x768xf32>
    %201 = arith.addf %199, %200 : vector<16x768xf32>
    %202 = vector.extract_strided_slice %201 {offsets = [0, 0], sizes = [16, 256], strides = [1, 1]} : vector<16x768xf32> to vector<16x256xf32>
    %203 = vector.extract_strided_slice %201 {offsets = [0, 256], sizes = [16, 256], strides = [1, 1]} : vector<16x768xf32> to vector<16x256xf32>
    %204 = vector.extract_strided_slice %201 {offsets = [0, 512], sizes = [16, 256], strides = [1, 1]} : vector<16x768xf32> to vector<16x256xf32>
    %c8_i32_107 = arith.constant 8 : i32
    %205 = tpu.dynamic_rotate %203 by %c8_i32_107 dim 0 : vector<16x256xf32>, i32 -> vector<16x256xf32>
    %c8_i32_108 = arith.constant 8 : i32
    %206 = tpu.dynamic_rotate %204 by %c8_i32_108 dim 0 : vector<16x256xf32>, i32 -> vector<16x256xf32>
    %207 = arith.mulf %202, %203 : vector<16x256xf32>
    %208 = arith.truncf %207 : vector<16x256xf32> to vector<16x256xbf16>
    %cst_109 = arith.constant dense<0.000000e+00> : vector<16x128xf32>
    %209 = tpu.matmul %208, %0, %cst_109 {dimension_numbers = #tpu.dot_dimension_numbers<[1], [0], [0], [1], [0, 0, 1, 1], [], []>} : vector<16x256xbf16>, vector<256x128xbf16>, vector<16x128xf32> -> vector<16x128xf32>
    %cst_110 = arith.constant 1.250000e-01 : f32
    %210 = vector.broadcast %cst_110 : f32 to vector<16x128xf32>
    %211 = arith.mulf %209, %210 : vector<16x128xf32>
    %212 = arith.mulf %202, %205 : vector<16x256xf32>
    %213 = arith.truncf %212 : vector<16x256xf32> to vector<16x256xbf16>
    %cst_111 = arith.constant dense<0.000000e+00> : vector<16x128xf32>
    %214 = tpu.matmul %213, %0, %cst_111 {dimension_numbers = #tpu.dot_dimension_numbers<[1], [0], [0], [1], [0, 0, 1, 1], [], []>} : vector<16x256xbf16>, vector<256x128xbf16>, vector<16x128xf32> -> vector<16x128xf32>
    %cst_112 = arith.constant 1.250000e-01 : f32
    %215 = vector.broadcast %cst_112 : f32 to vector<16x128xf32>
    %216 = arith.mulf %214, %215 : vector<16x128xf32>
    %217 = arith.maximumf %211, %216 : vector<16x128xf32>
    %218 = arith.subf %211, %217 : vector<16x128xf32>
    %219 = math.exp %218 : vector<16x128xf32>
    %220 = arith.subf %216, %217 : vector<16x128xf32>
    %221 = math.exp %220 : vector<16x128xf32>
    %222 = arith.addf %219, %221 : vector<16x128xf32>
    %223 = tpu.reciprocal %222 {approx = true} : vector<16x128xf32> -> vector<16x128xf32>
    %224 = arith.mulf %219, %223 : vector<16x128xf32>
    %225 = arith.mulf %221, %223 : vector<16x128xf32>
    %226 = arith.truncf %224 : vector<16x128xf32> to vector<16x128xbf16>
    %cst_113 = arith.constant dense<0.000000e+00> : vector<16x256xf32>
    %227 = tpu.matmul %226, %1, %cst_113 {dimension_numbers = #tpu.dot_dimension_numbers<[1], [0], [0], [1], [0, 0, 1, 1], [], []>} : vector<16x128xbf16>, vector<128x256xbf16>, vector<16x256xf32> -> vector<16x256xf32>
    %228 = arith.mulf %227, %204 : vector<16x256xf32>
    %229 = arith.truncf %225 : vector<16x128xf32> to vector<16x128xbf16>
    %cst_114 = arith.constant dense<0.000000e+00> : vector<16x256xf32>
    %230 = tpu.matmul %229, %1, %cst_114 {dimension_numbers = #tpu.dot_dimension_numbers<[1], [0], [0], [1], [0, 0, 1, 1], [], []>} : vector<16x128xbf16>, vector<128x256xbf16>, vector<16x256xf32> -> vector<16x256xf32>
    %231 = arith.mulf %230, %206 : vector<16x256xf32>
    %232 = arith.addf %228, %231 : vector<16x256xf32>
    %c1_115 = arith.constant 1 : index
    %c0_116 = arith.constant 0 : index
    %c0_117 = arith.constant 0 : index
    %233 = vector.load %arg7[%c1_115, %c0_116, %c0_117] : memref<2x256x256xbf16, #tpu.memory_space<vmem>>, vector<1x256x256xbf16>
    %234 = vector.shape_cast %233 : vector<1x256x256xbf16> to vector<256x256xbf16>
    %235 = arith.truncf %232 : vector<16x256xf32> to vector<16x256xbf16>
    %cst_118 = arith.constant dense<0.000000e+00> : vector<16x256xf32>
    %236 = tpu.matmul %235, %234, %cst_118 {dimension_numbers = #tpu.dot_dimension_numbers<[1], [0], [0], [1], [0, 0, 1, 1], [], []>} : vector<16x256xbf16>, vector<256x256xbf16>, vector<16x256xf32> -> vector<16x256xf32>
    %237 = arith.addf %159, %236 : vector<16x256xf32>
    %238 = vector.broadcast %171 : vector<1x256xf32> to vector<16x256xf32>
    %239 = arith.addf %237, %238 : vector<16x256xf32>
    %cst_119 = arith.constant dense<0.000000e+00> : vector<16xf32>
    %240 = vector.multi_reduction <add>, %239, %cst_119 [1] : vector<16x256xf32> to vector<16xf32>
    %241 = vector.shape_cast %240 : vector<16xf32> to vector<16x1xf32>
    %cst_120 = arith.constant 2.560000e+02 : f32
    %242 = vector.broadcast %cst_120 : f32 to vector<16x1xf32>
    %243 = arith.divf %241, %242 : vector<16x1xf32>
    %244 = vector.broadcast %243 : vector<16x1xf32> to vector<16x256xf32>
    %245 = arith.subf %239, %244 : vector<16x256xf32>
    %246 = arith.mulf %245, %245 : vector<16x256xf32>
    %cst_121 = arith.constant dense<0.000000e+00> : vector<16xf32>
    %247 = vector.multi_reduction <add>, %246, %cst_121 [1] : vector<16x256xf32> to vector<16xf32>
    %248 = vector.shape_cast %247 : vector<16xf32> to vector<16x1xf32>
    %cst_122 = arith.constant 2.560000e+02 : f32
    %249 = vector.broadcast %cst_122 : f32 to vector<16x1xf32>
    %250 = arith.divf %248, %249 : vector<16x1xf32>
    %cst_123 = arith.constant 9.99999974E-6 : f32
    %251 = vector.broadcast %cst_123 : f32 to vector<16x1xf32>
    %252 = arith.addf %250, %251 : vector<16x1xf32>
    %253 = math.rsqrt %252 : vector<16x1xf32>
    %254 = vector.broadcast %253 : vector<16x1xf32> to vector<16x256xf32>
    %255 = arith.mulf %245, %254 : vector<16x256xf32>
    %256 = vector.broadcast %165 : vector<1x256xf32> to vector<16x256xf32>
    %257 = arith.mulf %255, %256 : vector<16x256xf32>
    %258 = vector.broadcast %167 : vector<1x256xf32> to vector<16x256xf32>
    %259 = arith.addf %257, %258 : vector<16x256xf32>
    %c1_124 = arith.constant 1 : index
    %c0_125 = arith.constant 0 : index
    %c0_126 = arith.constant 0 : index
    %260 = vector.load %arg8[%c1_124, %c0_125, %c0_126] : memref<2x256x512xbf16, #tpu.memory_space<vmem>>, vector<1x256x512xbf16>
    %261 = vector.shape_cast %260 : vector<1x256x512xbf16> to vector<256x512xbf16>
    %262 = arith.truncf %259 : vector<16x256xf32> to vector<16x256xbf16>
    %cst_127 = arith.constant dense<0.000000e+00> : vector<16x512xf32>
    %263 = tpu.matmul %262, %261, %cst_127 {dimension_numbers = #tpu.dot_dimension_numbers<[1], [0], [0], [1], [0, 0, 1, 1], [], []>} : vector<16x256xbf16>, vector<256x512xbf16>, vector<16x512xf32> -> vector<16x512xf32>
    %264 = vector.broadcast %173 : vector<1x512xf32> to vector<16x512xf32>
    %265 = arith.addf %263, %264 : vector<16x512xf32>
    %cst_128 = arith.constant 5.000000e-01 : f32
    %266 = vector.broadcast %cst_128 : f32 to vector<16x512xf32>
    %267 = arith.mulf %266, %265 : vector<16x512xf32>
    %cst_129 = arith.constant 0.707106769 : f32
    %268 = vector.broadcast %cst_129 : f32 to vector<16x512xf32>
    %269 = arith.mulf %265, %268 : vector<16x512xf32>
    %270 = math.absf %269 : vector<16x512xf32>
    %cst_130 = arith.constant 0.327591091 : f32
    %271 = vector.broadcast %cst_130 : f32 to vector<16x512xf32>
    %272 = arith.mulf %271, %270 : vector<16x512xf32>
    %cst_131 = arith.constant 1.000000e+00 : f32
    %273 = vector.broadcast %cst_131 : f32 to vector<16x512xf32>
    %274 = arith.addf %273, %272 : vector<16x512xf32>
    %cst_132 = arith.constant 1.000000e+00 : f32
    %275 = vector.broadcast %cst_132 : f32 to vector<16x512xf32>
    %276 = arith.divf %275, %274 : vector<16x512xf32>
    %cst_133 = arith.constant 1.06140542 : f32
    %277 = vector.broadcast %cst_133 : f32 to vector<16x512xf32>
    %278 = arith.mulf %276, %277 : vector<16x512xf32>
    %cst_134 = arith.constant -1.45315206 : f32
    %279 = vector.broadcast %cst_134 : f32 to vector<16x512xf32>
    %280 = arith.addf %279, %278 : vector<16x512xf32>
    %281 = arith.mulf %276, %280 : vector<16x512xf32>
    %cst_135 = arith.constant 1.42141378 : f32
    %282 = vector.broadcast %cst_135 : f32 to vector<16x512xf32>
    %283 = arith.addf %282, %281 : vector<16x512xf32>
    %284 = arith.mulf %276, %283 : vector<16x512xf32>
    %cst_136 = arith.constant -0.284496725 : f32
    %285 = vector.broadcast %cst_136 : f32 to vector<16x512xf32>
    %286 = arith.addf %285, %284 : vector<16x512xf32>
    %287 = arith.mulf %276, %286 : vector<16x512xf32>
    %cst_137 = arith.constant 0.254829586 : f32
    %288 = vector.broadcast %cst_137 : f32 to vector<16x512xf32>
    %289 = arith.addf %288, %287 : vector<16x512xf32>
    %290 = arith.mulf %276, %289 : vector<16x512xf32>
    %cst_138 = arith.constant 0.000000e+00 : f32
    %291 = vector.broadcast %cst_138 : f32 to vector<16x512xf32>
    %292 = arith.subf %291, %270 : vector<16x512xf32>
    %293 = arith.mulf %292, %270 : vector<16x512xf32>
    %294 = math.exp %293 : vector<16x512xf32>
    %295 = arith.mulf %290, %294 : vector<16x512xf32>
    %cst_139 = arith.constant 1.000000e+00 : f32
    %296 = vector.broadcast %cst_139 : f32 to vector<16x512xf32>
    %297 = arith.subf %296, %295 : vector<16x512xf32>
    %cst_140 = arith.constant 0.000000e+00 : f32
    %298 = vector.broadcast %cst_140 : f32 to vector<16x512xf32>
    %299 = arith.cmpf oge, %269, %298 : vector<16x512xf32>
    %cst_141 = arith.constant 0.000000e+00 : f32
    %300 = vector.broadcast %cst_141 : f32 to vector<16x512xf32>
    %301 = arith.subf %300, %297 : vector<16x512xf32>
    %302 = arith.select %299, %297, %301 : vector<16x512xi1>, vector<16x512xf32>
    %cst_142 = arith.constant 1.000000e+00 : f32
    %303 = vector.broadcast %cst_142 : f32 to vector<16x512xf32>
    %304 = arith.addf %303, %302 : vector<16x512xf32>
    %305 = arith.mulf %267, %304 : vector<16x512xf32>
    %c1_143 = arith.constant 1 : index
    %c0_144 = arith.constant 0 : index
    %c0_145 = arith.constant 0 : index
    %306 = vector.load %arg9[%c1_143, %c0_144, %c0_145] : memref<2x512x256xbf16, #tpu.memory_space<vmem>>, vector<1x512x256xbf16>
    %307 = vector.shape_cast %306 : vector<1x512x256xbf16> to vector<512x256xbf16>
    %308 = arith.truncf %305 : vector<16x512xf32> to vector<16x512xbf16>
    %cst_146 = arith.constant dense<0.000000e+00> : vector<16x256xf32>
    %309 = tpu.matmul %308, %307, %cst_146 {dimension_numbers = #tpu.dot_dimension_numbers<[1], [0], [0], [1], [0, 0, 1, 1], [], []>} : vector<16x512xbf16>, vector<512x256xbf16>, vector<16x256xf32> -> vector<16x256xf32>
    %310 = arith.addf %239, %309 : vector<16x256xf32>
    %311 = vector.broadcast %175 : vector<1x256xf32> to vector<16x256xf32>
    %312 = arith.addf %310, %311 : vector<16x256xf32>
    %c2_147 = arith.constant 2 : index
    %c0_148 = arith.constant 0 : index
    %c0_149 = arith.constant 0 : index
    %313 = vector.load %arg5[%c2_147, %c0_148, %c0_149] : memref<3x8x768xf32, #tpu.memory_space<vmem>>, vector<1x1x128xf32>
    %314 = vector.shape_cast %313 : vector<1x1x128xf32> to vector<1x128xf32>
    %315 = vector.extract_strided_slice %312 {offsets = [8, 0], sizes = [8, 256], strides = [1, 1]} : vector<16x256xf32> to vector<8x256xf32>
    %c0_150 = arith.constant 0 : index
    %c0_151 = arith.constant 0 : index
    %316 = vector.load %arg10[%c0_150, %c0_151] : memref<256x128xbf16, #tpu.memory_space<vmem>>, vector<256x128xbf16>
    %317 = arith.truncf %315 : vector<8x256xf32> to vector<8x256xbf16>
    %cst_152 = arith.constant dense<0.000000e+00> : vector<8x128xf32>
    %318 = tpu.matmul %317, %316, %cst_152 {dimension_numbers = #tpu.dot_dimension_numbers<[1], [0], [0], [1], [0, 0, 1, 1], [], []>} : vector<8x256xbf16>, vector<256x128xbf16>, vector<8x128xf32> -> vector<8x128xf32>
    %319 = vector.broadcast %314 : vector<1x128xf32> to vector<8x128xf32>
    %320 = arith.addf %318, %319 : vector<8x128xf32>
    %c0_153 = arith.constant 0 : index
    %c0_154 = arith.constant 0 : index
    %321 = vector.load %arg11[%c0_153, %c0_154] : memref<8x128xf32, #tpu.memory_space<vmem>>, vector<8x128xf32>
    tpu.vector_store %arg11[%c0_153, %c0_154], %320 {strides = array<i32>} : memref<8x128xf32, #tpu.memory_space<vmem>>, vector<8x128xf32>,
    return
  }
}

</mosaic_0001>

<llo_original>
// kernel: tpu_custom_call.1
$region0: #{tpu_custom_call.1}
  #allocation0 [shape = 'u32[]', space=smem, size = 0x4, offset = 0x4, fixed_abs, tag = 'smem constant byte address 0x4 - core index']
  #allocation1 [shape = 'u32[72,128]{1,0:T(1,128)}', space=vmem, size = 0x9000, scoped, tag = 'internal scratch']
  %s0 = inlined_call_operand.hbm [shape: f32[16,128], index: 0, kind: input, shape index: {}]
  %s1 = inlined_call_operand.hbm [shape: f32[16,256], index: 1, kind: input, shape index: {}]
  %s2 = inlined_call_operand.hbm [shape: f32[128,256], index: 2, kind: input, shape index: {}]
  %s3 = inlined_call_operand.hbm [shape: bf16[256,128], index: 3, kind: input, shape index: {}]
  %s4 = inlined_call_operand.hbm [shape: bf16[128,256], index: 4, kind: input, shape index: {}]
  %s5 = inlined_call_operand.hbm [shape: f32[3,8,768], index: 5, kind: input, shape index: {}]
  %s6 = inlined_call_operand.hbm [shape: bf16[2,256,768], index: 6, kind: input, shape index: {}]
  %s7 = inlined_call_operand.hbm [shape: bf16[2,256,256], index: 7, kind: input, shape index: {}]
  %s8 = inlined_call_operand.hbm [shape: bf16[2,256,512], index: 8, kind: input, shape index: {}]
  %s9 = inlined_call_operand.hbm [shape: bf16[2,512,256], index: 9, kind: input, shape index: {}]
  %s10 = inlined_call_operand.hbm [shape: bf16[256,128], index: 10, kind: input, shape index: {}]
  %s11 = inlined_call_operand.hbm [shape: f32[8,128], index: 11, kind: output, shape index: {}]
  %s12 = sld [smem:[#allocation0]]
  $region98: #{tpu_custom_call.1} parent=0
    _
  %s14 = ssub.s32 1, %s12
  %s15 = scalar_select 0, %s14, %s12
  $region1: #{tpu_custom_call.1} parent=0
    #allocation2 [shape = 'u8[8192]{0}', space=vmem, size = 0x2000, scoped, tag = 'input window, operand 0, single buffered']
    #allocation3 [shape = 's32[1]{0}', space=sflag, size = 0x4, scoped, tag = 'scoped memory for tpu_custom_call.1']
    #allocation4 [shape = 's32[1]{0}', space=sflag, size = 0x4, scoped, tag = 'scoped memory for tpu_custom_call.1']
    #allocation5 [shape = 'u8[16384]{0}', space=vmem, size = 0x4000, scoped, tag = 'input window, operand 1, single buffered']
    #allocation6 [shape = 's32[1]{0}', space=sflag, size = 0x4, scoped, tag = 'scoped memory for tpu_custom_call.1']
    #allocation7 [shape = 'u8[131072]{0}', space=vmem, size = 0x20000, scoped, tag = 'input window, operand 2, single buffered']
    #allocation8 [shape = 'u8[65536]{0}', space=vmem, size = 0x10000, scoped, tag = 'input window, operand 3, single buffered']
    #allocation9 [shape = 's32[1]{0}', space=sflag, size = 0x4, scoped, tag = 'scoped memory for tpu_custom_call.1']
    #allocation10 [shape = 'u8[65536]{0}', space=vmem, size = 0x10000, scoped, tag = 'input window, operand 4, single buffered']
    #allocation11 [shape = 'u8[73728]{0}', space=vmem, size = 0x12000, scoped, tag = 'input window, operand 5, single buffered']
    #allocation12 [shape = 's32[1]{0}', space=sflag, size = 0x4, scoped, tag = 'scoped memory for tpu_custom_call.1']
    #allocation13 [shape = 'u8[786432]{0}', space=vmem, size = 0xc0000, scoped, tag = 'input window, operand 6, single buffered']
    #allocation14 [shape = 'u8[262144]{0}', space=vmem, size = 0x40000, scoped, tag = 'input window, operand 7, single buffered']
    #allocation15 [shape = 's32[1]{0}', space=sflag, size = 0x4, scoped, tag = 'scoped memory for tpu_custom_call.1']
    #allocation16 [shape = 'u8[524288]{0}', space=vmem, size = 0x80000, scoped, tag = 'input window, operand 8, single buffered']
    #allocation17 [shape = 'u8[524288]{0}', space=vmem, size = 0x80000, scoped, tag = 'input window, operand 9, single buffered']
    #allocation18 [shape = 's32[1]{0}', space=sflag, size = 0x4, scoped, tag = 'scoped memory for tpu_custom_call.1']
    #allocation19 [shape = 'u8[65536]{0}', space=vmem, size = 0x10000, scoped, tag = 'input window, operand 10, single buffered']
    #allocation20 [shape = 'u8[4096]{0}', space=vmem, size = 0x1000, scoped, tag = 'output window, operand 0, single buffered']
    %16 = vsyncpa [#allocation3], 0
    %17 = vsyncpa [#allocation6], 0
    %18 = vsyncpa [#allocation9], 0
    %19 = vsyncpa [#allocation12], 0
    %20 = vsyncpa [#allocation15], 0
    %21 = vsyncpa [#allocation18], 0
    %22 = vsyncpa [#allocation4], 0
    // Predicated region
    $region2: #{tpu_custom_call.1} parent=1 // pred_check
      _
    $region3: #{tpu_custom_call.1} parent=1 // pred_check_branch
      %24 = sbr.rel (0) target = $region5
    $region4: #{tpu_custom_call.1} parent=1 // pred_region
      %26 = vsyncadd [#allocation3], 0
      %s27 = sshll.u32 %s0, 4
      %s28 = int_to_ptr.hbm [resolvable:$true] %s27
      %s29 = sshll.u32 [#allocation2], 4
      %s30 = int_to_ptr.vmem [resolvable:$true] %s29
      %35 = dma.hbm_to_vmem [thread:$0]  %s28, 256, %s30, [#allocation3], 128, 128, 8
    $region5: #{tpu_custom_call.1} parent=1 // pred_fallthru
      _
    // Predicated region
    $region6: #{tpu_custom_call.1} parent=1 // pred_check
      _
    $region7: #{tpu_custom_call.1} parent=1 // pred_check_branch
      %37 = sbr.rel (0) target = $region9
    $region8: #{tpu_custom_call.1} parent=1 // pred_region
      %39 = vsyncadd [#allocation6], 0
      %s40 = sshll.u32 %s1, 4
      %s41 = int_to_ptr.hbm [resolvable:$true] %s40
      %s42 = sshll.u32 [#allocation5], 4
      %s43 = int_to_ptr.vmem [resolvable:$true] %s42
      %48 = dma.hbm_to_vmem [thread:$0]  %s41, 512, %s43, [#allocation6], 256, 256, 16
    $region9: #{tpu_custom_call.1} parent=1 // pred_fallthru
      _
    // Predicated region
    $region10: #{tpu_custom_call.1} parent=1 // pred_check
      _
    $region11: #{tpu_custom_call.1} parent=1 // pred_check_branch
      %50 = sbr.rel (0) target = $region13
    $region12: #{tpu_custom_call.1} parent=1 // pred_region
      %52 = vsyncadd [#allocation6], 0
      %s53 = sshll.u32 %s2, 4
      %s54 = int_to_ptr.hbm [resolvable:$true] %s53
      %s55 = sshll.u32 [#allocation7], 4
      %s56 = int_to_ptr.vmem [resolvable:$true] %s55
      %61 = dma.hbm_to_vmem [thread:$0]  %s54, 4096, %s56, [#allocation6], 256, 256, 16
    $region13: #{tpu_custom_call.1} parent=1 // pred_fallthru
      _
    // Predicated region
    $region14: #{tpu_custom_call.1} parent=1 // pred_check
      _
    $region15: #{tpu_custom_call.1} parent=1 // pred_check_branch
      %63 = sbr.rel (0) target = $region17
    $region16: #{tpu_custom_call.1} parent=1 // pred_region
      %65 = vsyncadd [#allocation9], 0
      %s66 = sshll.u32 %s3, 4
      %s67 = int_to_ptr.hbm [resolvable:$true] %s66
      %s68 = sshll.u32 [#allocation8], 4
      %s69 = int_to_ptr.vmem [resolvable:$true] %s68
      %74 = dma.hbm_to_vmem [thread:$0]  %s67, 2048, %s69, [#allocation9], 64, 64, 4
    $region17: #{tpu_custom_call.1} parent=1 // pred_fallthru
      _
    // Predicated region
    $region18: #{tpu_custom_call.1} parent=1 // pred_check
      _
    $region19: #{tpu_custom_call.1} parent=1 // pred_check_branch
      %76 = sbr.rel (0) target = $region21
    $region20: #{tpu_custom_call.1} parent=1 // pred_region
      %78 = vsyncadd [#allocation9], 0
      %s79 = sshll.u32 %s4, 4
      %s80 = int_to_ptr.hbm [resolvable:$true] %s79
      %s81 = sshll.u32 [#allocation10], 4
      %s82 = int_to_ptr.vmem [resolvable:$true] %s81
      %87 = dma.hbm_to_vmem [thread:$0]  %s80, 2048, %s82, [#allocation9], 128, 128, 8
    $region21: #{tpu_custom_call.1} parent=1 // pred_fallthru
      _
    // Predicated region
    $region22: #{tpu_custom_call.1} parent=1 // pred_check
      _
    $region23: #{tpu_custom_call.1} parent=1 // pred_check_branch
      %89 = sbr.rel (0) target = $region25
    $region24: #{tpu_custom_call.1} parent=1 // pred_region
      %91 = vsyncadd [#allocation12], 0
      %s92 = sshll.u32 %s5, 4
      %s93 = int_to_ptr.hbm [resolvable:$true] %s92
      %s94 = sshll.u32 [#allocation11], 4
      %s95 = int_to_ptr.vmem [resolvable:$true] %s94
      %100 = dma.hbm_to_vmem [thread:$0]  %s93, 2304, %s95, [#allocation12], 768, 768, 48
    $region25: #{tpu_custom_call.1} parent=1 // pred_fallthru
      _
    // Predicated region
    $region26: #{tpu_custom_call.1} parent=1 // pred_check
      _
    $region27: #{tpu_custom_call.1} parent=1 // pred_check_branch
      %102 = sbr.rel (0) target = $region29
    $region28: #{tpu_custom_call.1} parent=1 // pred_region
      %104 = vsyncadd [#allocation12], 0
      %s105 = sshll.u32 %s6, 4
      %s106 = int_to_ptr.hbm [resolvable:$true] %s105
      %s107 = sshll.u32 [#allocation13], 4
      %s108 = int_to_ptr.vmem [resolvable:$true] %s107
      %113 = dma.hbm_to_vmem [thread:$0]  %s106, 24576, %s108, [#allocation12], 384, 384, 24
    $region29: #{tpu_custom_call.1} parent=1 // pred_fallthru
      _
    // Predicated region
    $region30: #{tpu_custom_call.1} parent=1 // pred_check
      _
    $region31: #{tpu_custom_call.1} parent=1 // pred_check_branch
      %115 = sbr.rel (0) target = $region33
    $region32: #{tpu_custom_call.1} parent=1 // pred_region
      %117 = vsyncadd [#allocation15], 0
      %s118 = sshll.u32 %s7, 4
      %s119 = int_to_ptr.hbm [resolvable:$true] %s118
      %s120 = sshll.u32 [#allocation14], 4
      %s121 = int_to_ptr.vmem [resolvable:$true] %s120
      %126 = dma.hbm_to_vmem [thread:$0]  %s119, 8192, %s121, [#allocation15], 128, 128, 8
    $region33: #{tpu_custom_call.1} parent=1 // pred_fallthru
      _
    // Predicated region
    $region34: #{tpu_custom_call.1} parent=1 // pred_check
      _
    $region35: #{tpu_custom_call.1} parent=1 // pred_check_branch
      %128 = sbr.rel (0) target = $region37
    $region36: #{tpu_custom_call.1} parent=1 // pred_region
      %130 = vsyncadd [#allocation15], 0
      %s131 = sshll.u32 %s8, 4
      %s132 = int_to_ptr.hbm [resolvable:$true] %s131
      %s133 = sshll.u32 [#allocation16], 4
      %s134 = int_to_ptr.vmem [resolvable:$true] %s133
      %139 = dma.hbm_to_vmem [thread:$0]  %s132, 16384, %s134, [#allocation15], 256, 256, 16
    $region37: #{tpu_custom_call.1} parent=1 // pred_fallthru
      _
    // Predicated region
    $region38: #{tpu_custom_call.1} parent=1 // pred_check
      _
    $region39: #{tpu_custom_call.1} parent=1 // pred_check_branch
      %141 = sbr.rel (0) target = $region41
    $region40: #{tpu_custom_call.1} parent=1 // pred_region
      %143 = vsyncadd [#allocation18], 0
      %s144 = sshll.u32 %s9, 4
      %s145 = int_to_ptr.hbm [resolvable:$true] %s144
      %s146 = sshll.u32 [#allocation17], 4
      %s147 = int_to_ptr.vmem [resolvable:$true] %s146
      %152 = dma.hbm_to_vmem [thread:$0]  %s145, 16384, %s147, [#allocation18], 128, 128, 8
    $region41: #{tpu_custom_call.1} parent=1 // pred_fallthru
      _
    // Predicated region
    $region42: #{tpu_custom_call.1} parent=1 // pred_check
      _
    $region43: #{tpu_custom_call.1} parent=1 // pred_check_branch
      %154 = sbr.rel (0) target = $region45
    $region44: #{tpu_custom_call.1} parent=1 // pred_region
      %156 = vsyncadd [#allocation18], 0
      %s157 = sshll.u32 %s10, 4
      %s158 = int_to_ptr.hbm [resolvable:$true] %s157
      %s159 = sshll.u32 [#allocation19], 4
      %s160 = int_to_ptr.vmem [resolvable:$true] %s159
      %165 = dma.hbm_to_vmem [thread:$0]  %s158, 2048, %s160, [#allocation18], 64, 64, 4
    $region45: #{tpu_custom_call.1} parent=1 // pred_fallthru
      _
    // Predicated region
    $region46: #{tpu_custom_call.1} parent=1 // pred_check
      _
    $region47: #{tpu_custom_call.1} parent=1 // pred_check_branch
      %167 = sbr.rel (0) target = $region49
    $region48: #{tpu_custom_call.1} parent=1 // pred_region
      %169 = dma.done [#allocation3], 256
    $region49: #{tpu_custom_call.1} parent=1 // pred_fallthru
      _
    // Predicated region
    $region50: #{tpu_custom_call.1} parent=1 // pred_check
      _
    $region51: #{tpu_custom_call.1} parent=1 // pred_check_branch
      %171 = sbr.rel (0) target = $region53
    $region52: #{tpu_custom_call.1} parent=1 // pred_region
      %173 = dma.done [#allocation6], 512
    $region53: #{tpu_custom_call.1} parent=1 // pred_fallthru
      _
    // Predicated region
    $region54: #{tpu_custom_call.1} parent=1 // pred_check
      _
    $region55: #{tpu_custom_call.1} parent=1 // pred_check_branch
      %175 = sbr.rel (0) target = $region57
    $region56: #{tpu_custom_call.1} parent=1 // pred_region
      %177 = dma.done [#allocation6], 4096
    $region57: #{tpu_custom_call.1} parent=1 // pred_fallthru
      _
    // Predicated region
    $region58: #{tpu_custom_call.1} parent=1 // pred_check
      _
    $region59: #{tpu_custom_call.1} parent=1 // pred_check_branch
      %179 = sbr.rel (0) target = $region61
    $region60: #{tpu_custom_call.1} parent=1 // pred_region
      %181 = dma.done [#allocation9], 2048
    $region61: #{tpu_custom_call.1} parent=1 // pred_fallthru
      _
    // Predicated region
    $region62: #{tpu_custom_call.1} parent=1 // pred_check
      _
    $region63: #{tpu_custom_call.1} parent=1 // pred_check_branch
      %183 = sbr.rel (0) target = $region65
    $region64: #{tpu_custom_call.1} parent=1 // pred_region
      %185 = dma.done [#allocation9], 2048
    $region65: #{tpu_custom_call.1} parent=1 // pred_fallthru
      _
    // Predicated region
    $region66: #{tpu_custom_call.1} parent=1 // pred_check
      _
    $region67: #{tpu_custom_call.1} parent=1 // pred_check_branch
      %187 = sbr.rel (0) target = $region69
    $region68: #{tpu_custom_call.1} parent=1 // pred_region
      %189 = dma.done [#allocation12], 2304
    $region69: #{tpu_custom_call.1} parent=1 // pred_fallthru
      _
    // Predicated region
    $region70: #{tpu_custom_call.1} parent=1 // pred_check
      _
    $region71: #{tpu_custom_call.1} parent=1 // pred_check_branch
      %191 = sbr.rel (0) target = $region73
    $region72: #{tpu_custom_call.1} parent=1 // pred_region
      %193 = dma.done [#allocation12], 24576
    $region73: #{tpu_custom_call.1} parent=1 // pred_fallthru
      _
    // Predicated region
    $region74: #{tpu_custom_call.1} parent=1 // pred_check
      _
    $region75: #{tpu_custom_call.1} parent=1 // pred_check_branch
      %195 = sbr.rel (0) target = $region77
    $region76: #{tpu_custom_call.1} parent=1 // pred_region
      %197 = dma.done [#allocation15], 8192
    $region77: #{tpu_custom_call.1} parent=1 // pred_fallthru
      _
    // Predicated region
    $region78: #{tpu_custom_call.1} parent=1 // pred_check
      _
    $region79: #{tpu_custom_call.1} parent=1 // pred_check_branch
      %199 = sbr.rel (0) target = $region81
    $region80: #{tpu_custom_call.1} parent=1 // pred_region
      %201 = dma.done [#allocation15], 16384
    $region81: #{tpu_custom_call.1} parent=1 // pred_fallthru
      _
    // Predicated region
    $region82: #{tpu_custom_call.1} parent=1 // pred_check
      _
    $region83: #{tpu_custom_call.1} parent=1 // pred_check_branch
      %203 = sbr.rel (0) target = $region85
    $region84: #{tpu_custom_call.1} parent=1 // pred_region
      %205 = dma.done [#allocation18], 16384
    $region85: #{tpu_custom_call.1} parent=1 // pred_fallthru
      _
    // Predicated region
    $region86: #{tpu_custom_call.1} parent=1 // pred_check
      _
    $region87: #{tpu_custom_call.1} parent=1 // pred_check_branch
      %207 = sbr.rel (0) target = $region89
    $region88: #{tpu_custom_call.1} parent=1 // pred_region
      %209 = dma.done [#allocation18], 2048
    $region89: #{tpu_custom_call.1} parent=1 // pred_fallthru
      _
    %v210 = vld [vmem:[#allocation8] sm:$0xf]
    %v211 = vld [vmem:[#allocation8 + $0x4] sm:$0xf]
    %v212 = vld [vmem:[#allocation8 + $0x8] sm:$0xf]
    %v213 = vld [vmem:[#allocation8 + $0xc] sm:$0xf]
    %v214 = vld [vmem:[#allocation8 + $0x10] sm:$0xf]
    %v215 = vld [vmem:[#allocation8 + $0x14] sm:$0xf]
    %v216 = vld [vmem:[#allocation8 + $0x18] sm:$0xf]
    %v217 = vld [vmem:[#allocation8 + $0x1c] sm:$0xf]
    %v218 = vld [vmem:[#allocation8 + $0x20] sm:$0xf]
    %v219 = vld [vmem:[#allocation8 + $0x24] sm:$0xf]
    %v220 = vld [vmem:[#allocation8 + $0x28] sm:$0xf]
    %v221 = vld [vmem:[#allocation8 + $0x2c] sm:$0xf]
    %v222 = vld [vmem:[#allocation8 + $0x30] sm:$0xf]
    %v223 = vld [vmem:[#allocation8 + $0x34] sm:$0xf]
    %v224 = vld [vmem:[#allocation8 + $0x38] sm:$0xf]
    %v225 = vld [vmem:[#allocation8 + $0x3c] sm:$0xf]
    %v226 = vld [vmem:[#allocation8 + $0x40] sm:$0xf]
    %v227 = vld [vmem:[#allocation8 + $0x44] sm:$0xf]
    %v228 = vld [vmem:[#allocation8 + $0x48] sm:$0xf]
    %v229 = vld [vmem:[#allocation8 + $0x4c] sm:$0xf]
    %v230 = vld [vmem:[#allocation8 + $0x50] sm:$0xf]
    %v231 = vld [vmem:[#allocation8 + $0x54] sm:$0xf]
    %v232 = vld [vmem:[#allocation8 + $0x58] sm:$0xf]
    %v233 = vld [vmem:[#allocation8 + $0x5c] sm:$0xf]
    %v234 = vld [vmem:[#allocation8 + $0x60] sm:$0xf]
    %v235 = vld [vmem:[#allocation8 + $0x64] sm:$0xf]
    %v236 = vld [vmem:[#allocation8 + $0x68] sm:$0xf]
    %v237 = vld [vmem:[#allocation8 + $0x6c] sm:$0xf]
    %v238 = vld [vmem:[#allocation8 + $0x70] sm:$0xf]
    %v239 = vld [vmem:[#allocation8 + $0x74] sm:$0xf]
    %v240 = vld [vmem:[#allocation8 + $0x78] sm:$0xf]
    %v241 = vld [vmem:[#allocation8 + $0x7c] sm:$0xf]
    %v242 = vld [vmem:[#allocation10] sm:$0xff]
    %v243 = vld [vmem:[#allocation10 + $0x8] sm:$0xff]
    %v244 = vld [vmem:[#allocation10 + $0x10] sm:$0xff]
    %v245 = vld [vmem:[#allocation10 + $0x18] sm:$0xff]
    %v246 = vld [vmem:[#allocation10 + $0x20] sm:$0xff]
    %v247 = vld [vmem:[#allocation10 + $0x28] sm:$0xff]
    %v248 = vld [vmem:[#allocation10 + $0x30] sm:$0xff]
    %v249 = vld [vmem:[#allocation10 + $0x38] sm:$0xff]
    %v250 = vld [vmem:[#allocation10 + $0x40] sm:$0xff]
    %v251 = vld [vmem:[#allocation10 + $0x48] sm:$0xff]
    %v252 = vld [vmem:[#allocation10 + $0x50] sm:$0xff]
    %v253 = vld [vmem:[#allocation10 + $0x58] sm:$0xff]
    %v254 = vld [vmem:[#allocation10 + $0x60] sm:$0xff]
    %v255 = vld [vmem:[#allocation10 + $0x68] sm:$0xff]
    %v256 = vld [vmem:[#allocation10 + $0x70] sm:$0xff]
    %v257 = vld [vmem:[#allocation10 + $0x78] sm:$0xff]
    %v258 = vld [vmem:[#allocation2] sm:$0xff]
    %v259 = vld [vmem:[#allocation2 + $0x8] sm:$0xff]
    %v260 = vld [vmem:[#allocation7] sm:$0xff]
    %v261 = vld [vmem:[#allocation7 + $0x8] sm:$0xff]
    %v262 = vld [vmem:[#allocation7 + $0x10] sm:$0xff]
    %v263 = vld [vmem:[#allocation7 + $0x18] sm:$0xff]
    %v264 = vld [vmem:[#allocation7 + $0x20] sm:$0xff]
    %v265 = vld [vmem:[#allocation7 + $0x28] sm:$0xff]
    %v266 = vld [vmem:[#allocation7 + $0x30] sm:$0xff]
    %v267 = vld [vmem:[#allocation7 + $0x38] sm:$0xff]
    %v268 = vld [vmem:[#allocation7 + $0x40] sm:$0xff]
    %v269 = vld [vmem:[#allocation7 + $0x48] sm:$0xff]
    %v270 = vld [vmem:[#allocation7 + $0x50] sm:$0xff]
    %v271 = vld [vmem:[#allocation7 + $0x58] sm:$0xff]
    %v272 = vld [vmem:[#allocation7 + $0x60] sm:$0xff]
    %v273 = vld [vmem:[#allocation7 + $0x68] sm:$0xff]
    %v274 = vld [vmem:[#allocation7 + $0x70] sm:$0xff]
    %v275 = vld [vmem:[#allocation7 + $0x78] sm:$0xff]
    %v276 = vld [vmem:[#allocation7 + $0x80] sm:$0xff]
    %v277 = vld [vmem:[#allocation7 + $0x88] sm:$0xff]
    %v278 = vld [vmem:[#allocation7 + $0x90] sm:$0xff]
    %v279 = vld [vmem:[#allocation7 + $0x98] sm:$0xff]
    %v280 = vld [vmem:[#allocation7 + $0xa0] sm:$0xff]
    %v281 = vld [vmem:[#allocation7 + $0xa8] sm:$0xff]
    %v282 = vld [vmem:[#allocation7 + $0xb0] sm:$0xff]
    %v283 = vld [vmem:[#allocation7 + $0xb8] sm:$0xff]
    %v284 = vld [vmem:[#allocation7 + $0xc0] sm:$0xff]
    %v285 = vld [vmem:[#allocation7 + $0xc8] sm:$0xff]
    %v286 = vld [vmem:[#allocation7 + $0xd0] sm:$0xff]
    %v287 = vld [vmem:[#allocation7 + $0xd8] sm:$0xff]
    %v288 = vld [vmem:[#allocation7 + $0xe0] sm:$0xff]
    %v289 = vld [vmem:[#allocation7 + $0xe8] sm:$0xff]
    %v290 = vld [vmem:[#allocation7 + $0xf0] sm:$0xff]
    %v291 = vld [vmem:[#allocation7 + $0xf8] sm:$0xff]
    %v292 = vld [vmem:[#allocation5] sm:$0xff]
    %v293 = vld [vmem:[#allocation5 + $0x8] sm:$0xff]
    %v294 = vld [vmem:[#allocation5 + $0x10] sm:$0xff]
    %v295 = vld [vmem:[#allocation5 + $0x18] sm:$0xff]
    %296 = vmatpush.msra.mxu0 %v290
    %297 = vmatpush.msra.mxu0 %v288
    %298 = vmatpush.msra.mxu0 %v286
    %299 = vmatpush.msra.mxu0 %v284
    %300 = vmatpush.msra.mxu0 %v282
    %301 = vmatpush.msra.mxu0 %v280
    %302 = vmatpush.msra.mxu0 %v278
    %303 = vmatpush.msra.mxu0 %v276
    %304 = vmatpush.msra.mxu0 %v274
    %305 = vmatpush.msra.mxu0 %v272
    %306 = vmatpush.msra.mxu0 %v270
    %307 = vmatpush.msra.mxu0 %v268
    %308 = vmatpush.msra.mxu0 %v266
    %309 = vmatpush.msra.mxu0 %v264
    %310 = vmatpush.msra.mxu0 %v262
    %311 = vmatpush.msra.mxu0 %v260
    %312 = vmatmul.f32.gmra.mxu0 %v258
    %v313 = vpop.f32.mrf.mxu0
    %v314 = vadd.f32 %v292, %v313
    %315 = vmatmul.f32.gmra.mxu0 %v259
    %v316 = vpop.f32.mrf.mxu0
    %v317 = vadd.f32 %v294, %v316
    %318 = vdwg.mxu0
    %319 = vmatpush.msra.mxu0 %v291
    %320 = vmatpush.msra.mxu0 %v289
    %321 = vmatpush.msra.mxu0 %v287
    %322 = vmatpush.msra.mxu0 %v285
    %323 = vmatpush.msra.mxu0 %v283
    %324 = vmatpush.msra.mxu0 %v281
    %325 = vmatpush.msra.mxu0 %v279
    %326 = vmatpush.msra.mxu0 %v277
    %327 = vmatpush.msra.mxu0 %v275
    %328 = vmatpush.msra.mxu0 %v273
    %329 = vmatpush.msra.mxu0 %v271
    %330 = vmatpush.msra.mxu0 %v269
    %331 = vmatpush.msra.mxu0 %v267
    %332 = vmatpush.msra.mxu0 %v265
    %333 = vmatpush.msra.mxu0 %v263
    %334 = vmatpush.msra.mxu0 %v261
    %335 = vmatmul.f32.gmra.mxu0 %v258
    %v336 = vpop.f32.mrf.mxu0
    %v337 = vadd.f32 %v293, %v336
    %338 = vmatmul.f32.gmra.mxu0 %v259
    %v339 = vpop.f32.mrf.mxu0
    %v340 = vadd.f32 %v295, %v339
    %341 = vdwg.mxu0
    %v342 = vld [vmem:[#allocation11] ss:$8 sm:$0x3]
    %s343 = scalar_lea.vmem [#allocation11], 1
    %v344 = vld [vmem:[%s343] ss:$8 sm:$0x3]
    %s345 = scalar_lea.vmem [#allocation11], 2
    %v346 = vld [vmem:[%s345] ss:$8 sm:$0x3]
    %s347 = scalar_lea.vmem [#allocation11], 3
    %v348 = vld [vmem:[%s347] ss:$8 sm:$0x3]
    %s349 = scalar_lea.vmem [#allocation11], 4
    %v350 = vld [vmem:[%s349] ss:$8 sm:$0xf]
    %v351 = vld [vmem:[%s349] ss:$8 sm:$0x30]
    %v352 = vor.u32 %v350, %v351
    %s353 = scalar_lea.vmem [#allocation11], 5
    %v354 = vld [vmem:[%s353] ss:$8 sm:$0x3]
    %s355 = scalar_lea.vmem [#allocation11], 6
    %v356 = vld [vmem:[%s355] ss:$8 sm:$0xf]
    %s357 = scalar_lea.vmem [#allocation11], 7
    %v358 = vld [vmem:[%s357] ss:$8 sm:$0x3]
    %v359 = vadd.f32 %v314, %v337
    %360 = vadd.xlane.f32.xlu0 %v359
    %v361 = vpop.xlane.xlu0 %360
    %v362 = vadd.f32 %v317, %v340
    %363 = vadd.xlane.f32.xlu0 %v362
    %v364 = vpop.xlane.xlu0 %363
    %v365 = vrcp.pop 256.0
    %v366 = vmul.f32 256.0, %v365
    %v367 = vsub.f32 1.0, %v366
    %v368 = vmul.f32 %v365, %v367
    %v369 = vadd.f32 %v365, %v368
    %vm370 = vweird.f32 %v365
    %v371 = vsel %vm370, %v365, %v369
    %v372 = vmul.f32 %v361, %v371
    %v373 = vmul.f32 %v364, %v371
    %v374 = vsub.f32 %v314, %v372
    %v375 = vsub.f32 %v337, %v372
    %v376 = vsub.f32 %v317, %v373
    %v377 = vsub.f32 %v340, %v373
    %v378 = vmul.f32 %v374, %v374
    %v379 = vmul.f32 %v375, %v375
    %v380 = vmul.f32 %v376, %v376
    %v381 = vmul.f32 %v377, %v377
    %v382 = vadd.f32 %v378, %v379
    %383 = vadd.xlane.f32.xlu0 %v382
    %v384 = vpop.xlane.xlu0 %383
    %v385 = vadd.f32 %v380, %v381
    %386 = vadd.xlane.f32.xlu0 %v385
    %v387 = vpop.xlane.xlu0 %386
    %v388 = vmul.f32 %v384, %v371
    %v389 = vmul.f32 %v387, %v371
    %v390 = vadd.f32 %v388, 1e-05
    %v391 = vadd.f32 %v389, 1e-05
    %v392 = vrsqrt.pop %v390
    %v393 = vmul.f32 %v392, %v390
    %v394 = vmul.f32 %v393, %v392
    %v395 = vmul.f32 0.5, %v394
    %v396 = vsub.f32 1.5, %v395
    %v397 = vmul.f32 %v392, %v396
    %vm398 = vweird.f32 %v390
    %vm399 = vweird.f32 %v392
    %vm400 = vmor %vm398, %vm399
    %v401 = vsel %vm400, %v392, %v397
    %v402 = vrsqrt.pop %v391
    %v403 = vmul.f32 %v402, %v391
    %v404 = vmul.f32 %v403, %v402
    %v405 = vmul.f32 0.5, %v404
    %v406 = vsub.f32 1.5, %v405
    %v407 = vmul.f32 %v402, %v406
    %vm408 = vweird.f32 %v391
    %vm409 = vweird.f32 %v402
    %vm410 = vmor %vm408, %vm409
    %v411 = vsel %vm410, %v402, %v407
    %v412 = vmul.f32 %v374, %v401
    %v413 = vmul.f32 %v375, %v401
    %v414 = vmul.f32 %v376, %v411
    %v415 = vmul.f32 %v377, %v411
    %v417 = vperm.slane %v342, 0
    %v418 = vperm.slane %v342, 1
    %v421 = vmul.f32 %v412, %v417
    %v422 = vmul.f32 %v413, %v418
    %v423 = vmul.f32 %v414, %v417
    %v424 = vmul.f32 %v415, %v418
    %v426 = vperm.slane %v344, 0
    %v427 = vperm.slane %v344, 1
    %v430 = vadd.f32 %v421, %v426
    %v431 = vadd.f32 %v422, %v427
    %v432 = vadd.f32 %v423, %v426
    %v433 = vadd.f32 %v424, %v427
    %v434 = vld [vmem:[#allocation13] sm:$0xff]
    %v435 = vld [vmem:[#allocation13 + $0x8] sm:$0xff]
    %v436 = vld [vmem:[#allocation13 + $0x10] sm:$0xff]
    %v437 = vld [vmem:[#allocation13 + $0x18] sm:$0xff]
    %v438 = vld [vmem:[#allocation13 + $0x20] sm:$0xff]
    %v439 = vld [vmem:[#allocation13 + $0x28] sm:$0xff]
    %v440 = vld [vmem:[#allocation13 + $0x30] sm:$0xff]
    %v441 = vld [vmem:[#allocation13 + $0x38] sm:$0xff]
    %v442 = vld [vmem:[#allocation13 + $0x40] sm:$0xff]
    %v443 = vld [vmem:[#allocation13 + $0x48] sm:$0xff]
    %v444 = vld [vmem:[#allocation13 + $0x50] sm:$0xff]
    %v445 = vld [vmem:[#allocation13 + $0x58] sm:$0xff]
    %v446 = vld [vmem:[#allocation13 + $0x60] sm:$0xff]
    %v447 = vld [vmem:[#allocation13 + $0x68] sm:$0xff]
    %v448 = vld [vmem:[#allocation13 + $0x70] sm:$0xff]
    %v449 = vld [vmem:[#allocation13 + $0x78] sm:$0xff]
    %v450 = vld [vmem:[#allocation13 + $0x80] sm:$0xff]
    %v451 = vld [vmem:[#allocation13 + $0x88] sm:$0xff]
    %v452 = vld [vmem:[#allocation13 + $0x90] sm:$0xff]
    %v453 = vld [vmem:[#allocation13 + $0x98] sm:$0xff]
    %v454 = vld [vmem:[#allocation13 + $0xa0] sm:$0xff]
    %v455 = vld [vmem:[#allocation13 + $0xa8] sm:$0xff]
    %v456 = vld [vmem:[#allocation13 + $0xb0] sm:$0xff]
    %v457 = vld [vmem:[#allocation13 + $0xb8] sm:$0xff]
    %v458 = vld [vmem:[#allocation13 + $0xc0] sm:$0xff]
    %v459 = vld [vmem:[#allocation13 + $0xc8] sm:$0xff]
    %v460 = vld [vmem:[#allocation13 + $0xd0] sm:$0xff]
    %v461 = vld [vmem:[#allocation13 + $0xd8] sm:$0xff]
    %v462 = vld [vmem:[#allocation13 + $0xe0] sm:$0xff]
    %v463 = vld [vmem:[#allocation13 + $0xe8] sm:$0xff]
    %v464 = vld [vmem:[#allocation13 + $0xf0] sm:$0xff]
    %v465 = vld [vmem:[#allocation13 + $0xf8] sm:$0xff]
    %v466 = vld [vmem:[#allocation13 + $0x100] sm:$0xff]
    %v467 = vld [vmem:[#allocation13 + $0x108] sm:$0xff]
    %v468 = vld [vmem:[#allocation13 + $0x110] sm:$0xff]
    %v469 = vld [vmem:[#allocation13 + $0x118] sm:$0xff]
    %v470 = vld [vmem:[#allocation13 + $0x120] sm:$0xff]
    %v471 = vld [vmem:[#allocation13 + $0x128] sm:$0xff]
    %v472 = vld [vmem:[#allocation13 + $0x130] sm:$0xff]
    %v473 = vld [vmem:[#allocation13 + $0x138] sm:$0xff]
    %v474 = vld [vmem:[#allocation13 + $0x140] sm:$0xff]
    %v475 = vld [vmem:[#allocation13 + $0x148] sm:$0xff]
    %v476 = vld [vmem:[#allocation13 + $0x150] sm:$0xff]
    %v477 = vld [vmem:[#allocation13 + $0x158] sm:$0xff]
    %v478 = vld [vmem:[#allocation13 + $0x160] sm:$0xff]
    %v479 = vld [vmem:[#allocation13 + $0x168] sm:$0xff]
    %v480 = vld [vmem:[#allocation13 + $0x170] sm:$0xff]
    %v481 = vld [vmem:[#allocation13 + $0x178] sm:$0xff]
    %v482 = vld [vmem:[#allocation13 + $0x180] sm:$0xff]
    %v483 = vld [vmem:[#allocation13 + $0x188] sm:$0xff]
    %v484 = vld [vmem:[#allocation13 + $0x190] sm:$0xff]
    %v485 = vld [vmem:[#allocation13 + $0x198] sm:$0xff]
    %v486 = vld [vmem:[#allocation13 + $0x1a0] sm:$0xff]
    %v487 = vld [vmem:[#allocation13 + $0x1a8] sm:$0xff]
    %v488 = vld [vmem:[#allocation13 + $0x1b0] sm:$0xff]
    %v489 = vld [vmem:[#allocation13 + $0x1b8] sm:$0xff]
    %v490 = vld [vmem:[#allocation13 + $0x1c0] sm:$0xff]
    %v491 = vld [vmem:[#allocation13 + $0x1c8] sm:$0xff]
    %v492 = vld [vmem:[#allocation13 + $0x1d0] sm:$0xff]
    %v493 = vld [vmem:[#allocation13 + $0x1d8] sm:$0xff]
    %v494 = vld [vmem:[#allocation13 + $0x1e0] sm:$0xff]
    %v495 = vld [vmem:[#allocation13 + $0x1e8] sm:$0xff]
    %v496 = vld [vmem:[#allocation13 + $0x1f0] sm:$0xff]
    %v497 = vld [vmem:[#allocation13 + $0x1f8] sm:$0xff]
    %v498 = vld [vmem:[#allocation13 + $0x200] sm:$0xff]
    %v499 = vld [vmem:[#allocation13 + $0x208] sm:$0xff]
    %v500 = vld [vmem:[#allocation13 + $0x210] sm:$0xff]
    %v501 = vld [vmem:[#allocation13 + $0x218] sm:$0xff]
    %v502 = vld [vmem:[#allocation13 + $0x220] sm:$0xff]
    %v503 = vld [vmem:[#allocation13 + $0x228] sm:$0xff]
    %v504 = vld [vmem:[#allocation13 + $0x230] sm:$0xff]
    %v505 = vld [vmem:[#allocation13 + $0x238] sm:$0xff]
    %v506 = vld [vmem:[#allocation13 + $0x240] sm:$0xff]
    %v507 = vld [vmem:[#allocation13 + $0x248] sm:$0xff]
    %v508 = vld [vmem:[#allocation13 + $0x250] sm:$0xff]
    %v509 = vld [vmem:[#allocation13 + $0x258] sm:$0xff]
    %v510 = vld [vmem:[#allocation13 + $0x260] sm:$0xff]
    %v511 = vld [vmem:[#allocation13 + $0x268] sm:$0xff]
    %v512 = vld [vmem:[#allocation13 + $0x270] sm:$0xff]
    %v513 = vld [vmem:[#allocation13 + $0x278] sm:$0xff]
    %v514 = vld [vmem:[#allocation13 + $0x280] sm:$0xff]
    %v515 = vld [vmem:[#allocation13 + $0x288] sm:$0xff]
    %v516 = vld [vmem:[#allocation13 + $0x290] sm:$0xff]
    %v517 = vld [vmem:[#allocation13 + $0x298] sm:$0xff]
    %v518 = vld [vmem:[#allocation13 + $0x2a0] sm:$0xff]
    %v519 = vld [vmem:[#allocation13 + $0x2a8] sm:$0xff]
    %v520 = vld [vmem:[#allocation13 + $0x2b0] sm:$0xff]
    %v521 = vld [vmem:[#allocation13 + $0x2b8] sm:$0xff]
    %v522 = vld [vmem:[#allocation13 + $0x2c0] sm:$0xff]
    %v523 = vld [vmem:[#allocation13 + $0x2c8] sm:$0xff]
    %v524 = vld [vmem:[#allocation13 + $0x2d0] sm:$0xff]
    %v525 = vld [vmem:[#allocation13 + $0x2d8] sm:$0xff]
    %v526 = vld [vmem:[#allocation13 + $0x2e0] sm:$0xff]
    %v527 = vld [vmem:[#allocation13 + $0x2e8] sm:$0xff]
    %v528 = vld [vmem:[#allocation13 + $0x2f0] sm:$0xff]
    %v529 = vld [vmem:[#allocation13 + $0x2f8] sm:$0xff]
    %v530 = vpack.c.bf16 %v432, %v430
    %v531 = vpack.c.bf16 %v433, %v431
    %v533 = vperm.slane %v352, 0
    %v534 = vperm.slane %v352, 1
    %v535 = vperm.slane %v352, 2
    %v536 = vperm.slane %v352, 3
    %v537 = vperm.slane %v352, 4
    %v538 = vperm.slane %v352, 5
    %v641 = vunpack.c.l.b16 %v434
    %v642 = vunpack.c.h.b16 %v434
    %v643 = vunpack.c.l.b16 %v435
    %v644 = vunpack.c.h.b16 %v435
    %v645 = vunpack.c.l.b16 %v436
    %v646 = vunpack.c.h.b16 %v436
    %v647 = vunpack.c.l.b16 %v437
    %v648 = vunpack.c.h.b16 %v437
    %v649 = vunpack.c.l.b16 %v438
    %v650 = vunpack.c.h.b16 %v438
    %v651 = vunpack.c.l.b16 %v439
    %v652 = vunpack.c.h.b16 %v439
    %v653 = vunpack.c.l.b16 %v440
    %v654 = vunpack.c.h.b16 %v440
    %v655 = vunpack.c.l.b16 %v441
    %v656 = vunpack.c.h.b16 %v441
    %v657 = vunpack.c.l.b16 %v442
    %v658 = vunpack.c.h.b16 %v442
    %v659 = vunpack.c.l.b16 %v443
    %v660 = vunpack.c.h.b16 %v443
    %v661 = vunpack.c.l.b16 %v444
    %v662 = vunpack.c.h.b16 %v444
    %v663 = vunpack.c.l.b16 %v445
    %v664 = vunpack.c.h.b16 %v445
    %v665 = vunpack.c.l.b16 %v446
    %v666 = vunpack.c.h.b16 %v446
    %v667 = vunpack.c.l.b16 %v447
    %v668 = vunpack.c.h.b16 %v447
    %v669 = vunpack.c.l.b16 %v448
    %v670 = vunpack.c.h.b16 %v448
    %v671 = vunpack.c.l.b16 %v449
    %v672 = vunpack.c.h.b16 %v449
    %v673 = vunpack.c.l.b16 %v450
    %v674 = vunpack.c.h.b16 %v450
    %v675 = vunpack.c.l.b16 %v451
    %v676 = vunpack.c.h.b16 %v451
    %v677 = vunpack.c.l.b16 %v452
    %v678 = vunpack.c.h.b16 %v452
    %v679 = vunpack.c.l.b16 %v453
    %v680 = vunpack.c.h.b16 %v453
    %v681 = vunpack.c.l.b16 %v454
    %v682 = vunpack.c.h.b16 %v454
    %v683 = vunpack.c.l.b16 %v455
    %v684 = vunpack.c.h.b16 %v455
    %v685 = vunpack.c.l.b16 %v456
    %v686 = vunpack.c.h.b16 %v456
    %v687 = vunpack.c.l.b16 %v457
    %v688 = vunpack.c.h.b16 %v457
    %v689 = vunpack.c.l.b16 %v458
    %v690 = vunpack.c.h.b16 %v458
    %v691 = vunpack.c.l.b16 %v459
    %v692 = vunpack.c.h.b16 %v459
    %v693 = vunpack.c.l.b16 %v460
    %v694 = vunpack.c.h.b16 %v460
    %v695 = vunpack.c.l.b16 %v461
    %v696 = vunpack.c.h.b16 %v461
    %v697 = vunpack.c.l.b16 %v462
    %v698 = vunpack.c.h.b16 %v462
    %v699 = vunpack.c.l.b16 %v463
    %v700 = vunpack.c.h.b16 %v463
    %v701 = vunpack.c.l.b16 %v464
    %v702 = vunpack.c.h.b16 %v464
    %v703 = vunpack.c.l.b16 %v465
    %v704 = vunpack.c.h.b16 %v465
    %v705 = vunpack.c.l.b16 %v466
    %v706 = vunpack.c.h.b16 %v466
    %v707 = vunpack.c.l.b16 %v467
    %v708 = vunpack.c.h.b16 %v467
    %v709 = vunpack.c.l.b16 %v468
    %v710 = vunpack.c.h.b16 %v468
    %v711 = vunpack.c.l.b16 %v469
    %v712 = vunpack.c.h.b16 %v469
    %v713 = vunpack.c.l.b16 %v470
    %v714 = vunpack.c.h.b16 %v470
    %v715 = vunpack.c.l.b16 %v471
    %v716 = vunpack.c.h.b16 %v471
    %v717 = vunpack.c.l.b16 %v472
    %v718 = vunpack.c.h.b16 %v472
    %v719 = vunpack.c.l.b16 %v473
    %v720 = vunpack.c.h.b16 %v473
    %v721 = vunpack.c.l.b16 %v474
    %v722 = vunpack.c.h.b16 %v474
    %v723 = vunpack.c.l.b16 %v475
    %v724 = vunpack.c.h.b16 %v475
    %v725 = vunpack.c.l.b16 %v476
    %v726 = vunpack.c.h.b16 %v476
    %v727 = vunpack.c.l.b16 %v477
    %v728 = vunpack.c.h.b16 %v477
    %v729 = vunpack.c.l.b16 %v478
    %v730 = vunpack.c.h.b16 %v478
    %v731 = vunpack.c.l.b16 %v479
    %v732 = vunpack.c.h.b16 %v479
    %v733 = vunpack.c.l.b16 %v480
    %v734 = vunpack.c.h.b16 %v480
    %v735 = vunpack.c.l.b16 %v481
    %v736 = vunpack.c.h.b16 %v481
    %v737 = vunpack.c.l.b16 %v482
    %v738 = vunpack.c.h.b16 %v482
    %v739 = vunpack.c.l.b16 %v483
    %v740 = vunpack.c.h.b16 %v483
    %v741 = vunpack.c.l.b16 %v484
    %v742 = vunpack.c.h.b16 %v484
    %v743 = vunpack.c.l.b16 %v485
    %v744 = vunpack.c.h.b16 %v485
    %v745 = vunpack.c.l.b16 %v486
    %v746 = vunpack.c.h.b16 %v486
    %v747 = vunpack.c.l.b16 %v487
    %v748 = vunpack.c.h.b16 %v487
    %v749 = vunpack.c.l.b16 %v488
    %v750 = vunpack.c.h.b16 %v488
    %v751 = vunpack.c.l.b16 %v489
    %v752 = vunpack.c.h.b16 %v489
    %v753 = vunpack.c.l.b16 %v490
    %v754 = vunpack.c.h.b16 %v490
    %v755 = vunpack.c.l.b16 %v491
    %v756 = vunpack.c.h.b16 %v491
    %v757 = vunpack.c.l.b16 %v492
    %v758 = vunpack.c.h.b16 %v492
    %v759 = vunpack.c.l.b16 %v493
    %v760 = vunpack.c.h.b16 %v493
    %v761 = vunpack.c.l.b16 %v494
    %v762 = vunpack.c.h.b16 %v494
    %v763 = vunpack.c.l.b16 %v495
    %v764 = vunpack.c.h.b16 %v495
    %v765 = vunpack.c.l.b16 %v496
    %v766 = vunpack.c.h.b16 %v496
    %v767 = vunpack.c.l.b16 %v497
    %v768 = vunpack.c.h.b16 %v497
    %v769 = vunpack.c.l.b16 %v498
    %v770 = vunpack.c.h.b16 %v498
    %v771 = vunpack.c.l.b16 %v499
    %v772 = vunpack.c.h.b16 %v499
    %v773 = vunpack.c.l.b16 %v500
    %v774 = vunpack.c.h.b16 %v500
    %v775 = vunpack.c.l.b16 %v501
    %v776 = vunpack.c.h.b16 %v501
    %v777 = vunpack.c.l.b16 %v502
    %v778 = vunpack.c.h.b16 %v502
    %v779 = vunpack.c.l.b16 %v503
    %v780 = vunpack.c.h.b16 %v503
    %v781 = vunpack.c.l.b16 %v504
    %v782 = vunpack.c.h.b16 %v504
    %v783 = vunpack.c.l.b16 %v505
    %v784 = vunpack.c.h.b16 %v505
    %v785 = vunpack.c.l.b16 %v506
    %v786 = vunpack.c.h.b16 %v506
    %v787 = vunpack.c.l.b16 %v507
    %v788 = vunpack.c.h.b16 %v507
    %v789 = vunpack.c.l.b16 %v508
    %v790 = vunpack.c.h.b16 %v508
    %v791 = vunpack.c.l.b16 %v509
    %v792 = vunpack.c.h.b16 %v509
    %v793 = vunpack.c.l.b16 %v510
    %v794 = vunpack.c.h.b16 %v510
    %v795 = vunpack.c.l.b16 %v511
    %v796 = vunpack.c.h.b16 %v511
    %v797 = vunpack.c.l.b16 %v512
    %v798 = vunpack.c.h.b16 %v512
    %v799 = vunpack.c.l.b16 %v513
    %v800 = vunpack.c.h.b16 %v513
    %v801 = vunpack.c.l.b16 %v514
    %v802 = vunpack.c.h.b16 %v514
    %v803 = vunpack.c.l.b16 %v515
    %v804 = vunpack.c.h.b16 %v515
    %v805 = vunpack.c.l.b16 %v516
    %v806 = vunpack.c.h.b16 %v516
    %v807 = vunpack.c.l.b16 %v517
    %v808 = vunpack.c.h.b16 %v517
    %v809 = vunpack.c.l.b16 %v518
    %v810 = vunpack.c.h.b16 %v518
    %v811 = vunpack.c.l.b16 %v519
    %v812 = vunpack.c.h.b16 %v519
    %v813 = vunpack.c.l.b16 %v520
    %v814 = vunpack.c.h.b16 %v520
    %v815 = vunpack.c.l.b16 %v521
    %v816 = vunpack.c.h.b16 %v521
    %v817 = vunpack.c.l.b16 %v522
    %v818 = vunpack.c.h.b16 %v522
    %v819 = vunpack.c.l.b16 %v523
    %v820 = vunpack.c.h.b16 %v523
    %v821 = vunpack.c.l.b16 %v524
    %v822 = vunpack.c.h.b16 %v524
    %v823 = vunpack.c.l.b16 %v525
    %v824 = vunpack.c.h.b16 %v525
    %v825 = vunpack.c.l.b16 %v526
    %v826 = vunpack.c.h.b16 %v526
    %v827 = vunpack.c.l.b16 %v527
    %v828 = vunpack.c.h.b16 %v527
    %v829 = vunpack.c.l.b16 %v528
    %v830 = vunpack.c.h.b16 %v528
    %v831 = vunpack.c.l.b16 %v529
    %v832 = vunpack.c.h.b16 %v529
    %v833 = vpack.c.b16 %v647, %v641
    %v834 = vpack.c.b16 %v648, %v642
    %v835 = vpack.c.b16 %v649, %v643
    %v836 = vpack.c.b16 %v650, %v644
    %v837 = vpack.c.b16 %v651, %v645
    %v838 = vpack.c.b16 %v652, %v646
    %v839 = vpack.c.b16 %v659, %v653
    %v840 = vpack.c.b16 %v660, %v654
    %v841 = vpack.c.b16 %v661, %v655
    %v842 = vpack.c.b16 %v662, %v656
    %v843 = vpack.c.b16 %v663, %v657
    %v844 = vpack.c.b16 %v664, %v658
    %v845 = vpack.c.b16 %v671, %v665
    %v846 = vpack.c.b16 %v672, %v666
    %v847 = vpack.c.b16 %v673, %v667
    %v848 = vpack.c.b16 %v674, %v668
    %v849 = vpack.c.b16 %v675, %v669
    %v850 = vpack.c.b16 %v676, %v670
    %v851 = vpack.c.b16 %v683, %v677
    %v852 = vpack.c.b16 %v684, %v678
    %v853 = vpack.c.b16 %v685, %v679
    %v854 = vpack.c.b16 %v686, %v680
    %v855 = vpack.c.b16 %v687, %v681
    %v856 = vpack.c.b16 %v688, %v682
    %v857 = vpack.c.b16 %v695, %v689
    %v858 = vpack.c.b16 %v696, %v690
    %v859 = vpack.c.b16 %v697, %v691
    %v860 = vpack.c.b16 %v698, %v692
    %v861 = vpack.c.b16 %v699, %v693
    %v862 = vpack.c.b16 %v700, %v694
    %v863 = vpack.c.b16 %v707, %v701
    %v864 = vpack.c.b16 %v708, %v702
    %v865 = vpack.c.b16 %v709, %v703
    %v866 = vpack.c.b16 %v710, %v704
    %v867 = vpack.c.b16 %v711, %v705
    %v868 = vpack.c.b16 %v712, %v706
    %v869 = vpack.c.b16 %v719, %v713
    %v870 = vpack.c.b16 %v720, %v714
    %v871 = vpack.c.b16 %v721, %v715
    %v872 = vpack.c.b16 %v722, %v716
    %v873 = vpack.c.b16 %v723, %v717
    %v874 = vpack.c.b16 %v724, %v718
    %v875 = vpack.c.b16 %v731, %v725
    %v876 = vpack.c.b16 %v732, %v726
    %v877 = vpack.c.b16 %v733, %v727
    %v878 = vpack.c.b16 %v734, %v728
    %v879 = vpack.c.b16 %v735, %v729
    %v880 = vpack.c.b16 %v736, %v730
    %v881 = vpack.c.b16 %v743, %v737
    %v882 = vpack.c.b16 %v744, %v738
    %v883 = vpack.c.b16 %v745, %v739
    %v884 = vpack.c.b16 %v746, %v740
    %v885 = vpack.c.b16 %v747, %v741
    %v886 = vpack.c.b16 %v748, %v742
    %v887 = vpack.c.b16 %v755, %v749
    %v888 = vpack.c.b16 %v756, %v750
    %v889 = vpack.c.b16 %v757, %v751
    %v890 = vpack.c.b16 %v758, %v752
    %v891 = vpack.c.b16 %v759, %v753
    %v892 = vpack.c.b16 %v760, %v754
    %v893 = vpack.c.b16 %v767, %v761
    %v894 = vpack.c.b16 %v768, %v762
    %v895 = vpack.c.b16 %v769, %v763
    %v896 = vpack.c.b16 %v770, %v764
    %v897 = vpack.c.b16 %v771, %v765
    %v898 = vpack.c.b16 %v772, %v766
    %v899 = vpack.c.b16 %v779, %v773
    %v900 = vpack.c.b16 %v780, %v774
    %v901 = vpack.c.b16 %v781, %v775
    %v902 = vpack.c.b16 %v782, %v776
    %v903 = vpack.c.b16 %v783, %v777
    %v904 = vpack.c.b16 %v784, %v778
    %v905 = vpack.c.b16 %v791, %v785
    %v906 = vpack.c.b16 %v792, %v786
    %v907 = vpack.c.b16 %v793, %v787
    %v908 = vpack.c.b16 %v794, %v788
    %v909 = vpack.c.b16 %v795, %v789
    %v910 = vpack.c.b16 %v796, %v790
    %v911 = vpack.c.b16 %v803, %v797
    %v912 = vpack.c.b16 %v804, %v798
    %v913 = vpack.c.b16 %v805, %v799
    %v914 = vpack.c.b16 %v806, %v800
    %v915 = vpack.c.b16 %v807, %v801
    %v916 = vpack.c.b16 %v808, %v802
    %v917 = vpack.c.b16 %v815, %v809
    %v918 = vpack.c.b16 %v816, %v810
    %v919 = vpack.c.b16 %v817, %v811
    %v920 = vpack.c.b16 %v818, %v812
    %v921 = vpack.c.b16 %v819, %v813
    %v922 = vpack.c.b16 %v820, %v814
    %v923 = vpack.c.b16 %v827, %v821
    %v924 = vpack.c.b16 %v828, %v822
    %v925 = vpack.c.b16 %v829, %v823
    %v926 = vpack.c.b16 %v830, %v824
    %v927 = vpack.c.b16 %v831, %v825
    %v928 = vpack.c.b16 %v832, %v826
    %1025 = vmatpush.bf16.msra.mxu0 %v875
    %1026 = vmatpush.bf16.msra.mxu0 %v869
    %1027 = vmatpush.bf16.msra.mxu0 %v863
    %1028 = vmatpush.bf16.msra.mxu0 %v857
    %1029 = vmatpush.bf16.msra.mxu0 %v851
    %1030 = vmatpush.bf16.msra.mxu0 %v845
    %1031 = vmatpush.bf16.msra.mxu0 %v839
    %1032 = vmatpush.bf16.msra.mxu0 %v833
    %1033 = vmatmul.bf16.gmra.mxu0 %v530
    %v1034 = vpop.f32.mrf.mxu0
    %v1035 = vadd.f32 %v533, %v1034
    %v1036 = vpop.f32.mrf.mxu0
    %v1037 = vadd.f32 %v533, %v1036
    %1038 = vdwg.mxu0
    %1039 = vmatpush.bf16.msra.mxu0 %v923
    %1040 = vmatpush.bf16.msra.mxu0 %v917
    %1041 = vmatpush.bf16.msra.mxu0 %v911
    %1042 = vmatpush.bf16.msra.mxu0 %v905
    %1043 = vmatpush.bf16.msra.mxu0 %v899
    %1044 = vmatpush.bf16.msra.mxu0 %v893
    %1045 = vmatpush.bf16.msra.mxu0 %v887
    %1046 = vmatpush.bf16.msra.mxu0 %v881
    %1047 = vmatmul.bf16.gmra.mxu0 %v531
    %v1048 = vpop.f32.mrf.mxu0
    %v1049 = vadd.f32 %v1035, %v1048
    %v1050 = vpop.f32.mrf.mxu0
    %v1051 = vadd.f32 %v1037, %v1050
    %1052 = vdwg.mxu0
    %1053 = vmatpush.bf16.msra.mxu0 %v876
    %1054 = vmatpush.bf16.msra.mxu0 %v870
    %1055 = vmatpush.bf16.msra.mxu0 %v864
    %1056 = vmatpush.bf16.msra.mxu0 %v858
    %1057 = vmatpush.bf16.msra.mxu0 %v852
    %1058 = vmatpush.bf16.msra.mxu0 %v846
    %1059 = vmatpush.bf16.msra.mxu0 %v840
    %1060 = vmatpush.bf16.msra.mxu0 %v834
    %1061 = vmatmul.bf16.gmra.mxu0 %v530
    %v1062 = vpop.f32.mrf.mxu0
    %v1063 = vadd.f32 %v534, %v1062
    %v1064 = vpop.f32.mrf.mxu0
    %v1065 = vadd.f32 %v534, %v1064
    %1066 = vdwg.mxu0
    %1067 = vmatpush.bf16.msra.mxu0 %v924
    %1068 = vmatpush.bf16.msra.mxu0 %v918
    %1069 = vmatpush.bf16.msra.mxu0 %v912
    %1070 = vmatpush.bf16.msra.mxu0 %v906
    %1071 = vmatpush.bf16.msra.mxu0 %v900
    %1072 = vmatpush.bf16.msra.mxu0 %v894
    %1073 = vmatpush.bf16.msra.mxu0 %v888
    %1074 = vmatpush.bf16.msra.mxu0 %v882
    %1075 = vmatmul.bf16.gmra.mxu0 %v531
    %v1076 = vpop.f32.mrf.mxu0
    %v1077 = vadd.f32 %v1063, %v1076
    %v1078 = vpop.f32.mrf.mxu0
    %v1079 = vadd.f32 %v1065, %v1078
    %1080 = vdwg.mxu0
    %1081 = vmatpush.bf16.msra.mxu0 %v877
    %1082 = vmatpush.bf16.msra.mxu0 %v871
    %1083 = vmatpush.bf16.msra.mxu0 %v865
    %1084 = vmatpush.bf16.msra.mxu0 %v859
    %1085 = vmatpush.bf16.msra.mxu0 %v853
    %1086 = vmatpush.bf16.msra.mxu0 %v847
    %1087 = vmatpush.bf16.msra.mxu0 %v841
    %1088 = vmatpush.bf16.msra.mxu0 %v835
    %1089 = vmatmul.bf16.gmra.mxu0 %v530
    %v1090 = vpop.f32.mrf.mxu0
    %v1091 = vadd.f32 %v535, %v1090
    %v1092 = vpop.f32.mrf.mxu0
    %v1093 = vadd.f32 %v535, %v1092
    %1094 = vdwg.mxu0
    %1095 = vmatpush.bf16.msra.mxu0 %v925
    %1096 = vmatpush.bf16.msra.mxu0 %v919
    %1097 = vmatpush.bf16.msra.mxu0 %v913
    %1098 = vmatpush.bf16.msra.mxu0 %v907
    %1099 = vmatpush.bf16.msra.mxu0 %v901
    %1100 = vmatpush.bf16.msra.mxu0 %v895
    %1101 = vmatpush.bf16.msra.mxu0 %v889
    %1102 = vmatpush.bf16.msra.mxu0 %v883
    %1103 = vmatmul.bf16.gmra.mxu0 %v531
    %v1104 = vpop.f32.mrf.mxu0
    %v1105 = vadd.f32 %v1091, %v1104
    %v1106 = vpop.f32.mrf.mxu0
    %v1107 = vadd.f32 %v1093, %v1106
    %1108 = vdwg.mxu0
    %1109 = vmatpush.bf16.msra.mxu0 %v878
    %1110 = vmatpush.bf16.msra.mxu0 %v872
    %1111 = vmatpush.bf16.msra.mxu0 %v866
    %1112 = vmatpush.bf16.msra.mxu0 %v860
    %1113 = vmatpush.bf16.msra.mxu0 %v854
    %1114 = vmatpush.bf16.msra.mxu0 %v848
    %1115 = vmatpush.bf16.msra.mxu0 %v842
    %1116 = vmatpush.bf16.msra.mxu0 %v836
    %1117 = vmatmul.bf16.gmra.mxu0 %v530
    %v1118 = vpop.f32.mrf.mxu0
    %v1119 = vadd.f32 %v536, %v1118
    %v1120 = vpop.f32.mrf.mxu0
    %v1121 = vadd.f32 %v536, %v1120
    %1122 = vdwg.mxu0
    %1123 = vmatpush.bf16.msra.mxu0 %v926
    %1124 = vmatpush.bf16.msra.mxu0 %v920
    %1125 = vmatpush.bf16.msra.mxu0 %v914
    %1126 = vmatpush.bf16.msra.mxu0 %v908
    %1127 = vmatpush.bf16.msra.mxu0 %v902
    %1128 = vmatpush.bf16.msra.mxu0 %v896
    %1129 = vmatpush.bf16.msra.mxu0 %v890
    %1130 = vmatpush.bf16.msra.mxu0 %v884
    %1131 = vmatmul.bf16.gmra.mxu0 %v531
    %v1132 = vpop.f32.mrf.mxu0
    %v1133 = vadd.f32 %v1119, %v1132
    %v1134 = vpop.f32.mrf.mxu0
    %v1135 = vadd.f32 %v1121, %v1134
    %1136 = vdwg.mxu0
    %1137 = vmatpush.bf16.msra.mxu0 %v879
    %1138 = vmatpush.bf16.msra.mxu0 %v873
    %1139 = vmatpush.bf16.msra.mxu0 %v867
    %1140 = vmatpush.bf16.msra.mxu0 %v861
    %1141 = vmatpush.bf16.msra.mxu0 %v855
    %1142 = vmatpush.bf16.msra.mxu0 %v849
    %1143 = vmatpush.bf16.msra.mxu0 %v843
    %1144 = vmatpush.bf16.msra.mxu0 %v837
    %1145 = vmatmul.bf16.gmra.mxu0 %v530
    %v1146 = vpop.f32.mrf.mxu0
    %v1147 = vadd.f32 %v537, %v1146
    %v1148 = vpop.f32.mrf.mxu0
    %v1149 = vadd.f32 %v537, %v1148
    %1150 = vdwg.mxu0
    %1151 = vmatpush.bf16.msra.mxu0 %v927
    %1152 = vmatpush.bf16.msra.mxu0 %v921
    %1153 = vmatpush.bf16.msra.mxu0 %v915
    %1154 = vmatpush.bf16.msra.mxu0 %v909
    %1155 = vmatpush.bf16.msra.mxu0 %v903
    %1156 = vmatpush.bf16.msra.mxu0 %v897
    %1157 = vmatpush.bf16.msra.mxu0 %v891
    %1158 = vmatpush.bf16.msra.mxu0 %v885
    %1159 = vmatmul.bf16.gmra.mxu0 %v531
    %v1160 = vpop.f32.mrf.mxu0
    %v1161 = vadd.f32 %v1147, %v1160
    %v1162 = vpop.f32.mrf.mxu0
    %v1163 = vadd.f32 %v1149, %v1162
    %1164 = vdwg.mxu0
    %1165 = vmatpush.bf16.msra.mxu0 %v880
    %1166 = vmatpush.bf16.msra.mxu0 %v874
    %1167 = vmatpush.bf16.msra.mxu0 %v868
    %1168 = vmatpush.bf16.msra.mxu0 %v862
    %1169 = vmatpush.bf16.msra.mxu0 %v856
    %1170 = vmatpush.bf16.msra.mxu0 %v850
    %1171 = vmatpush.bf16.msra.mxu0 %v844
    %1172 = vmatpush.bf16.msra.mxu0 %v838
    %1173 = vmatmul.bf16.gmra.mxu0 %v530
    %v1174 = vpop.f32.mrf.mxu0
    %v1175 = vadd.f32 %v538, %v1174
    %v1176 = vpop.f32.mrf.mxu0
    %v1177 = vadd.f32 %v538, %v1176
    %1178 = vdwg.mxu0
    %1179 = vmatpush.bf16.msra.mxu0 %v928
    %1180 = vmatpush.bf16.msra.mxu0 %v922
    %1181 = vmatpush.bf16.msra.mxu0 %v916
    %1182 = vmatpush.bf16.msra.mxu0 %v910
    %1183 = vmatpush.bf16.msra.mxu0 %v904
    %1184 = vmatpush.bf16.msra.mxu0 %v898
    %1185 = vmatpush.bf16.msra.mxu0 %v892
    %1186 = vmatpush.bf16.msra.mxu0 %v886
    %1187 = vmatmul.bf16.gmra.mxu0 %v531
    %v1188 = vpop.f32.mrf.mxu0
    %v1189 = vadd.f32 %v1175, %v1188
    %v1190 = vpop.f32.mrf.mxu0
    %v1191 = vadd.f32 %v1177, %v1190
    %1192 = vdwg.mxu0
    %v1193 = vmul.f32 %v1049, %v1105
    %v1194 = vmul.f32 %v1077, %v1133
    %v1195 = vmul.f32 %v1051, %v1107
    %v1196 = vmul.f32 %v1079, %v1135
    %v1197 = vpack.c.bf16 %v1195, %v1193
    %v1198 = vpack.c.bf16 %v1196, %v1194
    %v1231 = vunpack.c.l.b16 %v210
    %v1232 = vunpack.c.l.b16 %v211
    %v1233 = vunpack.c.l.b16 %v212
    %v1234 = vunpack.c.l.b16 %v213
    %v1235 = vunpack.c.l.b16 %v214
    %v1236 = vunpack.c.l.b16 %v215
    %v1237 = vunpack.c.l.b16 %v216
    %v1238 = vunpack.c.l.b16 %v217
    %v1239 = vunpack.c.l.b16 %v218
    %v1240 = vunpack.c.l.b16 %v219
    %v1241 = vunpack.c.l.b16 %v220
    %v1242 = vunpack.c.l.b16 %v221
    %v1243 = vunpack.c.l.b16 %v222
    %v1244 = vunpack.c.l.b16 %v223
    %v1245 = vunpack.c.l.b16 %v224
    %v1246 = vunpack.c.l.b16 %v225
    %v1247 = vunpack.c.l.b16 %v226
    %v1248 = vunpack.c.l.b16 %v227
    %v1249 = vunpack.c.l.b16 %v228
    %v1250 = vunpack.c.l.b16 %v229
    %v1251 = vunpack.c.l.b16 %v230
    %v1252 = vunpack.c.l.b16 %v231
    %v1253 = vunpack.c.l.b16 %v232
    %v1254 = vunpack.c.l.b16 %v233
    %v1255 = vunpack.c.l.b16 %v234
    %v1256 = vunpack.c.l.b16 %v235
    %v1257 = vunpack.c.l.b16 %v236
    %v1258 = vunpack.c.l.b16 %v237
    %v1259 = vunpack.c.l.b16 %v238
    %v1260 = vunpack.c.l.b16 %v239
    %v1261 = vunpack.c.l.b16 %v240
    %v1262 = vunpack.c.l.b16 %v241
    %v1263 = vpack.c.b16 %v1232, %v1231
    %v1264 = vpack.c.b16 %v1234, %v1233
    %v1265 = vpack.c.b16 %v1236, %v1235
    %v1266 = vpack.c.b16 %v1238, %v1237
    %v1267 = vpack.c.b16 %v1240, %v1239
    %v1268 = vpack.c.b16 %v1242, %v1241
    %v1269 = vpack.c.b16 %v1244, %v1243
    %v1270 = vpack.c.b16 %v1246, %v1245
    %v1271 = vpack.c.b16 %v1248, %v1247
    %v1272 = vpack.c.b16 %v1250, %v1249
    %v1273 = vpack.c.b16 %v1252, %v1251
    %v1274 = vpack.c.b16 %v1254, %v1253
    %v1275 = vpack.c.b16 %v1256, %v1255
    %v1276 = vpack.c.b16 %v1258, %v1257
    %v1277 = vpack.c.b16 %v1260, %v1259
    %v1278 = vpack.c.b16 %v1262, %v1261
    %1295 = vmatpush.bf16.msra.mxu0 %v1270
    %1296 = vmatpush.bf16.msra.mxu0 %v1269
    %1297 = vmatpush.bf16.msra.mxu0 %v1268
    %1298 = vmatpush.bf16.msra.mxu0 %v1267
    %1299 = vmatpush.bf16.msra.mxu0 %v1266
    %1300 = vmatpush.bf16.msra.mxu0 %v1265
    %1301 = vmatpush.bf16.msra.mxu0 %v1264
    %1302 = vmatpush.bf16.msra.mxu0 %v1263
    %1303 = vmatmul.bf16.gmra.mxu0 %v1197
    %v1304 = vpop.f32.mrf.mxu0
    %v1305 = vadd.f32 0.0, %v1304
    %v1306 = vpop.f32.mrf.mxu0
    %v1307 = vadd.f32 0.0, %v1306
    %1308 = vdwg.mxu0
    %1309 = vmatpush.bf16.msra.mxu0 %v1278
    %1310 = vmatpush.bf16.msra.mxu0 %v1277
    %1311 = vmatpush.bf16.msra.mxu0 %v1276
    %1312 = vmatpush.bf16.msra.mxu0 %v1275
    %1313 = vmatpush.bf16.msra.mxu0 %v1274
    %1314 = vmatpush.bf16.msra.mxu0 %v1273
    %1315 = vmatpush.bf16.msra.mxu0 %v1272
    %1316 = vmatpush.bf16.msra.mxu0 %v1271
    %1317 = vmatmul.bf16.gmra.mxu0 %v1198
    %v1318 = vpop.f32.mrf.mxu0
    %v1319 = vadd.f32 %v1305, %v1318
    %v1320 = vpop.f32.mrf.mxu0
    %v1321 = vadd.f32 %v1307, %v1320
    %1322 = vdwg.mxu0
    %v1323 = vmul.f32 %v1319, 0.125
    %v1324 = vmul.f32 %v1321, 0.125
    %v1325 = vmul.f32 %v1049, %v1107
    %v1326 = vmul.f32 %v1077, %v1135
    %v1327 = vmul.f32 %v1051, %v1105
    %v1328 = vmul.f32 %v1079, %v1133
    %v1329 = vpack.c.bf16 %v1327, %v1325
    %v1330 = vpack.c.bf16 %v1328, %v1326
    %1331 = vmatpush.bf16.msra.mxu0 %v1270
    %1332 = vmatpush.bf16.msra.mxu0 %v1269
    %1333 = vmatpush.bf16.msra.mxu0 %v1268
    %1334 = vmatpush.bf16.msra.mxu0 %v1267
    %1335 = vmatpush.bf16.msra.mxu0 %v1266
    %1336 = vmatpush.bf16.msra.mxu0 %v1265
    %1337 = vmatpush.bf16.msra.mxu0 %v1264
    %1338 = vmatpush.bf16.msra.mxu0 %v1263
    %1339 = vmatmul.bf16.gmra.mxu0 %v1329
    %v1340 = vpop.f32.mrf.mxu0
    %v1341 = vadd.f32 0.0, %v1340
    %v1342 = vpop.f32.mrf.mxu0
    %v1343 = vadd.f32 0.0, %v1342
    %1344 = vdwg.mxu0
    %1345 = vmatpush.bf16.msra.mxu0 %v1278
    %1346 = vmatpush.bf16.msra.mxu0 %v1277
    %1347 = vmatpush.bf16.msra.mxu0 %v1276
    %1348 = vmatpush.bf16.msra.mxu0 %v1275
    %1349 = vmatpush.bf16.msra.mxu0 %v1274
    %1350 = vmatpush.bf16.msra.mxu0 %v1273
    %1351 = vmatpush.bf16.msra.mxu0 %v1272
    %1352 = vmatpush.bf16.msra.mxu0 %v1271
    %1353 = vmatmul.bf16.gmra.mxu0 %v1330
    %v1354 = vpop.f32.mrf.mxu0
    %v1355 = vadd.f32 %v1341, %v1354
    %v1356 = vpop.f32.mrf.mxu0
    %v1357 = vadd.f32 %v1343, %v1356
    %1358 = vdwg.mxu0
    %v1359 = vmul.f32 %v1355, 0.125
    %v1360 = vmul.f32 %v1357, 0.125
    %v1361 = vmax.f32 %v1323, %v1359
    %v1362 = vmax.f32 %v1324, %v1360
    %v1363 = vsub.f32 %v1323, %v1361
    %v1364 = vsub.f32 %v1324, %v1362
    %v1365 = vmul.f32 %v1363, 1.442695
    %v1366 = vpow.pop %v1365
    %v1367 = vmul.f32 %v1364, 1.442695
    %v1368 = vpow.pop %v1367
    %v1369 = vsub.f32 %v1359, %v1361
    %v1370 = vsub.f32 %v1360, %v1362
    %v1371 = vmul.f32 %v1369, 1.442695
    %v1372 = vpow.pop %v1371
    %v1373 = vmul.f32 %v1370, 1.442695
    %v1374 = vpow.pop %v1373
    %v1375 = vadd.f32 %v1366, %v1372
    %v1376 = vadd.f32 %v1368, %v1374
    %v1377 = vrcp.pop %v1375
    %v1378 = vrcp.pop %v1376
    %v1379 = vmul.f32 %v1366, %v1377
    %v1380 = vmul.f32 %v1368, %v1378
    %v1381 = vmul.f32 %v1372, %v1377
    %v1382 = vmul.f32 %v1374, %v1378
    %v1383 = vpack.c.bf16 %v1380, %v1379
    %v1400 = vunpack.c.l.b16 %v242
    %v1401 = vunpack.c.h.b16 %v242
    %v1402 = vunpack.c.l.b16 %v243
    %v1403 = vunpack.c.h.b16 %v243
    %v1404 = vunpack.c.l.b16 %v244
    %v1405 = vunpack.c.h.b16 %v244
    %v1406 = vunpack.c.l.b16 %v245
    %v1407 = vunpack.c.h.b16 %v245
    %v1408 = vunpack.c.l.b16 %v246
    %v1409 = vunpack.c.h.b16 %v246
    %v1410 = vunpack.c.l.b16 %v247
    %v1411 = vunpack.c.h.b16 %v247
    %v1412 = vunpack.c.l.b16 %v248
    %v1413 = vunpack.c.h.b16 %v248
    %v1414 = vunpack.c.l.b16 %v249
    %v1415 = vunpack.c.h.b16 %v249
    %v1416 = vunpack.c.l.b16 %v250
    %v1417 = vunpack.c.h.b16 %v250
    %v1418 = vunpack.c.l.b16 %v251
    %v1419 = vunpack.c.h.b16 %v251
    %v1420 = vunpack.c.l.b16 %v252
    %v1421 = vunpack.c.h.b16 %v252
    %v1422 = vunpack.c.l.b16 %v253
    %v1423 = vunpack.c.h.b16 %v253
    %v1424 = vunpack.c.l.b16 %v254
    %v1425 = vunpack.c.h.b16 %v254
    %v1426 = vunpack.c.l.b16 %v255
    %v1427 = vunpack.c.h.b16 %v255
    %v1428 = vunpack.c.l.b16 %v256
    %v1429 = vunpack.c.h.b16 %v256
    %v1430 = vunpack.c.l.b16 %v257
    %v1431 = vunpack.c.h.b16 %v257
    %v1432 = vpack.c.b16 %v1402, %v1400
    %v1433 = vpack.c.b16 %v1403, %v1401
    %v1434 = vpack.c.b16 %v1406, %v1404
    %v1435 = vpack.c.b16 %v1407, %v1405
    %v1436 = vpack.c.b16 %v1410, %v1408
    %v1437 = vpack.c.b16 %v1411, %v1409
    %v1438 = vpack.c.b16 %v1414, %v1412
    %v1439 = vpack.c.b16 %v1415, %v1413
    %v1440 = vpack.c.b16 %v1418, %v1416
    %v1441 = vpack.c.b16 %v1419, %v1417
    %v1442 = vpack.c.b16 %v1422, %v1420
    %v1443 = vpack.c.b16 %v1423, %v1421
    %v1444 = vpack.c.b16 %v1426, %v1424
    %v1445 = vpack.c.b16 %v1427, %v1425
    %v1446 = vpack.c.b16 %v1430, %v1428
    %v1447 = vpack.c.b16 %v1431, %v1429
    %1464 = vmatpush.bf16.msra.mxu0 %v1446
    %1465 = vmatpush.bf16.msra.mxu0 %v1444
    %1466 = vmatpush.bf16.msra.mxu0 %v1442
    %1467 = vmatpush.bf16.msra.mxu0 %v1440
    %1468 = vmatpush.bf16.msra.mxu0 %v1438
    %1469 = vmatpush.bf16.msra.mxu0 %v1436
    %1470 = vmatpush.bf16.msra.mxu0 %v1434
    %1471 = vmatpush.bf16.msra.mxu0 %v1432
    %1472 = vmatmul.bf16.gmra.mxu0 %v1383
    %v1473 = vpop.f32.mrf.mxu0
    %v1474 = vadd.f32 0.0, %v1473
    %v1475 = vpop.f32.mrf.mxu0
    %v1476 = vadd.f32 0.0, %v1475
    %1477 = vdwg.mxu0
    %1478 = vmatpush.bf16.msra.mxu0 %v1447
    %1479 = vmatpush.bf16.msra.mxu0 %v1445
    %1480 = vmatpush.bf16.msra.mxu0 %v1443
    %1481 = vmatpush.bf16.msra.mxu0 %v1441
    %1482 = vmatpush.bf16.msra.mxu0 %v1439
    %1483 = vmatpush.bf16.msra.mxu0 %v1437
    %1484 = vmatpush.bf16.msra.mxu0 %v1435
    %1485 = vmatpush.bf16.msra.mxu0 %v1433
    %1486 = vmatmul.bf16.gmra.mxu0 %v1383
    %v1487 = vpop.f32.mrf.mxu0
    %v1488 = vadd.f32 0.0, %v1487
    %v1489 = vpop.f32.mrf.mxu0
    %v1490 = vadd.f32 0.0, %v1489
    %1491 = vdwg.mxu0
    %v1492 = vmul.f32 %v1474, %v1161
    %v1493 = vmul.f32 %v1488, %v1189
    %v1494 = vmul.f32 %v1476, %v1163
    %v1495 = vmul.f32 %v1490, %v1191
    %v1496 = vpack.c.bf16 %v1382, %v1381
    %1497 = vmatpush.bf16.msra.mxu0 %v1446
    %1498 = vmatpush.bf16.msra.mxu0 %v1444
    %1499 = vmatpush.bf16.msra.mxu0 %v1442
    %1500 = vmatpush.bf16.msra.mxu0 %v1440
    %1501 = vmatpush.bf16.msra.mxu0 %v1438
    %1502 = vmatpush.bf16.msra.mxu0 %v1436
    %1503 = vmatpush.bf16.msra.mxu0 %v1434
    %1504 = vmatpush.bf16.msra.mxu0 %v1432
    %1505 = vmatmul.bf16.gmra.mxu0 %v1496
    %v1506 = vpop.f32.mrf.mxu0
    %v1507 = vadd.f32 0.0, %v1506
    %v1508 = vpop.f32.mrf.mxu0
    %v1509 = vadd.f32 0.0, %v1508
    %1510 = vdwg.mxu0
    %1511 = vmatpush.bf16.msra.mxu0 %v1447
    %1512 = vmatpush.bf16.msra.mxu0 %v1445
    %1513 = vmatpush.bf16.msra.mxu0 %v1443
    %1514 = vmatpush.bf16.msra.mxu0 %v1441
    %1515 = vmatpush.bf16.msra.mxu0 %v1439
    %1516 = vmatpush.bf16.msra.mxu0 %v1437
    %1517 = vmatpush.bf16.msra.mxu0 %v1435
    %1518 = vmatpush.bf16.msra.mxu0 %v1433
    %1519 = vmatmul.bf16.gmra.mxu0 %v1496
    %v1520 = vpop.f32.mrf.mxu0
    %v1521 = vadd.f32 0.0, %v1520
    %v1522 = vpop.f32.mrf.mxu0
    %v1523 = vadd.f32 0.0, %v1522
    %1524 = vdwg.mxu0
    %v1525 = vmul.f32 %v1507, %v1163
    %v1526 = vmul.f32 %v1521, %v1191
    %v1527 = vmul.f32 %v1509, %v1161
    %v1528 = vmul.f32 %v1523, %v1189
    %v1529 = vadd.f32 %v1492, %v1525
    %v1530 = vadd.f32 %v1493, %v1526
    %v1531 = vadd.f32 %v1494, %v1527
    %v1532 = vadd.f32 %v1495, %v1528
    %v1533 = vld [vmem:[#allocation14] sm:$0xff]
    %v1534 = vld [vmem:[#allocation14 + $0x8] sm:$0xff]
    %v1535 = vld [vmem:[#allocation14 + $0x10] sm:$0xff]
    %v1536 = vld [vmem:[#allocation14 + $0x18] sm:$0xff]
    %v1537 = vld [vmem:[#allocation14 + $0x20] sm:$0xff]
    %v1538 = vld [vmem:[#allocation14 + $0x28] sm:$0xff]
    %v1539 = vld [vmem:[#allocation14 + $0x30] sm:$0xff]
    %v1540 = vld [vmem:[#allocation14 + $0x38] sm:$0xff]
    %v1541 = vld [vmem:[#allocation14 + $0x40] sm:$0xff]
    %v1542 = vld [vmem:[#allocation14 + $0x48] sm:$0xff]
    %v1543 = vld [vmem:[#allocation14 + $0x50] sm:$0xff]
    %v1544 = vld [vmem:[#allocation14 + $0x58] sm:$0xff]
    %v1545 = vld [vmem:[#allocation14 + $0x60] sm:$0xff]
    %v1546 = vld [vmem:[#allocation14 + $0x68] sm:$0xff]
    %v1547 = vld [vmem:[#allocation14 + $0x70] sm:$0xff]
    %v1548 = vld [vmem:[#allocation14 + $0x78] sm:$0xff]
    %v1549 = vld [vmem:[#allocation14 + $0x80] sm:$0xff]
    %v1550 = vld [vmem:[#allocation14 + $0x88] sm:$0xff]
    %v1551 = vld [vmem:[#allocation14 + $0x90] sm:$0xff]
    %v1552 = vld [vmem:[#allocation14 + $0x98] sm:$0xff]
    %v1553 = vld [vmem:[#allocation14 + $0xa0] sm:$0xff]
    %v1554 = vld [vmem:[#allocation14 + $0xa8] sm:$0xff]
    %v1555 = vld [vmem:[#allocation14 + $0xb0] sm:$0xff]
    %v1556 = vld [vmem:[#allocation14 + $0xb8] sm:$0xff]
    %v1557 = vld [vmem:[#allocation14 + $0xc0] sm:$0xff]
    %v1558 = vld [vmem:[#allocation14 + $0xc8] sm:$0xff]
    %v1559 = vld [vmem:[#allocation14 + $0xd0] sm:$0xff]
    %v1560 = vld [vmem:[#allocation14 + $0xd8] sm:$0xff]
    %v1561 = vld [vmem:[#allocation14 + $0xe0] sm:$0xff]
    %v1562 = vld [vmem:[#allocation14 + $0xe8] sm:$0xff]
    %v1563 = vld [vmem:[#allocation14 + $0xf0] sm:$0xff]
    %v1564 = vld [vmem:[#allocation14 + $0xf8] sm:$0xff]
    %v1565 = vpack.c.bf16 %v1531, %v1529
    %v1566 = vpack.c.bf16 %v1532, %v1530
    %v1599 = vunpack.c.l.b16 %v1533
    %v1600 = vunpack.c.h.b16 %v1533
    %v1601 = vunpack.c.l.b16 %v1534
    %v1602 = vunpack.c.h.b16 %v1534
    %v1603 = vunpack.c.l.b16 %v1535
    %v1604 = vunpack.c.h.b16 %v1535
    %v1605 = vunpack.c.l.b16 %v1536
    %v1606 = vunpack.c.h.b16 %v1536
    %v1607 = vunpack.c.l.b16 %v1537
    %v1608 = vunpack.c.h.b16 %v1537
    %v1609 = vunpack.c.l.b16 %v1538
    %v1610 = vunpack.c.h.b16 %v1538
    %v1611 = vunpack.c.l.b16 %v1539
    %v1612 = vunpack.c.h.b16 %v1539
    %v1613 = vunpack.c.l.b16 %v1540
    %v1614 = vunpack.c.h.b16 %v1540
    %v1615 = vunpack.c.l.b16 %v1541
    %v1616 = vunpack.c.h.b16 %v1541
    %v1617 = vunpack.c.l.b16 %v1542
    %v1618 = vunpack.c.h.b16 %v1542
    %v1619 = vunpack.c.l.b16 %v1543
    %v1620 = vunpack.c.h.b16 %v1543
    %v1621 = vunpack.c.l.b16 %v1544
    %v1622 = vunpack.c.h.b16 %v1544
    %v1623 = vunpack.c.l.b16 %v1545
    %v1624 = vunpack.c.h.b16 %v1545
    %v1625 = vunpack.c.l.b16 %v1546
    %v1626 = vunpack.c.h.b16 %v1546
    %v1627 = vunpack.c.l.b16 %v1547
    %v1628 = vunpack.c.h.b16 %v1547
    %v1629 = vunpack.c.l.b16 %v1548
    %v1630 = vunpack.c.h.b16 %v1548
    %v1631 = vunpack.c.l.b16 %v1549
    %v1632 = vunpack.c.h.b16 %v1549
    %v1633 = vunpack.c.l.b16 %v1550
    %v1634 = vunpack.c.h.b16 %v1550
    %v1635 = vunpack.c.l.b16 %v1551
    %v1636 = vunpack.c.h.b16 %v1551
    %v1637 = vunpack.c.l.b16 %v1552
    %v1638 = vunpack.c.h.b16 %v1552
    %v1639 = vunpack.c.l.b16 %v1553
    %v1640 = vunpack.c.h.b16 %v1553
    %v1641 = vunpack.c.l.b16 %v1554
    %v1642 = vunpack.c.h.b16 %v1554
    %v1643 = vunpack.c.l.b16 %v1555
    %v1644 = vunpack.c.h.b16 %v1555
    %v1645 = vunpack.c.l.b16 %v1556
    %v1646 = vunpack.c.h.b16 %v1556
    %v1647 = vunpack.c.l.b16 %v1557
    %v1648 = vunpack.c.h.b16 %v1557
    %v1649 = vunpack.c.l.b16 %v1558
    %v1650 = vunpack.c.h.b16 %v1558
    %v1651 = vunpack.c.l.b16 %v1559
    %v1652 = vunpack.c.h.b16 %v1559
    %v1653 = vunpack.c.l.b16 %v1560
    %v1654 = vunpack.c.h.b16 %v1560
    %v1655 = vunpack.c.l.b16 %v1561
    %v1656 = vunpack.c.h.b16 %v1561
    %v1657 = vunpack.c.l.b16 %v1562
    %v1658 = vunpack.c.h.b16 %v1562
    %v1659 = vunpack.c.l.b16 %v1563
    %v1660 = vunpack.c.h.b16 %v1563
    %v1661 = vunpack.c.l.b16 %v1564
    %v1662 = vunpack.c.h.b16 %v1564
    %v1663 = vpack.c.b16 %v1601, %v1599
    %v1664 = vpack.c.b16 %v1602, %v1600
    %v1665 = vpack.c.b16 %v1605, %v1603
    %v1666 = vpack.c.b16 %v1606, %v1604
    %v1667 = vpack.c.b16 %v1609, %v1607
    %v1668 = vpack.c.b16 %v1610, %v1608
    %v1669 = vpack.c.b16 %v1613, %v1611
    %v1670 = vpack.c.b16 %v1614, %v1612
    %v1671 = vpack.c.b16 %v1617, %v1615
    %v1672 = vpack.c.b16 %v1618, %v1616
    %v1673 = vpack.c.b16 %v1621, %v1619
    %v1674 = vpack.c.b16 %v1622, %v1620
    %v1675 = vpack.c.b16 %v1625, %v1623
    %v1676 = vpack.c.b16 %v1626, %v1624
    %v1677 = vpack.c.b16 %v1629, %v1627
    %v1678 = vpack.c.b16 %v1630, %v1628
    %v1679 = vpack.c.b16 %v1633, %v1631
    %v1680 = vpack.c.b16 %v1634, %v1632
    %v1681 = vpack.c.b16 %v1637, %v1635
    %v1682 = vpack.c.b16 %v1638, %v1636
    %v1683 = vpack.c.b16 %v1641, %v1639
    %v1684 = vpack.c.b16 %v1642, %v1640
    %v1685 = vpack.c.b16 %v1645, %v1643
    %v1686 = vpack.c.b16 %v1646, %v1644
    %v1687 = vpack.c.b16 %v1649, %v1647
    %v1688 = vpack.c.b16 %v1650, %v1648
    %v1689 = vpack.c.b16 %v1653, %v1651
    %v1690 = vpack.c.b16 %v1654, %v1652
    %v1691 = vpack.c.b16 %v1657, %v1655
    %v1692 = vpack.c.b16 %v1658, %v1656
    %v1693 = vpack.c.b16 %v1661, %v1659
    %v1694 = vpack.c.b16 %v1662, %v1660
    %1727 = vmatpush.bf16.msra.mxu0 %v1677
    %1728 = vmatpush.bf16.msra.mxu0 %v1675
    %1729 = vmatpush.bf16.msra.mxu0 %v1673
    %1730 = vmatpush.bf16.msra.mxu0 %v1671
    %1731 = vmatpush.bf16.msra.mxu0 %v1669
    %1732 = vmatpush.bf16.msra.mxu0 %v1667
    %1733 = vmatpush.bf16.msra.mxu0 %v1665
    %1734 = vmatpush.bf16.msra.mxu0 %v1663
    %1735 = vmatmul.bf16.gmra.mxu0 %v1565
    %v1736 = vpop.f32.mrf.mxu0
    %v1737 = vadd.f32 0.0, %v1736
    %v1738 = vpop.f32.mrf.mxu0
    %v1739 = vadd.f32 0.0, %v1738
    %1740 = vdwg.mxu0
    %1741 = vmatpush.bf16.msra.mxu0 %v1693
    %1742 = vmatpush.bf16.msra.mxu0 %v1691
    %1743 = vmatpush.bf16.msra.mxu0 %v1689
    %1744 = vmatpush.bf16.msra.mxu0 %v1687
    %1745 = vmatpush.bf16.msra.mxu0 %v1685
    %1746 = vmatpush.bf16.msra.mxu0 %v1683
    %1747 = vmatpush.bf16.msra.mxu0 %v1681
    %1748 = vmatpush.bf16.msra.mxu0 %v1679
    %1749 = vmatmul.bf16.gmra.mxu0 %v1566
    %v1750 = vpop.f32.mrf.mxu0
    %v1751 = vadd.f32 %v1737, %v1750
    %v1752 = vpop.f32.mrf.mxu0
    %v1753 = vadd.f32 %v1739, %v1752
    %1754 = vdwg.mxu0
    %1755 = vmatpush.bf16.msra.mxu0 %v1678
    %1756 = vmatpush.bf16.msra.mxu0 %v1676
    %1757 = vmatpush.bf16.msra.mxu0 %v1674
    %1758 = vmatpush.bf16.msra.mxu0 %v1672
    %1759 = vmatpush.bf16.msra.mxu0 %v1670
    %1760 = vmatpush.bf16.msra.mxu0 %v1668
    %1761 = vmatpush.bf16.msra.mxu0 %v1666
    %1762 = vmatpush.bf16.msra.mxu0 %v1664
    %1763 = vmatmul.bf16.gmra.mxu0 %v1565
    %v1764 = vpop.f32.mrf.mxu0
    %v1765 = vadd.f32 0.0, %v1764
    %v1766 = vpop.f32.mrf.mxu0
    %v1767 = vadd.f32 0.0, %v1766
    %1768 = vdwg.mxu0
    %1769 = vmatpush.bf16.msra.mxu0 %v1694
    %1770 = vmatpush.bf16.msra.mxu0 %v1692
    %1771 = vmatpush.bf16.msra.mxu0 %v1690
    %1772 = vmatpush.bf16.msra.mxu0 %v1688
    %1773 = vmatpush.bf16.msra.mxu0 %v1686
    %1774 = vmatpush.bf16.msra.mxu0 %v1684
    %1775 = vmatpush.bf16.msra.mxu0 %v1682
    %1776 = vmatpush.bf16.msra.mxu0 %v1680
    %1777 = vmatmul.bf16.gmra.mxu0 %v1566
    %v1778 = vpop.f32.mrf.mxu0
    %v1779 = vadd.f32 %v1765, %v1778
    %v1780 = vpop.f32.mrf.mxu0
    %v1781 = vadd.f32 %v1767, %v1780
    %1782 = vdwg.mxu0
    %v1783 = vadd.f32 %v314, %v1751
    %v1784 = vadd.f32 %v337, %v1779
    %v1785 = vadd.f32 %v317, %v1753
    %v1786 = vadd.f32 %v340, %v1781
    %v1788 = vperm.slane %v354, 0
    %v1789 = vperm.slane %v354, 1
    %v1792 = vadd.f32 %v1783, %v1788
    %v1793 = vadd.f32 %v1784, %v1789
    %v1794 = vadd.f32 %v1785, %v1788
    %v1795 = vadd.f32 %v1786, %v1789
    %v1796 = vadd.f32 %v1792, %v1793
    %1797 = vadd.xlane.f32.xlu0 %v1796
    %v1798 = vpop.xlane.xlu0 %1797
    %v1799 = vadd.f32 %v1794, %v1795
    %1800 = vadd.xlane.f32.xlu0 %v1799
    %v1801 = vpop.xlane.xlu0 %1800
    %v1802 = vmul.f32 %v1798, %v371
    %v1803 = vmul.f32 %v1801, %v371
    %v1804 = vsub.f32 %v1792, %v1802
    %v1805 = vsub.f32 %v1793, %v1802
    %v1806 = vsub.f32 %v1794, %v1803
    %v1807 = vsub.f32 %v1795, %v1803
    %v1808 = vmul.f32 %v1804, %v1804
    %v1809 = vmul.f32 %v1805, %v1805
    %v1810 = vmul.f32 %v1806, %v1806
    %v1811 = vmul.f32 %v1807, %v1807
    %v1812 = vadd.f32 %v1808, %v1809
    %1813 = vadd.xlane.f32.xlu0 %v1812
    %v1814 = vpop.xlane.xlu0 %1813
    %v1815 = vadd.f32 %v1810, %v1811
    %1816 = vadd.xlane.f32.xlu0 %v1815
    %v1817 = vpop.xlane.xlu0 %1816
    %v1818 = vmul.f32 %v1814, %v371
    %v1819 = vmul.f32 %v1817, %v371
    %v1820 = vadd.f32 %v1818, 1e-05
    %v1821 = vadd.f32 %v1819, 1e-05
    %v1822 = vrsqrt.pop %v1820
    %v1823 = vmul.f32 %v1822, %v1820
    %v1824 = vmul.f32 %v1823, %v1822
    %v1825 = vmul.f32 0.5, %v1824
    %v1826 = vsub.f32 1.5, %v1825
    %v1827 = vmul.f32 %v1822, %v1826
    %vm1828 = vweird.f32 %v1820
    %vm1829 = vweird.f32 %v1822
    %vm1830 = vmor %vm1828, %vm1829
    %v1831 = vsel %vm1830, %v1822, %v1827
    %v1832 = vrsqrt.pop %v1821
    %v1833 = vmul.f32 %v1832, %v1821
    %v1834 = vmul.f32 %v1833, %v1832
    %v1835 = vmul.f32 0.5, %v1834
    %v1836 = vsub.f32 1.5, %v1835
    %v1837 = vmul.f32 %v1832, %v1836
    %vm1838 = vweird.f32 %v1821
    %vm1839 = vweird.f32 %v1832
    %vm1840 = vmor %vm1838, %vm1839
    %v1841 = vsel %vm1840, %v1832, %v1837
    %v1842 = vmul.f32 %v1804, %v1831
    %v1843 = vmul.f32 %v1805, %v1831
    %v1844 = vmul.f32 %v1806, %v1841
    %v1845 = vmul.f32 %v1807, %v1841
    %v1847 = vperm.slane %v346, 0
    %v1848 = vperm.slane %v346, 1
    %v1851 = vmul.f32 %v1842, %v1847
    %v1852 = vmul.f32 %v1843, %v1848
    %v1853 = vmul.f32 %v1844, %v1847
    %v1854 = vmul.f32 %v1845, %v1848
    %v1856 = vperm.slane %v348, 0
    %v1857 = vperm.slane %v348, 1
    %v1860 = vadd.f32 %v1851, %v1856
    %v1861 = vadd.f32 %v1852, %v1857
    %v1862 = vadd.f32 %v1853, %v1856
    %v1863 = vadd.f32 %v1854, %v1857
    %v1864 = vld [vmem:[#allocation16] sm:$0xff]
    %v1865 = vld [vmem:[#allocation16 + $0x8] sm:$0xff]
    %v1866 = vld [vmem:[#allocation16 + $0x10] sm:$0xff]
    %v1867 = vld [vmem:[#allocation16 + $0x18] sm:$0xff]
    %v1868 = vld [vmem:[#allocation16 + $0x20] sm:$0xff]
    %v1869 = vld [vmem:[#allocation16 + $0x28] sm:$0xff]
    %v1870 = vld [vmem:[#allocation16 + $0x30] sm:$0xff]
    %v1871 = vld [vmem:[#allocation16 + $0x38] sm:$0xff]
    %v1872 = vld [vmem:[#allocation16 + $0x40] sm:$0xff]
    %v1873 = vld [vmem:[#allocation16 + $0x48] sm:$0xff]
    %v1874 = vld [vmem:[#allocation16 + $0x50] sm:$0xff]
    %v1875 = vld [vmem:[#allocation16 + $0x58] sm:$0xff]
    %v1876 = vld [vmem:[#allocation16 + $0x60] sm:$0xff]
    %v1877 = vld [vmem:[#allocation16 + $0x68] sm:$0xff]
    %v1878 = vld [vmem:[#allocation16 + $0x70] sm:$0xff]
    %v1879 = vld [vmem:[#allocation16 + $0x78] sm:$0xff]
    %v1880 = vld [vmem:[#allocation16 + $0x80] sm:$0xff]
    %v1881 = vld [vmem:[#allocation16 + $0x88] sm:$0xff]
    %v1882 = vld [vmem:[#allocation16 + $0x90] sm:$0xff]
    %v1883 = vld [vmem:[#allocation16 + $0x98] sm:$0xff]
    %v1884 = vld [vmem:[#allocation16 + $0xa0] sm:$0xff]
    %v1885 = vld [vmem:[#allocation16 + $0xa8] sm:$0xff]
    %v1886 = vld [vmem:[#allocation16 + $0xb0] sm:$0xff]
    %v1887 = vld [vmem:[#allocation16 + $0xb8] sm:$0xff]
    %v1888 = vld [vmem:[#allocation16 + $0xc0] sm:$0xff]
    %v1889 = vld [vmem:[#allocation16 + $0xc8] sm:$0xff]
    %v1890 = vld [vmem:[#allocation16 + $0xd0] sm:$0xff]
    %v1891 = vld [vmem:[#allocation16 + $0xd8] sm:$0xff]
    %v1892 = vld [vmem:[#allocation16 + $0xe0] sm:$0xff]
    %v1893 = vld [vmem:[#allocation16 + $0xe8] sm:$0xff]
    %v1894 = vld [vmem:[#allocation16 + $0xf0] sm:$0xff]
    %v1895 = vld [vmem:[#allocation16 + $0xf8] sm:$0xff]
    %v1896 = vld [vmem:[#allocation16 + $0x100] sm:$0xff]
    %v1897 = vld [vmem:[#allocation16 + $0x108] sm:$0xff]
    %v1898 = vld [vmem:[#allocation16 + $0x110] sm:$0xff]
    %v1899 = vld [vmem:[#allocation16 + $0x118] sm:$0xff]
    %v1900 = vld [vmem:[#allocation16 + $0x120] sm:$0xff]
    %v1901 = vld [vmem:[#allocation16 + $0x128] sm:$0xff]
    %v1902 = vld [vmem:[#allocation16 + $0x130] sm:$0xff]
    %v1903 = vld [vmem:[#allocation16 + $0x138] sm:$0xff]
    %v1904 = vld [vmem:[#allocation16 + $0x140] sm:$0xff]
    %v1905 = vld [vmem:[#allocation16 + $0x148] sm:$0xff]
    %v1906 = vld [vmem:[#allocation16 + $0x150] sm:$0xff]
    %v1907 = vld [vmem:[#allocation16 + $0x158] sm:$0xff]
    %v1908 = vld [vmem:[#allocation16 + $0x160] sm:$0xff]
    %v1909 = vld [vmem:[#allocation16 + $0x168] sm:$0xff]
    %v1910 = vld [vmem:[#allocation16 + $0x170] sm:$0xff]
    %v1911 = vld [vmem:[#allocation16 + $0x178] sm:$0xff]
    %v1912 = vld [vmem:[#allocation16 + $0x180] sm:$0xff]
    %v1913 = vld [vmem:[#allocation16 + $0x188] sm:$0xff]
    %v1914 = vld [vmem:[#allocation16 + $0x190] sm:$0xff]
    %v1915 = vld [vmem:[#allocation16 + $0x198] sm:$0xff]
    %v1916 = vld [vmem:[#allocation16 + $0x1a0] sm:$0xff]
    %v1917 = vld [vmem:[#allocation16 + $0x1a8] sm:$0xff]
    %v1918 = vld [vmem:[#allocation16 + $0x1b0] sm:$0xff]
    %v1919 = vld [vmem:[#allocation16 + $0x1b8] sm:$0xff]
    %v1920 = vld [vmem:[#allocation16 + $0x1c0] sm:$0xff]
    %v1921 = vld [vmem:[#allocation16 + $0x1c8] sm:$0xff]
    %v1922 = vld [vmem:[#allocation16 + $0x1d0] sm:$0xff]
    %v1923 = vld [vmem:[#allocation16 + $0x1d8] sm:$0xff]
    %v1924 = vld [vmem:[#allocation16 + $0x1e0] sm:$0xff]
    %v1925 = vld [vmem:[#allocation16 + $0x1e8] sm:$0xff]
    %v1926 = vld [vmem:[#allocation16 + $0x1f0] sm:$0xff]
    %v1927 = vld [vmem:[#allocation16 + $0x1f8] sm:$0xff]
    %v1928 = vpack.c.bf16 %v1862, %v1860
    %v1929 = vpack.c.bf16 %v1863, %v1861
    %v1931 = vperm.slane %v356, 0
    %v1932 = vperm.slane %v356, 1
    %v1933 = vperm.slane %v356, 2
    %v1934 = vperm.slane %v356, 3
    %v2003 = vunpack.c.l.b16 %v1864
    %v2004 = vunpack.c.h.b16 %v1864
    %v2005 = vunpack.c.l.b16 %v1865
    %v2006 = vunpack.c.h.b16 %v1865
    %v2007 = vunpack.c.l.b16 %v1866
    %v2008 = vunpack.c.h.b16 %v1866
    %v2009 = vunpack.c.l.b16 %v1867
    %v2010 = vunpack.c.h.b16 %v1867
    %v2011 = vunpack.c.l.b16 %v1868
    %v2012 = vunpack.c.h.b16 %v1868
    %v2013 = vunpack.c.l.b16 %v1869
    %v2014 = vunpack.c.h.b16 %v1869
    %v2015 = vunpack.c.l.b16 %v1870
    %v2016 = vunpack.c.h.b16 %v1870
    %v2017 = vunpack.c.l.b16 %v1871
    %v2018 = vunpack.c.h.b16 %v1871
    %v2019 = vunpack.c.l.b16 %v1872
    %v2020 = vunpack.c.h.b16 %v1872
    %v2021 = vunpack.c.l.b16 %v1873
    %v2022 = vunpack.c.h.b16 %v1873
    %v2023 = vunpack.c.l.b16 %v1874
    %v2024 = vunpack.c.h.b16 %v1874
    %v2025 = vunpack.c.l.b16 %v1875
    %v2026 = vunpack.c.h.b16 %v1875
    %v2027 = vunpack.c.l.b16 %v1876
    %v2028 = vunpack.c.h.b16 %v1876
    %v2029 = vunpack.c.l.b16 %v1877
    %v2030 = vunpack.c.h.b16 %v1877
    %v2031 = vunpack.c.l.b16 %v1878
    %v2032 = vunpack.c.h.b16 %v1878
    %v2033 = vunpack.c.l.b16 %v1879
    %v2034 = vunpack.c.h.b16 %v1879
    %v2035 = vunpack.c.l.b16 %v1880
    %v2036 = vunpack.c.h.b16 %v1880
    %v2037 = vunpack.c.l.b16 %v1881
    %v2038 = vunpack.c.h.b16 %v1881
    %v2039 = vunpack.c.l.b16 %v1882
    %v2040 = vunpack.c.h.b16 %v1882
    %v2041 = vunpack.c.l.b16 %v1883
    %v2042 = vunpack.c.h.b16 %v1883
    %v2043 = vunpack.c.l.b16 %v1884
    %v2044 = vunpack.c.h.b16 %v1884
    %v2045 = vunpack.c.l.b16 %v1885
    %v2046 = vunpack.c.h.b16 %v1885
    %v2047 = vunpack.c.l.b16 %v1886
    %v2048 = vunpack.c.h.b16 %v1886
    %v2049 = vunpack.c.l.b16 %v1887
    %v2050 = vunpack.c.h.b16 %v1887
    %v2051 = vunpack.c.l.b16 %v1888
    %v2052 = vunpack.c.h.b16 %v1888
    %v2053 = vunpack.c.l.b16 %v1889
    %v2054 = vunpack.c.h.b16 %v1889
    %v2055 = vunpack.c.l.b16 %v1890
    %v2056 = vunpack.c.h.b16 %v1890
    %v2057 = vunpack.c.l.b16 %v1891
    %v2058 = vunpack.c.h.b16 %v1891
    %v2059 = vunpack.c.l.b16 %v1892
    %v2060 = vunpack.c.h.b16 %v1892
    %v2061 = vunpack.c.l.b16 %v1893
    %v2062 = vunpack.c.h.b16 %v1893
    %v2063 = vunpack.c.l.b16 %v1894
    %v2064 = vunpack.c.h.b16 %v1894
    %v2065 = vunpack.c.l.b16 %v1895
    %v2066 = vunpack.c.h.b16 %v1895
    %v2067 = vunpack.c.l.b16 %v1896
    %v2068 = vunpack.c.h.b16 %v1896
    %v2069 = vunpack.c.l.b16 %v1897
    %v2070 = vunpack.c.h.b16 %v1897
    %v2071 = vunpack.c.l.b16 %v1898
    %v2072 = vunpack.c.h.b16 %v1898
    %v2073 = vunpack.c.l.b16 %v1899
    %v2074 = vunpack.c.h.b16 %v1899
    %v2075 = vunpack.c.l.b16 %v1900
    %v2076 = vunpack.c.h.b16 %v1900
    %v2077 = vunpack.c.l.b16 %v1901
    %v2078 = vunpack.c.h.b16 %v1901
    %v2079 = vunpack.c.l.b16 %v1902
    %v2080 = vunpack.c.h.b16 %v1902
    %v2081 = vunpack.c.l.b16 %v1903
    %v2082 = vunpack.c.h.b16 %v1903
    %v2083 = vunpack.c.l.b16 %v1904
    %v2084 = vunpack.c.h.b16 %v1904
    %v2085 = vunpack.c.l.b16 %v1905
    %v2086 = vunpack.c.h.b16 %v1905
    %v2087 = vunpack.c.l.b16 %v1906
    %v2088 = vunpack.c.h.b16 %v1906
    %v2089 = vunpack.c.l.b16 %v1907
    %v2090 = vunpack.c.h.b16 %v1907
    %v2091 = vunpack.c.l.b16 %v1908
    %v2092 = vunpack.c.h.b16 %v1908
    %v2093 = vunpack.c.l.b16 %v1909
    %v2094 = vunpack.c.h.b16 %v1909
    %v2095 = vunpack.c.l.b16 %v1910
    %v2096 = vunpack.c.h.b16 %v1910
    %v2097 = vunpack.c.l.b16 %v1911
    %v2098 = vunpack.c.h.b16 %v1911
    %v2099 = vunpack.c.l.b16 %v1912
    %v2100 = vunpack.c.h.b16 %v1912
    %v2101 = vunpack.c.l.b16 %v1913
    %v2102 = vunpack.c.h.b16 %v1913
    %v2103 = vunpack.c.l.b16 %v1914
    %v2104 = vunpack.c.h.b16 %v1914
    %v2105 = vunpack.c.l.b16 %v1915
    %v2106 = vunpack.c.h.b16 %v1915
    %v2107 = vunpack.c.l.b16 %v1916
    %v2108 = vunpack.c.h.b16 %v1916
    %v2109 = vunpack.c.l.b16 %v1917
    %v2110 = vunpack.c.h.b16 %v1917
    %v2111 = vunpack.c.l.b16 %v1918
    %v2112 = vunpack.c.h.b16 %v1918
    %v2113 = vunpack.c.l.b16 %v1919
    %v2114 = vunpack.c.h.b16 %v1919
    %v2115 = vunpack.c.l.b16 %v1920
    %v2116 = vunpack.c.h.b16 %v1920
    %v2117 = vunpack.c.l.b16 %v1921
    %v2118 = vunpack.c.h.b16 %v1921
    %v2119 = vunpack.c.l.b16 %v1922
    %v2120 = vunpack.c.h.b16 %v1922
    %v2121 = vunpack.c.l.b16 %v1923
    %v2122 = vunpack.c.h.b16 %v1923
    %v2123 = vunpack.c.l.b16 %v1924
    %v2124 = vunpack.c.h.b16 %v1924
    %v2125 = vunpack.c.l.b16 %v1925
    %v2126 = vunpack.c.h.b16 %v1925
    %v2127 = vunpack.c.l.b16 %v1926
    %v2128 = vunpack.c.h.b16 %v1926
    %v2129 = vunpack.c.l.b16 %v1927
    %v2130 = vunpack.c.h.b16 %v1927
    %v2131 = vpack.c.b16 %v2007, %v2003
    %v2132 = vpack.c.b16 %v2008, %v2004
    %v2133 = vpack.c.b16 %v2009, %v2005
    %v2134 = vpack.c.b16 %v2010, %v2006
    %v2135 = vpack.c.b16 %v2015, %v2011
    %v2136 = vpack.c.b16 %v2016, %v2012
    %v2137 = vpack.c.b16 %v2017, %v2013
    %v2138 = vpack.c.b16 %v2018, %v2014
    %v2139 = vpack.c.b16 %v2023, %v2019
    %v2140 = vpack.c.b16 %v2024, %v2020
    %v2141 = vpack.c.b16 %v2025, %v2021
    %v2142 = vpack.c.b16 %v2026, %v2022
    %v2143 = vpack.c.b16 %v2031, %v2027
    %v2144 = vpack.c.b16 %v2032, %v2028
    %v2145 = vpack.c.b16 %v2033, %v2029
    %v2146 = vpack.c.b16 %v2034, %v2030
    %v2147 = vpack.c.b16 %v2039, %v2035
    %v2148 = vpack.c.b16 %v2040, %v2036
    %v2149 = vpack.c.b16 %v2041, %v2037
    %v2150 = vpack.c.b16 %v2042, %v2038
    %v2151 = vpack.c.b16 %v2047, %v2043
    %v2152 = vpack.c.b16 %v2048, %v2044
    %v2153 = vpack.c.b16 %v2049, %v2045
    %v2154 = vpack.c.b16 %v2050, %v2046
    %v2155 = vpack.c.b16 %v2055, %v2051
    %v2156 = vpack.c.b16 %v2056, %v2052
    %v2157 = vpack.c.b16 %v2057, %v2053
    %v2158 = vpack.c.b16 %v2058, %v2054
    %v2159 = vpack.c.b16 %v2063, %v2059
    %v2160 = vpack.c.b16 %v2064, %v2060
    %v2161 = vpack.c.b16 %v2065, %v2061
    %v2162 = vpack.c.b16 %v2066, %v2062
    %v2163 = vpack.c.b16 %v2071, %v2067
    %v2164 = vpack.c.b16 %v2072, %v2068
    %v2165 = vpack.c.b16 %v2073, %v2069
    %v2166 = vpack.c.b16 %v2074, %v2070
    %v2167 = vpack.c.b16 %v2079, %v2075
    %v2168 = vpack.c.b16 %v2080, %v2076
    %v2169 = vpack.c.b16 %v2081, %v2077
    %v2170 = vpack.c.b16 %v2082, %v2078
    %v2171 = vpack.c.b16 %v2087, %v2083
    %v2172 = vpack.c.b16 %v2088, %v2084
    %v2173 = vpack.c.b16 %v2089, %v2085
    %v2174 = vpack.c.b16 %v2090, %v2086
    %v2175 = vpack.c.b16 %v2095, %v2091
    %v2176 = vpack.c.b16 %v2096, %v2092
    %v2177 = vpack.c.b16 %v2097, %v2093
    %v2178 = vpack.c.b16 %v2098, %v2094
    %v2179 = vpack.c.b16 %v2103, %v2099
    %v2180 = vpack.c.b16 %v2104, %v2100
    %v2181 = vpack.c.b16 %v2105, %v2101
    %v2182 = vpack.c.b16 %v2106, %v2102
    %v2183 = vpack.c.b16 %v2111, %v2107
    %v2184 = vpack.c.b16 %v2112, %v2108
    %v2185 = vpack.c.b16 %v2113, %v2109
    %v2186 = vpack.c.b16 %v2114, %v2110
    %v2187 = vpack.c.b16 %v2119, %v2115
    %v2188 = vpack.c.b16 %v2120, %v2116
    %v2189 = vpack.c.b16 %v2121, %v2117
    %v2190 = vpack.c.b16 %v2122, %v2118
    %v2191 = vpack.c.b16 %v2127, %v2123
    %v2192 = vpack.c.b16 %v2128, %v2124
    %v2193 = vpack.c.b16 %v2129, %v2125
    %v2194 = vpack.c.b16 %v2130, %v2126
    %2259 = vmatpush.bf16.msra.mxu0 %v2159
    %2260 = vmatpush.bf16.msra.mxu0 %v2155
    %2261 = vmatpush.bf16.msra.mxu0 %v2151
    %2262 = vmatpush.bf16.msra.mxu0 %v2147
    %2263 = vmatpush.bf16.msra.mxu0 %v2143
    %2264 = vmatpush.bf16.msra.mxu0 %v2139
    %2265 = vmatpush.bf16.msra.mxu0 %v2135
    %2266 = vmatpush.bf16.msra.mxu0 %v2131
    %2267 = vmatmul.bf16.gmra.mxu0 %v1928
    %v2268 = vpop.f32.mrf.mxu0
    %v2269 = vadd.f32 %v1931, %v2268
    %v2270 = vpop.f32.mrf.mxu0
    %v2271 = vadd.f32 %v1931, %v2270
    %2272 = vdwg.mxu0
    %2273 = vmatpush.bf16.msra.mxu0 %v2191
    %2274 = vmatpush.bf16.msra.mxu0 %v2187
    %2275 = vmatpush.bf16.msra.mxu0 %v2183
    %2276 = vmatpush.bf16.msra.mxu0 %v2179
    %2277 = vmatpush.bf16.msra.mxu0 %v2175
    %2278 = vmatpush.bf16.msra.mxu0 %v2171
    %2279 = vmatpush.bf16.msra.mxu0 %v2167
    %2280 = vmatpush.bf16.msra.mxu0 %v2163
    %2281 = vmatmul.bf16.gmra.mxu0 %v1929
    %v2282 = vpop.f32.mrf.mxu0
    %v2283 = vadd.f32 %v2269, %v2282
    %v2284 = vpop.f32.mrf.mxu0
    %v2285 = vadd.f32 %v2271, %v2284
    %2286 = vdwg.mxu0
    %2287 = vmatpush.bf16.msra.mxu0 %v2160
    %2288 = vmatpush.bf16.msra.mxu0 %v2156
    %2289 = vmatpush.bf16.msra.mxu0 %v2152
    %2290 = vmatpush.bf16.msra.mxu0 %v2148
    %2291 = vmatpush.bf16.msra.mxu0 %v2144
    %2292 = vmatpush.bf16.msra.mxu0 %v2140
    %2293 = vmatpush.bf16.msra.mxu0 %v2136
    %2294 = vmatpush.bf16.msra.mxu0 %v2132
    %2295 = vmatmul.bf16.gmra.mxu0 %v1928
    %v2296 = vpop.f32.mrf.mxu0
    %v2297 = vadd.f32 %v1932, %v2296
    %v2298 = vpop.f32.mrf.mxu0
    %v2299 = vadd.f32 %v1932, %v2298
    %2300 = vdwg.mxu0
    %2301 = vmatpush.bf16.msra.mxu0 %v2192
    %2302 = vmatpush.bf16.msra.mxu0 %v2188
    %2303 = vmatpush.bf16.msra.mxu0 %v2184
    %2304 = vmatpush.bf16.msra.mxu0 %v2180
    %2305 = vmatpush.bf16.msra.mxu0 %v2176
    %2306 = vmatpush.bf16.msra.mxu0 %v2172
    %2307 = vmatpush.bf16.msra.mxu0 %v2168
    %2308 = vmatpush.bf16.msra.mxu0 %v2164
    %2309 = vmatmul.bf16.gmra.mxu0 %v1929
    %v2310 = vpop.f32.mrf.mxu0
    %v2311 = vadd.f32 %v2297, %v2310
    %v2312 = vpop.f32.mrf.mxu0
    %v2313 = vadd.f32 %v2299, %v2312
    %2314 = vdwg.mxu0
    %2315 = vmatpush.bf16.msra.mxu0 %v2161
    %2316 = vmatpush.bf16.msra.mxu0 %v2157
    %2317 = vmatpush.bf16.msra.mxu0 %v2153
    %2318 = vmatpush.bf16.msra.mxu0 %v2149
    %2319 = vmatpush.bf16.msra.mxu0 %v2145
    %2320 = vmatpush.bf16.msra.mxu0 %v2141
    %2321 = vmatpush.bf16.msra.mxu0 %v2137
    %2322 = vmatpush.bf16.msra.mxu0 %v2133
    %2323 = vmatmul.bf16.gmra.mxu0 %v1928
    %v2324 = vpop.f32.mrf.mxu0
    %v2325 = vadd.f32 %v1933, %v2324
    %v2326 = vpop.f32.mrf.mxu0
    %v2327 = vadd.f32 %v1933, %v2326
    %2328 = vdwg.mxu0
    %2329 = vmatpush.bf16.msra.mxu0 %v2193
    %2330 = vmatpush.bf16.msra.mxu0 %v2189
    %2331 = vmatpush.bf16.msra.mxu0 %v2185
    %2332 = vmatpush.bf16.msra.mxu0 %v2181
    %2333 = vmatpush.bf16.msra.mxu0 %v2177
    %2334 = vmatpush.bf16.msra.mxu0 %v2173
    %2335 = vmatpush.bf16.msra.mxu0 %v2169
    %2336 = vmatpush.bf16.msra.mxu0 %v2165
    %2337 = vmatmul.bf16.gmra.mxu0 %v1929
    %v2338 = vpop.f32.mrf.mxu0
    %v2339 = vadd.f32 %v2325, %v2338
    %v2340 = vpop.f32.mrf.mxu0
    %v2341 = vadd.f32 %v2327, %v2340
    %2342 = vdwg.mxu0
    %2343 = vmatpush.bf16.msra.mxu0 %v2162
    %2344 = vmatpush.bf16.msra.mxu0 %v2158
    %2345 = vmatpush.bf16.msra.mxu0 %v2154
    %2346 = vmatpush.bf16.msra.mxu0 %v2150
    %2347 = vmatpush.bf16.msra.mxu0 %v2146
    %2348 = vmatpush.bf16.msra.mxu0 %v2142
    %2349 = vmatpush.bf16.msra.mxu0 %v2138
    %2350 = vmatpush.bf16.msra.mxu0 %v2134
    %2351 = vmatmul.bf16.gmra.mxu0 %v1928
    %v2352 = vpop.f32.mrf.mxu0
    %v2353 = vadd.f32 %v1934, %v2352
    %v2354 = vpop.f32.mrf.mxu0
    %v2355 = vadd.f32 %v1934, %v2354
    %2356 = vdwg.mxu0
    %2357 = vmatpush.bf16.msra.mxu0 %v2194
    %2358 = vmatpush.bf16.msra.mxu0 %v2190
    %2359 = vmatpush.bf16.msra.mxu0 %v2186
    %2360 = vmatpush.bf16.msra.mxu0 %v2182
    %2361 = vmatpush.bf16.msra.mxu0 %v2178
    %2362 = vmatpush.bf16.msra.mxu0 %v2174
    %2363 = vmatpush.bf16.msra.mxu0 %v2170
    %2364 = vmatpush.bf16.msra.mxu0 %v2166
    %2365 = vmatmul.bf16.gmra.mxu0 %v1929
    %v2366 = vpop.f32.mrf.mxu0
    %v2367 = vadd.f32 %v2353, %v2366
    %v2368 = vpop.f32.mrf.mxu0
    %v2369 = vadd.f32 %v2355, %v2368
    %2370 = vdwg.mxu0
    %v2371 = vmul.f32 %v2283, 0.5
    %v2372 = vmul.f32 %v2311, 0.5
    %v2373 = vmul.f32 %v2339, 0.5
    %v2374 = vmul.f32 %v2367, 0.5
    %v2375 = vmul.f32 %v2285, 0.5
    %v2376 = vmul.f32 %v2313, 0.5
    %v2377 = vmul.f32 %v2341, 0.5
    %v2378 = vmul.f32 %v2369, 0.5
    %v2379 = vmul.f32 %v2283, 0.70710677
    %v2380 = vmul.f32 %v2311, 0.70710677
    %v2381 = vmul.f32 %v2339, 0.70710677
    %v2382 = vmul.f32 %v2367, 0.70710677
    %v2383 = vmul.f32 %v2285, 0.70710677
    %v2384 = vmul.f32 %v2313, 0.70710677
    %v2385 = vmul.f32 %v2341, 0.70710677
    %v2386 = vmul.f32 %v2369, 0.70710677
    %v2387 = vand.u32 2147483647, %v2379
    %v2388 = vand.u32 2147483647, %v2380
    %v2389 = vand.u32 2147483647, %v2381
    %v2390 = vand.u32 2147483647, %v2382
    %v2391 = vand.u32 2147483647, %v2383
    %v2392 = vand.u32 2147483647, %v2384
    %v2393 = vand.u32 2147483647, %v2385
    %v2394 = vand.u32 2147483647, %v2386
    %v2395 = vmul.f32 %v2387, 0.3275911
    %v2396 = vmul.f32 %v2388, 0.3275911
    %v2397 = vmul.f32 %v2389, 0.3275911
    %v2398 = vmul.f32 %v2390, 0.3275911
    %v2399 = vmul.f32 %v2391, 0.3275911
    %v2400 = vmul.f32 %v2392, 0.3275911
    %v2401 = vmul.f32 %v2393, 0.3275911
    %v2402 = vmul.f32 %v2394, 0.3275911
    %v2403 = vadd.f32 %v2395, 1.0
    %v2404 = vadd.f32 %v2396, 1.0
    %v2405 = vadd.f32 %v2397, 1.0
    %v2406 = vadd.f32 %v2398, 1.0
    %v2407 = vadd.f32 %v2399, 1.0
    %v2408 = vadd.f32 %v2400, 1.0
    %v2409 = vadd.f32 %v2401, 1.0
    %v2410 = vadd.f32 %v2402, 1.0
    %v2411 = vrcp.pop %v2403
    %v2412 = vmul.f32 %v2403, %v2411
    %v2413 = vsub.f32 1.0, %v2412
    %v2414 = vmul.f32 %v2411, %v2413
    %v2415 = vadd.f32 %v2411, %v2414
    %vm2416 = vweird.f32 %v2403
    %vm2417 = vweird.f32 %v2411
    %vm2418 = vmor %vm2416, %vm2417
    %v2419 = vsel %vm2418, %v2411, %v2415
    %v2420 = vand.u32 2147483647, %v2403
    %vm2421 = vcmp.eq.f32.partialorder %v2420, 8.507059e+37
    %v2422 = vand.u32 %v2403, 2147483648
    %v2423 = vor.u32 1.1754944e-38, %v2422
    %v2424 = vsel %vm2421, %v2423, %v2419
    %v2425 = vmul.f32 1.0, %v2424
    %v2426 = vrcp.pop %v2404
    %v2427 = vmul.f32 %v2404, %v2426
    %v2428 = vsub.f32 1.0, %v2427
    %v2429 = vmul.f32 %v2426, %v2428
    %v2430 = vadd.f32 %v2426, %v2429
    %vm2431 = vweird.f32 %v2404
    %vm2432 = vweird.f32 %v2426
    %vm2433 = vmor %vm2431, %vm2432
    %v2434 = vsel %vm2433, %v2426, %v2430
    %v2435 = vand.u32 2147483647, %v2404
    %vm2436 = vcmp.eq.f32.partialorder %v2435, 8.507059e+37
    %v2437 = vand.u32 %v2404, 2147483648
    %v2438 = vor.u32 1.1754944e-38, %v2437
    %v2439 = vsel %vm2436, %v2438, %v2434
    %v2440 = vmul.f32 1.0, %v2439
    %v2441 = vrcp.pop %v2405
    %v2442 = vmul.f32 %v2405, %v2441
    %v2443 = vsub.f32 1.0, %v2442
    %v2444 = vmul.f32 %v2441, %v2443
    %v2445 = vadd.f32 %v2441, %v2444
    %vm2446 = vweird.f32 %v2405
    %vm2447 = vweird.f32 %v2441
    %vm2448 = vmor %vm2446, %vm2447
    %v2449 = vsel %vm2448, %v2441, %v2445
    %v2450 = vand.u32 2147483647, %v2405
    %vm2451 = vcmp.eq.f32.partialorder %v2450, 8.507059e+37
    %v2452 = vand.u32 %v2405, 2147483648
    %v2453 = vor.u32 1.1754944e-38, %v2452
    %v2454 = vsel %vm2451, %v2453, %v2449
    %v2455 = vmul.f32 1.0, %v2454
    %v2456 = vrcp.pop %v2406
    %v2457 = vmul.f32 %v2406, %v2456
    %v2458 = vsub.f32 1.0, %v2457
    %v2459 = vmul.f32 %v2456, %v2458
    %v2460 = vadd.f32 %v2456, %v2459
    %vm2461 = vweird.f32 %v2406
    %vm2462 = vweird.f32 %v2456
    %vm2463 = vmor %vm2461, %vm2462
    %v2464 = vsel %vm2463, %v2456, %v2460
    %v2465 = vand.u32 2147483647, %v2406
    %vm2466 = vcmp.eq.f32.partialorder %v2465, 8.507059e+37
    %v2467 = vand.u32 %v2406, 2147483648
    %v2468 = vor.u32 1.1754944e-38, %v2467
    %v2469 = vsel %vm2466, %v2468, %v2464
    %v2470 = vmul.f32 1.0, %v2469
    %v2471 = vrcp.pop %v2407
    %v2472 = vmul.f32 %v2407, %v2471
    %v2473 = vsub.f32 1.0, %v2472
    %v2474 = vmul.f32 %v2471, %v2473
    %v2475 = vadd.f32 %v2471, %v2474
    %vm2476 = vweird.f32 %v2407
    %vm2477 = vweird.f32 %v2471
    %vm2478 = vmor %vm2476, %vm2477
    %v2479 = vsel %vm2478, %v2471, %v2475
    %v2480 = vand.u32 2147483647, %v2407
    %vm2481 = vcmp.eq.f32.partialorder %v2480, 8.507059e+37
    %v2482 = vand.u32 %v2407, 2147483648
    %v2483 = vor.u32 1.1754944e-38, %v2482
    %v2484 = vsel %vm2481, %v2483, %v2479
    %v2485 = vmul.f32 1.0, %v2484
    %v2486 = vrcp.pop %v2408
    %v2487 = vmul.f32 %v2408, %v2486
    %v2488 = vsub.f32 1.0, %v2487
    %v2489 = vmul.f32 %v2486, %v2488
    %v2490 = vadd.f32 %v2486, %v2489
    %vm2491 = vweird.f32 %v2408
    %vm2492 = vweird.f32 %v2486
    %vm2493 = vmor %vm2491, %vm2492
    %v2494 = vsel %vm2493, %v2486, %v2490
    %v2495 = vand.u32 2147483647, %v2408
    %vm2496 = vcmp.eq.f32.partialorder %v2495, 8.507059e+37
    %v2497 = vand.u32 %v2408, 2147483648
    %v2498 = vor.u32 1.1754944e-38, %v2497
    %v2499 = vsel %vm2496, %v2498, %v2494
    %v2500 = vmul.f32 1.0, %v2499
    %v2501 = vrcp.pop %v2409
    %v2502 = vmul.f32 %v2409, %v2501
    %v2503 = vsub.f32 1.0, %v2502
    %v2504 = vmul.f32 %v2501, %v2503
    %v2505 = vadd.f32 %v2501, %v2504
    %vm2506 = vweird.f32 %v2409
    %vm2507 = vweird.f32 %v2501
    %vm2508 = vmor %vm2506, %vm2507
    %v2509 = vsel %vm2508, %v2501, %v2505
    %v2510 = vand.u32 2147483647, %v2409
    %vm2511 = vcmp.eq.f32.partialorder %v2510, 8.507059e+37
    %v2512 = vand.u32 %v2409, 2147483648
    %v2513 = vor.u32 1.1754944e-38, %v2512
    %v2514 = vsel %vm2511, %v2513, %v2509
    %v2515 = vmul.f32 1.0, %v2514
    %v2516 = vrcp.pop %v2410
    %v2517 = vmul.f32 %v2410, %v2516
    %v2518 = vsub.f32 1.0, %v2517
    %v2519 = vmul.f32 %v2516, %v2518
    %v2520 = vadd.f32 %v2516, %v2519
    %vm2521 = vweird.f32 %v2410
    %vm2522 = vweird.f32 %v2516
    %vm2523 = vmor %vm2521, %vm2522
    %v2524 = vsel %vm2523, %v2516, %v2520
    %v2525 = vand.u32 2147483647, %v2410
    %vm2526 = vcmp.eq.f32.partialorder %v2525, 8.507059e+37
    %v2527 = vand.u32 %v2410, 2147483648
    %v2528 = vor.u32 1.1754944e-38, %v2527
    %v2529 = vsel %vm2526, %v2528, %v2524
    %v2530 = vmul.f32 1.0, %v2529
    %v2531 = vmul.f32 %v2425, 1.0614054
    %v2532 = vmul.f32 %v2440, 1.0614054
    %v2533 = vmul.f32 %v2455, 1.0614054
    %v2534 = vmul.f32 %v2470, 1.0614054
    %v2535 = vmul.f32 %v2485, 1.0614054
    %v2536 = vmul.f32 %v2500, 1.0614054
    %v2537 = vmul.f32 %v2515, 1.0614054
    %v2538 = vmul.f32 %v2530, 1.0614054
    %v2539 = vadd.f32 %v2531, -1.4531521
    %v2540 = vadd.f32 %v2532, -1.4531521
    %v2541 = vadd.f32 %v2533, -1.4531521
    %v2542 = vadd.f32 %v2534, -1.4531521
    %v2543 = vadd.f32 %v2535, -1.4531521
    %v2544 = vadd.f32 %v2536, -1.4531521
    %v2545 = vadd.f32 %v2537, -1.4531521
    %v2546 = vadd.f32 %v2538, -1.4531521
    %v2547 = vmul.f32 %v2425, %v2539
    %v2548 = vmul.f32 %v2440, %v2540
    %v2549 = vmul.f32 %v2455, %v2541
    %v2550 = vmul.f32 %v2470, %v2542
    %v2551 = vmul.f32 %v2485, %v2543
    %v2552 = vmul.f32 %v2500, %v2544
    %v2553 = vmul.f32 %v2515, %v2545
    %v2554 = vmul.f32 %v2530, %v2546
    %v2555 = vadd.f32 %v2547, 1.4214138
    %v2556 = vadd.f32 %v2548, 1.4214138
    %v2557 = vadd.f32 %v2549, 1.4214138
    %v2558 = vadd.f32 %v2550, 1.4214138
    %v2559 = vadd.f32 %v2551, 1.4214138
    %v2560 = vadd.f32 %v2552, 1.4214138
    %v2561 = vadd.f32 %v2553, 1.4214138
    %v2562 = vadd.f32 %v2554, 1.4214138
    %v2563 = vmul.f32 %v2425, %v2555
    %v2564 = vmul.f32 %v2440, %v2556
    %v2565 = vmul.f32 %v2455, %v2557
    %v2566 = vmul.f32 %v2470, %v2558
    %v2567 = vmul.f32 %v2485, %v2559
    %v2568 = vmul.f32 %v2500, %v2560
    %v2569 = vmul.f32 %v2515, %v2561
    %v2570 = vmul.f32 %v2530, %v2562
    %v2571 = vadd.f32 %v2563, -0.28449672
    %v2572 = vadd.f32 %v2564, -0.28449672
    %v2573 = vadd.f32 %v2565, -0.28449672
    %v2574 = vadd.f32 %v2566, -0.28449672
    %v2575 = vadd.f32 %v2567, -0.28449672
    %v2576 = vadd.f32 %v2568, -0.28449672
    %v2577 = vadd.f32 %v2569, -0.28449672
    %v2578 = vadd.f32 %v2570, -0.28449672
    %v2579 = vmul.f32 %v2425, %v2571
    %v2580 = vmul.f32 %v2440, %v2572
    %v2581 = vmul.f32 %v2455, %v2573
    %v2582 = vmul.f32 %v2470, %v2574
    %v2583 = vmul.f32 %v2485, %v2575
    %v2584 = vmul.f32 %v2500, %v2576
    %v2585 = vmul.f32 %v2515, %v2577
    %v2586 = vmul.f32 %v2530, %v2578
    %v2587 = vadd.f32 %v2579, 0.2548296
    %v2588 = vadd.f32 %v2580, 0.2548296
    %v2589 = vadd.f32 %v2581, 0.2548296
    %v2590 = vadd.f32 %v2582, 0.2548296
    %v2591 = vadd.f32 %v2583, 0.2548296
    %v2592 = vadd.f32 %v2584, 0.2548296
    %v2593 = vadd.f32 %v2585, 0.2548296
    %v2594 = vadd.f32 %v2586, 0.2548296
    %v2595 = vmul.f32 %v2425, %v2587
    %v2596 = vmul.f32 %v2440, %v2588
    %v2597 = vmul.f32 %v2455, %v2589
    %v2598 = vmul.f32 %v2470, %v2590
    %v2599 = vmul.f32 %v2485, %v2591
    %v2600 = vmul.f32 %v2500, %v2592
    %v2601 = vmul.f32 %v2515, %v2593
    %v2602 = vmul.f32 %v2530, %v2594
    %v2603 = vsub.f32 0.0, %v2387
    %v2604 = vsub.f32 0.0, %v2388
    %v2605 = vsub.f32 0.0, %v2389
    %v2606 = vsub.f32 0.0, %v2390
    %v2607 = vsub.f32 0.0, %v2391
    %v2608 = vsub.f32 0.0, %v2392
    %v2609 = vsub.f32 0.0, %v2393
    %v2610 = vsub.f32 0.0, %v2394
    %v2611 = vmul.f32 %v2603, %v2387
    %v2612 = vmul.f32 %v2604, %v2388
    %v2613 = vmul.f32 %v2605, %v2389
    %v2614 = vmul.f32 %v2606, %v2390
    %v2615 = vmul.f32 %v2607, %v2391
    %v2616 = vmul.f32 %v2608, %v2392
    %v2617 = vmul.f32 %v2609, %v2393
    %v2618 = vmul.f32 %v2610, %v2394
    %v2619 = vmul.f32 %v2611, 1.442695
    %v2620 = vpow.pop %v2619
    %v2621 = vmul.f32 %v2612, 1.442695
    %v2622 = vpow.pop %v2621
    %v2623 = vmul.f32 %v2613, 1.442695
    %v2624 = vpow.pop %v2623
    %v2625 = vmul.f32 %v2614, 1.442695
    %v2626 = vpow.pop %v2625
    %v2627 = vmul.f32 %v2615, 1.442695
    %v2628 = vpow.pop %v2627
    %v2629 = vmul.f32 %v2616, 1.442695
    %v2630 = vpow.pop %v2629
    %v2631 = vmul.f32 %v2617, 1.442695
    %v2632 = vpow.pop %v2631
    %v2633 = vmul.f32 %v2618, 1.442695
    %v2634 = vpow.pop %v2633
    %v2635 = vmul.f32 %v2595, %v2620
    %v2636 = vmul.f32 %v2596, %v2622
    %v2637 = vmul.f32 %v2597, %v2624
    %v2638 = vmul.f32 %v2598, %v2626
    %v2639 = vmul.f32 %v2599, %v2628
    %v2640 = vmul.f32 %v2600, %v2630
    %v2641 = vmul.f32 %v2601, %v2632
    %v2642 = vmul.f32 %v2602, %v2634
    %v2643 = vsub.f32 1.0, %v2635
    %v2644 = vsub.f32 1.0, %v2636
    %v2645 = vsub.f32 1.0, %v2637
    %v2646 = vsub.f32 1.0, %v2638
    %v2647 = vsub.f32 1.0, %v2639
    %v2648 = vsub.f32 1.0, %v2640
    %v2649 = vsub.f32 1.0, %v2641
    %v2650 = vsub.f32 1.0, %v2642
    %vm2651 = vcmp.ge.f32.partialorder %v2379, 0.0
    %vm2652 = vcmp.ge.f32.partialorder %v2380, 0.0
    %vm2653 = vcmp.ge.f32.partialorder %v2381, 0.0
    %vm2654 = vcmp.ge.f32.partialorder %v2382, 0.0
    %vm2655 = vcmp.ge.f32.partialorder %v2383, 0.0
    %vm2656 = vcmp.ge.f32.partialorder %v2384, 0.0
    %vm2657 = vcmp.ge.f32.partialorder %v2385, 0.0
    %vm2658 = vcmp.ge.f32.partialorder %v2386, 0.0
    %v2659 = vsub.f32 0.0, %v2643
    %v2660 = vsub.f32 0.0, %v2644
    %v2661 = vsub.f32 0.0, %v2645
    %v2662 = vsub.f32 0.0, %v2646
    %v2663 = vsub.f32 0.0, %v2647
    %v2664 = vsub.f32 0.0, %v2648
    %v2665 = vsub.f32 0.0, %v2649
    %v2666 = vsub.f32 0.0, %v2650
    %v2667 = vsel %vm2651, %v2643, %v2659
    %v2668 = vsel %vm2652, %v2644, %v2660
    %v2669 = vsel %vm2653, %v2645, %v2661
    %v2670 = vsel %vm2654, %v2646, %v2662
    %v2671 = vsel %vm2655, %v2647, %v2663
    %v2672 = vsel %vm2656, %v2648, %v2664
    %v2673 = vsel %vm2657, %v2649, %v2665
    %v2674 = vsel %vm2658, %v2650, %v2666
    %v2675 = vadd.f32 %v2667, 1.0
    %v2676 = vadd.f32 %v2668, 1.0
    %v2677 = vadd.f32 %v2669, 1.0
    %v2678 = vadd.f32 %v2670, 1.0
    %v2679 = vadd.f32 %v2671, 1.0
    %v2680 = vadd.f32 %v2672, 1.0
    %v2681 = vadd.f32 %v2673, 1.0
    %v2682 = vadd.f32 %v2674, 1.0
    %v2683 = vmul.f32 %v2371, %v2675
    %v2684 = vmul.f32 %v2372, %v2676
    %v2685 = vmul.f32 %v2373, %v2677
    %v2686 = vmul.f32 %v2374, %v2678
    %v2687 = vmul.f32 %v2375, %v2679
    %v2688 = vmul.f32 %v2376, %v2680
    %v2689 = vmul.f32 %v2377, %v2681
    %v2690 = vmul.f32 %v2378, %v2682
    %v2691 = vld [vmem:[#allocation17] sm:$0xff]
    %v2692 = vld [vmem:[#allocation17 + $0x8] sm:$0xff]
    %v2693 = vld [vmem:[#allocation17 + $0x10] sm:$0xff]
    %v2694 = vld [vmem:[#allocation17 + $0x18] sm:$0xff]
    %v2695 = vld [vmem:[#allocation17 + $0x20] sm:$0xff]
    %v2696 = vld [vmem:[#allocation17 + $0x28] sm:$0xff]
    %v2697 = vld [vmem:[#allocation17 + $0x30] sm:$0xff]
    %v2698 = vld [vmem:[#allocation17 + $0x38] sm:$0xff]
    %v2699 = vld [vmem:[#allocation17 + $0x40] sm:$0xff]
    %v2700 = vld [vmem:[#allocation17 + $0x48] sm:$0xff]
    %v2701 = vld [vmem:[#allocation17 + $0x50] sm:$0xff]
    %v2702 = vld [vmem:[#allocation17 + $0x58] sm:$0xff]
    %v2703 = vld [vmem:[#allocation17 + $0x60] sm:$0xff]
    %v2704 = vld [vmem:[#allocation17 + $0x68] sm:$0xff]
    %v2705 = vld [vmem:[#allocation17 + $0x70] sm:$0xff]
    %v2706 = vld [vmem:[#allocation17 + $0x78] sm:$0xff]
    %v2707 = vld [vmem:[#allocation17 + $0x80] sm:$0xff]
    %v2708 = vld [vmem:[#allocation17 + $0x88] sm:$0xff]
    %v2709 = vld [vmem:[#allocation17 + $0x90] sm:$0xff]
    %v2710 = vld [vmem:[#allocation17 + $0x98] sm:$0xff]
    %v2711 = vld [vmem:[#allocation17 + $0xa0] sm:$0xff]
    %v2712 = vld [vmem:[#allocation17 + $0xa8] sm:$0xff]
    %v2713 = vld [vmem:[#allocation17 + $0xb0] sm:$0xff]
    %v2714 = vld [vmem:[#allocation17 + $0xb8] sm:$0xff]
    %v2715 = vld [vmem:[#allocation17 + $0xc0] sm:$0xff]
    %v2716 = vld [vmem:[#allocation17 + $0xc8] sm:$0xff]
    %v2717 = vld [vmem:[#allocation17 + $0xd0] sm:$0xff]
    %v2718 = vld [vmem:[#allocation17 + $0xd8] sm:$0xff]
    %v2719 = vld [vmem:[#allocation17 + $0xe0] sm:$0xff]
    %v2720 = vld [vmem:[#allocation17 + $0xe8] sm:$0xff]
    %v2721 = vld [vmem:[#allocation17 + $0xf0] sm:$0xff]
    %v2722 = vld [vmem:[#allocation17 + $0xf8] sm:$0xff]
    %v2723 = vld [vmem:[#allocation17 + $0x100] sm:$0xff]
    %v2724 = vld [vmem:[#allocation17 + $0x108] sm:$0xff]
    %v2725 = vld [vmem:[#allocation17 + $0x110] sm:$0xff]
    %v2726 = vld [vmem:[#allocation17 + $0x118] sm:$0xff]
    %v2727 = vld [vmem:[#allocation17 + $0x120] sm:$0xff]
    %v2728 = vld [vmem:[#allocation17 + $0x128] sm:$0xff]
    %v2729 = vld [vmem:[#allocation17 + $0x130] sm:$0xff]
    %v2730 = vld [vmem:[#allocation17 + $0x138] sm:$0xff]
    %v2731 = vld [vmem:[#allocation17 + $0x140] sm:$0xff]
    %v2732 = vld [vmem:[#allocation17 + $0x148] sm:$0xff]
    %v2733 = vld [vmem:[#allocation17 + $0x150] sm:$0xff]
    %v2734 = vld [vmem:[#allocation17 + $0x158] sm:$0xff]
    %v2735 = vld [vmem:[#allocation17 + $0x160] sm:$0xff]
    %v2736 = vld [vmem:[#allocation17 + $0x168] sm:$0xff]
    %v2737 = vld [vmem:[#allocation17 + $0x170] sm:$0xff]
    %v2738 = vld [vmem:[#allocation17 + $0x178] sm:$0xff]
    %v2739 = vld [vmem:[#allocation17 + $0x180] sm:$0xff]
    %v2740 = vld [vmem:[#allocation17 + $0x188] sm:$0xff]
    %v2741 = vld [vmem:[#allocation17 + $0x190] sm:$0xff]
    %v2742 = vld [vmem:[#allocation17 + $0x198] sm:$0xff]
    %v2743 = vld [vmem:[#allocation17 + $0x1a0] sm:$0xff]
    %v2744 = vld [vmem:[#allocation17 + $0x1a8] sm:$0xff]
    %v2745 = vld [vmem:[#allocation17 + $0x1b0] sm:$0xff]
    %v2746 = vld [vmem:[#allocation17 + $0x1b8] sm:$0xff]
    %v2747 = vld [vmem:[#allocation17 + $0x1c0] sm:$0xff]
    %v2748 = vld [vmem:[#allocation17 + $0x1c8] sm:$0xff]
    %v2749 = vld [vmem:[#allocation17 + $0x1d0] sm:$0xff]
    %v2750 = vld [vmem:[#allocation17 + $0x1d8] sm:$0xff]
    %v2751 = vld [vmem:[#allocation17 + $0x1e0] sm:$0xff]
    %v2752 = vld [vmem:[#allocation17 + $0x1e8] sm:$0xff]
    %v2753 = vld [vmem:[#allocation17 + $0x1f0] sm:$0xff]
    %v2754 = vld [vmem:[#allocation17 + $0x1f8] sm:$0xff]
    %v2755 = vpack.c.bf16 %v2687, %v2683
    %v2756 = vpack.c.bf16 %v2688, %v2684
    %v2757 = vpack.c.bf16 %v2689, %v2685
    %v2758 = vpack.c.bf16 %v2690, %v2686
    %v2823 = vunpack.c.l.b16 %v2691
    %v2824 = vunpack.c.h.b16 %v2691
    %v2825 = vunpack.c.l.b16 %v2692
    %v2826 = vunpack.c.h.b16 %v2692
    %v2827 = vunpack.c.l.b16 %v2693
    %v2828 = vunpack.c.h.b16 %v2693
    %v2829 = vunpack.c.l.b16 %v2694
    %v2830 = vunpack.c.h.b16 %v2694
    %v2831 = vunpack.c.l.b16 %v2695
    %v2832 = vunpack.c.h.b16 %v2695
    %v2833 = vunpack.c.l.b16 %v2696
    %v2834 = vunpack.c.h.b16 %v2696
    %v2835 = vunpack.c.l.b16 %v2697
    %v2836 = vunpack.c.h.b16 %v2697
    %v2837 = vunpack.c.l.b16 %v2698
    %v2838 = vunpack.c.h.b16 %v2698
    %v2839 = vunpack.c.l.b16 %v2699
    %v2840 = vunpack.c.h.b16 %v2699
    %v2841 = vunpack.c.l.b16 %v2700
    %v2842 = vunpack.c.h.b16 %v2700
    %v2843 = vunpack.c.l.b16 %v2701
    %v2844 = vunpack.c.h.b16 %v2701
    %v2845 = vunpack.c.l.b16 %v2702
    %v2846 = vunpack.c.h.b16 %v2702
    %v2847 = vunpack.c.l.b16 %v2703
    %v2848 = vunpack.c.h.b16 %v2703
    %v2849 = vunpack.c.l.b16 %v2704
    %v2850 = vunpack.c.h.b16 %v2704
    %v2851 = vunpack.c.l.b16 %v2705
    %v2852 = vunpack.c.h.b16 %v2705
    %v2853 = vunpack.c.l.b16 %v2706
    %v2854 = vunpack.c.h.b16 %v2706
    %v2855 = vunpack.c.l.b16 %v2707
    %v2856 = vunpack.c.h.b16 %v2707
    %v2857 = vunpack.c.l.b16 %v2708
    %v2858 = vunpack.c.h.b16 %v2708
    %v2859 = vunpack.c.l.b16 %v2709
    %v2860 = vunpack.c.h.b16 %v2709
    %v2861 = vunpack.c.l.b16 %v2710
    %v2862 = vunpack.c.h.b16 %v2710
    %v2863 = vunpack.c.l.b16 %v2711
    %v2864 = vunpack.c.h.b16 %v2711
    %v2865 = vunpack.c.l.b16 %v2712
    %v2866 = vunpack.c.h.b16 %v2712
    %v2867 = vunpack.c.l.b16 %v2713
    %v2868 = vunpack.c.h.b16 %v2713
    %v2869 = vunpack.c.l.b16 %v2714
    %v2870 = vunpack.c.h.b16 %v2714
    %v2871 = vunpack.c.l.b16 %v2715
    %v2872 = vunpack.c.h.b16 %v2715
    %v2873 = vunpack.c.l.b16 %v2716
    %v2874 = vunpack.c.h.b16 %v2716
    %v2875 = vunpack.c.l.b16 %v2717
    %v2876 = vunpack.c.h.b16 %v2717
    %v2877 = vunpack.c.l.b16 %v2718
    %v2878 = vunpack.c.h.b16 %v2718
    %v2879 = vunpack.c.l.b16 %v2719
    %v2880 = vunpack.c.h.b16 %v2719
    %v2881 = vunpack.c.l.b16 %v2720
    %v2882 = vunpack.c.h.b16 %v2720
    %v2883 = vunpack.c.l.b16 %v2721
    %v2884 = vunpack.c.h.b16 %v2721
    %v2885 = vunpack.c.l.b16 %v2722
    %v2886 = vunpack.c.h.b16 %v2722
    %v2887 = vunpack.c.l.b16 %v2723
    %v2888 = vunpack.c.h.b16 %v2723
    %v2889 = vunpack.c.l.b16 %v2724
    %v2890 = vunpack.c.h.b16 %v2724
    %v2891 = vunpack.c.l.b16 %v2725
    %v2892 = vunpack.c.h.b16 %v2725
    %v2893 = vunpack.c.l.b16 %v2726
    %v2894 = vunpack.c.h.b16 %v2726
    %v2895 = vunpack.c.l.b16 %v2727
    %v2896 = vunpack.c.h.b16 %v2727
    %v2897 = vunpack.c.l.b16 %v2728
    %v2898 = vunpack.c.h.b16 %v2728
    %v2899 = vunpack.c.l.b16 %v2729
    %v2900 = vunpack.c.h.b16 %v2729
    %v2901 = vunpack.c.l.b16 %v2730
    %v2902 = vunpack.c.h.b16 %v2730
    %v2903 = vunpack.c.l.b16 %v2731
    %v2904 = vunpack.c.h.b16 %v2731
    %v2905 = vunpack.c.l.b16 %v2732
    %v2906 = vunpack.c.h.b16 %v2732
    %v2907 = vunpack.c.l.b16 %v2733
    %v2908 = vunpack.c.h.b16 %v2733
    %v2909 = vunpack.c.l.b16 %v2734
    %v2910 = vunpack.c.h.b16 %v2734
    %v2911 = vunpack.c.l.b16 %v2735
    %v2912 = vunpack.c.h.b16 %v2735
    %v2913 = vunpack.c.l.b16 %v2736
    %v2914 = vunpack.c.h.b16 %v2736
    %v2915 = vunpack.c.l.b16 %v2737
    %v2916 = vunpack.c.h.b16 %v2737
    %v2917 = vunpack.c.l.b16 %v2738
    %v2918 = vunpack.c.h.b16 %v2738
    %v2919 = vunpack.c.l.b16 %v2739
    %v2920 = vunpack.c.h.b16 %v2739
    %v2921 = vunpack.c.l.b16 %v2740
    %v2922 = vunpack.c.h.b16 %v2740
    %v2923 = vunpack.c.l.b16 %v2741
    %v2924 = vunpack.c.h.b16 %v2741
    %v2925 = vunpack.c.l.b16 %v2742
    %v2926 = vunpack.c.h.b16 %v2742
    %v2927 = vunpack.c.l.b16 %v2743
    %v2928 = vunpack.c.h.b16 %v2743
    %v2929 = vunpack.c.l.b16 %v2744
    %v2930 = vunpack.c.h.b16 %v2744
    %v2931 = vunpack.c.l.b16 %v2745
    %v2932 = vunpack.c.h.b16 %v2745
    %v2933 = vunpack.c.l.b16 %v2746
    %v2934 = vunpack.c.h.b16 %v2746
    %v2935 = vunpack.c.l.b16 %v2747
    %v2936 = vunpack.c.h.b16 %v2747
    %v2937 = vunpack.c.l.b16 %v2748
    %v2938 = vunpack.c.h.b16 %v2748
    %v2939 = vunpack.c.l.b16 %v2749
    %v2940 = vunpack.c.h.b16 %v2749
    %v2941 = vunpack.c.l.b16 %v2750
    %v2942 = vunpack.c.h.b16 %v2750
    %v2943 = vunpack.c.l.b16 %v2751
    %v2944 = vunpack.c.h.b16 %v2751
    %v2945 = vunpack.c.l.b16 %v2752
    %v2946 = vunpack.c.h.b16 %v2752
    %v2947 = vunpack.c.l.b16 %v2753
    %v2948 = vunpack.c.h.b16 %v2753
    %v2949 = vunpack.c.l.b16 %v2754
    %v2950 = vunpack.c.h.b16 %v2754
    %v2951 = vpack.c.b16 %v2825, %v2823
    %v2952 = vpack.c.b16 %v2826, %v2824
    %v2953 = vpack.c.b16 %v2829, %v2827
    %v2954 = vpack.c.b16 %v2830, %v2828
    %v2955 = vpack.c.b16 %v2833, %v2831
    %v2956 = vpack.c.b16 %v2834, %v2832
    %v2957 = vpack.c.b16 %v2837, %v2835
    %v2958 = vpack.c.b16 %v2838, %v2836
    %v2959 = vpack.c.b16 %v2841, %v2839
    %v2960 = vpack.c.b16 %v2842, %v2840
    %v2961 = vpack.c.b16 %v2845, %v2843
    %v2962 = vpack.c.b16 %v2846, %v2844
    %v2963 = vpack.c.b16 %v2849, %v2847
    %v2964 = vpack.c.b16 %v2850, %v2848
    %v2965 = vpack.c.b16 %v2853, %v2851
    %v2966 = vpack.c.b16 %v2854, %v2852
    %v2967 = vpack.c.b16 %v2857, %v2855
    %v2968 = vpack.c.b16 %v2858, %v2856
    %v2969 = vpack.c.b16 %v2861, %v2859
    %v2970 = vpack.c.b16 %v2862, %v2860
    %v2971 = vpack.c.b16 %v2865, %v2863
    %v2972 = vpack.c.b16 %v2866, %v2864
    %v2973 = vpack.c.b16 %v2869, %v2867
    %v2974 = vpack.c.b16 %v2870, %v2868
    %v2975 = vpack.c.b16 %v2873, %v2871
    %v2976 = vpack.c.b16 %v2874, %v2872
    %v2977 = vpack.c.b16 %v2877, %v2875
    %v2978 = vpack.c.b16 %v2878, %v2876
    %v2979 = vpack.c.b16 %v2881, %v2879
    %v2980 = vpack.c.b16 %v2882, %v2880
    %v2981 = vpack.c.b16 %v2885, %v2883
    %v2982 = vpack.c.b16 %v2886, %v2884
    %v2983 = vpack.c.b16 %v2889, %v2887
    %v2984 = vpack.c.b16 %v2890, %v2888
    %v2985 = vpack.c.b16 %v2893, %v2891
    %v2986 = vpack.c.b16 %v2894, %v2892
    %v2987 = vpack.c.b16 %v2897, %v2895
    %v2988 = vpack.c.b16 %v2898, %v2896
    %v2989 = vpack.c.b16 %v2901, %v2899
    %v2990 = vpack.c.b16 %v2902, %v2900
    %v2991 = vpack.c.b16 %v2905, %v2903
    %v2992 = vpack.c.b16 %v2906, %v2904
    %v2993 = vpack.c.b16 %v2909, %v2907
    %v2994 = vpack.c.b16 %v2910, %v2908
    %v2995 = vpack.c.b16 %v2913, %v2911
    %v2996 = vpack.c.b16 %v2914, %v2912
    %v2997 = vpack.c.b16 %v2917, %v2915
    %v2998 = vpack.c.b16 %v2918, %v2916
    %v2999 = vpack.c.b16 %v2921, %v2919
    %v3000 = vpack.c.b16 %v2922, %v2920
    %v3001 = vpack.c.b16 %v2925, %v2923
    %v3002 = vpack.c.b16 %v2926, %v2924
    %v3003 = vpack.c.b16 %v2929, %v2927
    %v3004 = vpack.c.b16 %v2930, %v2928
    %v3005 = vpack.c.b16 %v2933, %v2931
    %v3006 = vpack.c.b16 %v2934, %v2932
    %v3007 = vpack.c.b16 %v2937, %v2935
    %v3008 = vpack.c.b16 %v2938, %v2936
    %v3009 = vpack.c.b16 %v2941, %v2939
    %v3010 = vpack.c.b16 %v2942, %v2940
    %v3011 = vpack.c.b16 %v2945, %v2943
    %v3012 = vpack.c.b16 %v2946, %v2944
    %v3013 = vpack.c.b16 %v2949, %v2947
    %v3014 = vpack.c.b16 %v2950, %v2948
    %3079 = vmatpush.bf16.msra.mxu0 %v2965
    %3080 = vmatpush.bf16.msra.mxu0 %v2963
    %3081 = vmatpush.bf16.msra.mxu0 %v2961
    %3082 = vmatpush.bf16.msra.mxu0 %v2959
    %3083 = vmatpush.bf16.msra.mxu0 %v2957
    %3084 = vmatpush.bf16.msra.mxu0 %v2955
    %3085 = vmatpush.bf16.msra.mxu0 %v2953
    %3086 = vmatpush.bf16.msra.mxu0 %v2951
    %3087 = vmatmul.bf16.gmra.mxu0 %v2755
    %v3088 = vpop.f32.mrf.mxu0
    %v3089 = vadd.f32 0.0, %v3088
    %v3090 = vpop.f32.mrf.mxu0
    %v3091 = vadd.f32 0.0, %v3090
    %3092 = vdwg.mxu0
    %3093 = vmatpush.bf16.msra.mxu0 %v2981
    %3094 = vmatpush.bf16.msra.mxu0 %v2979
    %3095 = vmatpush.bf16.msra.mxu0 %v2977
    %3096 = vmatpush.bf16.msra.mxu0 %v2975
    %3097 = vmatpush.bf16.msra.mxu0 %v2973
    %3098 = vmatpush.bf16.msra.mxu0 %v2971
    %3099 = vmatpush.bf16.msra.mxu0 %v2969
    %3100 = vmatpush.bf16.msra.mxu0 %v2967
    %3101 = vmatmul.bf16.gmra.mxu0 %v2756
    %v3102 = vpop.f32.mrf.mxu0
    %v3103 = vadd.f32 %v3089, %v3102
    %v3104 = vpop.f32.mrf.mxu0
    %v3105 = vadd.f32 %v3091, %v3104
    %3106 = vdwg.mxu0
    %3107 = vmatpush.bf16.msra.mxu0 %v2997
    %3108 = vmatpush.bf16.msra.mxu0 %v2995
    %3109 = vmatpush.bf16.msra.mxu0 %v2993
    %3110 = vmatpush.bf16.msra.mxu0 %v2991
    %3111 = vmatpush.bf16.msra.mxu0 %v2989
    %3112 = vmatpush.bf16.msra.mxu0 %v2987
    %3113 = vmatpush.bf16.msra.mxu0 %v2985
    %3114 = vmatpush.bf16.msra.mxu0 %v2983
    %3115 = vmatmul.bf16.gmra.mxu0 %v2757
    %v3116 = vpop.f32.mrf.mxu0
    %v3117 = vadd.f32 %v3103, %v3116
    %v3118 = vpop.f32.mrf.mxu0
    %v3119 = vadd.f32 %v3105, %v3118
    %3120 = vdwg.mxu0
    %3121 = vmatpush.bf16.msra.mxu0 %v3013
    %3122 = vmatpush.bf16.msra.mxu0 %v3011
    %3123 = vmatpush.bf16.msra.mxu0 %v3009
    %3124 = vmatpush.bf16.msra.mxu0 %v3007
    %3125 = vmatpush.bf16.msra.mxu0 %v3005
    %3126 = vmatpush.bf16.msra.mxu0 %v3003
    %3127 = vmatpush.bf16.msra.mxu0 %v3001
    %3128 = vmatpush.bf16.msra.mxu0 %v2999
    %3129 = vmatmul.bf16.gmra.mxu0 %v2758
    %v3130 = vpop.f32.mrf.mxu0
    %v3131 = vadd.f32 %v3117, %v3130
    %v3132 = vpop.f32.mrf.mxu0
    %v3133 = vadd.f32 %v3119, %v3132
    %3134 = vdwg.mxu0
    %3135 = vmatpush.bf16.msra.mxu0 %v2966
    %3136 = vmatpush.bf16.msra.mxu0 %v2964
    %3137 = vmatpush.bf16.msra.mxu0 %v2962
    %3138 = vmatpush.bf16.msra.mxu0 %v2960
    %3139 = vmatpush.bf16.msra.mxu0 %v2958
    %3140 = vmatpush.bf16.msra.mxu0 %v2956
    %3141 = vmatpush.bf16.msra.mxu0 %v2954
    %3142 = vmatpush.bf16.msra.mxu0 %v2952
    %3143 = vmatmul.bf16.gmra.mxu0 %v2755
    %v3144 = vpop.f32.mrf.mxu0
    %v3145 = vadd.f32 0.0, %v3144
    %v3146 = vpop.f32.mrf.mxu0
    %v3147 = vadd.f32 0.0, %v3146
    %3148 = vdwg.mxu0
    %3149 = vmatpush.bf16.msra.mxu0 %v2982
    %3150 = vmatpush.bf16.msra.mxu0 %v2980
    %3151 = vmatpush.bf16.msra.mxu0 %v2978
    %3152 = vmatpush.bf16.msra.mxu0 %v2976
    %3153 = vmatpush.bf16.msra.mxu0 %v2974
    %3154 = vmatpush.bf16.msra.mxu0 %v2972
    %3155 = vmatpush.bf16.msra.mxu0 %v2970
    %3156 = vmatpush.bf16.msra.mxu0 %v2968
    %3157 = vmatmul.bf16.gmra.mxu0 %v2756
    %v3158 = vpop.f32.mrf.mxu0
    %v3159 = vadd.f32 %v3145, %v3158
    %v3160 = vpop.f32.mrf.mxu0
    %v3161 = vadd.f32 %v3147, %v3160
    %3162 = vdwg.mxu0
    %3163 = vmatpush.bf16.msra.mxu0 %v2998
    %3164 = vmatpush.bf16.msra.mxu0 %v2996
    %3165 = vmatpush.bf16.msra.mxu0 %v2994
    %3166 = vmatpush.bf16.msra.mxu0 %v2992
    %3167 = vmatpush.bf16.msra.mxu0 %v2990
    %3168 = vmatpush.bf16.msra.mxu0 %v2988
    %3169 = vmatpush.bf16.msra.mxu0 %v2986
    %3170 = vmatpush.bf16.msra.mxu0 %v2984
    %3171 = vmatmul.bf16.gmra.mxu0 %v2757
    %v3172 = vpop.f32.mrf.mxu0
    %v3173 = vadd.f32 %v3159, %v3172
    %v3174 = vpop.f32.mrf.mxu0
    %v3175 = vadd.f32 %v3161, %v3174
    %3176 = vdwg.mxu0
    %3177 = vmatpush.bf16.msra.mxu0 %v3014
    %3178 = vmatpush.bf16.msra.mxu0 %v3012
    %3179 = vmatpush.bf16.msra.mxu0 %v3010
    %3180 = vmatpush.bf16.msra.mxu0 %v3008
    %3181 = vmatpush.bf16.msra.mxu0 %v3006
    %3182 = vmatpush.bf16.msra.mxu0 %v3004
    %3183 = vmatpush.bf16.msra.mxu0 %v3002
    %3184 = vmatpush.bf16.msra.mxu0 %v3000
    %3185 = vmatmul.bf16.gmra.mxu0 %v2758
    %v3186 = vpop.f32.mrf.mxu0
    %v3187 = vadd.f32 %v3173, %v3186
    %v3188 = vpop.f32.mrf.mxu0
    %v3189 = vadd.f32 %v3175, %v3188
    %3190 = vdwg.mxu0
    %v3191 = vadd.f32 %v1792, %v3131
    %v3192 = vadd.f32 %v1793, %v3187
    %v3193 = vadd.f32 %v1794, %v3133
    %v3194 = vadd.f32 %v1795, %v3189
    %v3196 = vperm.slane %v358, 0
    %v3197 = vperm.slane %v358, 1
    %v3200 = vadd.f32 %v3191, %v3196
    %v3201 = vadd.f32 %v3192, %v3197
    %v3202 = vadd.f32 %v3193, %v3196
    %v3203 = vadd.f32 %v3194, %v3197
    %s3204 = scalar_lea.vmem [#allocation11], 48
    %v3205 = vld [vmem:[%s3204] ss:$8 sm:$0x3]
    %s3206 = scalar_lea.vmem %s3204, 1 [#allocation11]
    %v3207 = vld [vmem:[%s3206] ss:$8 sm:$0x3]
    %s3208 = scalar_lea.vmem %s3204, 2 [#allocation11]
    %v3209 = vld [vmem:[%s3208] ss:$8 sm:$0x3]
    %s3210 = scalar_lea.vmem %s3204, 3 [#allocation11]
    %v3211 = vld [vmem:[%s3210] ss:$8 sm:$0x3]
    %s3212 = scalar_lea.vmem %s3204, 4 [#allocation11]
    %v3213 = vld [vmem:[%s3212] ss:$8 sm:$0xf]
    %v3214 = vld [vmem:[%s3212] ss:$8 sm:$0x30]
    %v3215 = vor.u32 %v3213, %v3214
    %s3216 = scalar_lea.vmem %s3204, 5 [#allocation11]
    %v3217 = vld [vmem:[%s3216] ss:$8 sm:$0x3]
    %s3218 = scalar_lea.vmem %s3204, 6 [#allocation11]
    %v3219 = vld [vmem:[%s3218] ss:$8 sm:$0xf]
    %s3220 = scalar_lea.vmem %s3204, 7 [#allocation11]
    %v3221 = vld [vmem:[%s3220] ss:$8 sm:$0x3]
    %v3222 = vadd.f32 %v3200, %v3201
    %3223 = vadd.xlane.f32.xlu0 %v3222
    %v3224 = vpop.xlane.xlu0 %3223
    %v3225 = vadd.f32 %v3202, %v3203
    %3226 = vadd.xlane.f32.xlu0 %v3225
    %v3227 = vpop.xlane.xlu0 %3226
    %v3228 = vmul.f32 %v3224, %v371
    %v3229 = vmul.f32 %v3227, %v371
    %v3230 = vsub.f32 %v3200, %v3228
    %v3231 = vsub.f32 %v3201, %v3228
    %v3232 = vsub.f32 %v3202, %v3229
    %v3233 = vsub.f32 %v3203, %v3229
    %v3234 = vmul.f32 %v3230, %v3230
    %v3235 = vmul.f32 %v3231, %v3231
    %v3236 = vmul.f32 %v3232, %v3232
    %v3237 = vmul.f32 %v3233, %v3233
    %v3238 = vadd.f32 %v3234, %v3235
    %3239 = vadd.xlane.f32.xlu0 %v3238
    %v3240 = vpop.xlane.xlu0 %3239
    %v3241 = vadd.f32 %v3236, %v3237
    %3242 = vadd.xlane.f32.xlu0 %v3241
    %v3243 = vpop.xlane.xlu0 %3242
    %v3244 = vmul.f32 %v3240, %v371
    %v3245 = vmul.f32 %v3243, %v371
    %v3246 = vadd.f32 %v3244, 1e-05
    %v3247 = vadd.f32 %v3245, 1e-05
    %v3248 = vrsqrt.pop %v3246
    %v3249 = vmul.f32 %v3248, %v3246
    %v3250 = vmul.f32 %v3249, %v3248
    %v3251 = vmul.f32 0.5, %v3250
    %v3252 = vsub.f32 1.5, %v3251
    %v3253 = vmul.f32 %v3248, %v3252
    %vm3254 = vweird.f32 %v3246
    %vm3255 = vweird.f32 %v3248
    %vm3256 = vmor %vm3254, %vm3255
    %v3257 = vsel %vm3256, %v3248, %v3253
    %v3258 = vrsqrt.pop %v3247
    %v3259 = vmul.f32 %v3258, %v3247
    %v3260 = vmul.f32 %v3259, %v3258
    %v3261 = vmul.f32 0.5, %v3260
    %v3262 = vsub.f32 1.5, %v3261
    %v3263 = vmul.f32 %v3258, %v3262
    %vm3264 = vweird.f32 %v3247
    %vm3265 = vweird.f32 %v3258
    %vm3266 = vmor %vm3264, %vm3265
    %v3267 = vsel %vm3266, %v3258, %v3263
    %v3268 = vmul.f32 %v3230, %v3257
    %v3269 = vmul.f32 %v3231, %v3257
    %v3270 = vmul.f32 %v3232, %v3267
    %v3271 = vmul.f32 %v3233, %v3267
    %v3273 = vperm.slane %v3205, 0
    %v3274 = vperm.slane %v3205, 1
    %v3277 = vmul.f32 %v3268, %v3273
    %v3278 = vmul.f32 %v3269, %v3274
    %v3279 = vmul.f32 %v3270, %v3273
    %v3280 = vmul.f32 %v3271, %v3274
    %v3282 = vperm.slane %v3207, 0
    %v3283 = vperm.slane %v3207, 1
    %v3286 = vadd.f32 %v3277, %v3282
    %v3287 = vadd.f32 %v3278, %v3283
    %v3288 = vadd.f32 %v3279, %v3282
    %v3289 = vadd.f32 %v3280, %v3283
    %s3290 = scalar_lea.vmem [#allocation13], 768
    %v3291 = vld [vmem:[%s3290] sm:$0xff]
    %v3292 = vld [vmem:[%s3290 + $0x8] sm:$0xff]
    %v3293 = vld [vmem:[%s3290 + $0x10] sm:$0xff]
    %v3294 = vld [vmem:[%s3290 + $0x18] sm:$0xff]
    %v3295 = vld [vmem:[%s3290 + $0x20] sm:$0xff]
    %v3296 = vld [vmem:[%s3290 + $0x28] sm:$0xff]
    %v3297 = vld [vmem:[%s3290 + $0x30] sm:$0xff]
    %v3298 = vld [vmem:[%s3290 + $0x38] sm:$0xff]
    %v3299 = vld [vmem:[%s3290 + $0x40] sm:$0xff]
    %v3300 = vld [vmem:[%s3290 + $0x48] sm:$0xff]
    %v3301 = vld [vmem:[%s3290 + $0x50] sm:$0xff]
    %v3302 = vld [vmem:[%s3290 + $0x58] sm:$0xff]
    %v3303 = vld [vmem:[%s3290 + $0x60] sm:$0xff]
    %v3304 = vld [vmem:[%s3290 + $0x68] sm:$0xff]
    %v3305 = vld [vmem:[%s3290 + $0x70] sm:$0xff]
    %v3306 = vld [vmem:[%s3290 + $0x78] sm:$0xff]
    %v3307 = vld [vmem:[%s3290 + $0x80] sm:$0xff]
    %v3308 = vld [vmem:[%s3290 + $0x88] sm:$0xff]
    %v3309 = vld [vmem:[%s3290 + $0x90] sm:$0xff]
    %v3310 = vld [vmem:[%s3290 + $0x98] sm:$0xff]
    %v3311 = vld [vmem:[%s3290 + $0xa0] sm:$0xff]
    %v3312 = vld [vmem:[%s3290 + $0xa8] sm:$0xff]
    %v3313 = vld [vmem:[%s3290 + $0xb0] sm:$0xff]
    %v3314 = vld [vmem:[%s3290 + $0xb8] sm:$0xff]
    %v3315 = vld [vmem:[%s3290 + $0xc0] sm:$0xff]
    %v3316 = vld [vmem:[%s3290 + $0xc8] sm:$0xff]
    %v3317 = vld [vmem:[%s3290 + $0xd0] sm:$0xff]
    %v3318 = vld [vmem:[%s3290 + $0xd8] sm:$0xff]
    %v3319 = vld [vmem:[%s3290 + $0xe0] sm:$0xff]
    %v3320 = vld [vmem:[%s3290 + $0xe8] sm:$0xff]
    %v3321 = vld [vmem:[%s3290 + $0xf0] sm:$0xff]
    %v3322 = vld [vmem:[%s3290 + $0xf8] sm:$0xff]
    %v3323 = vld [vmem:[%s3290 + $0x100] sm:$0xff]
    %v3324 = vld [vmem:[%s3290 + $0x108] sm:$0xff]
    %v3325 = vld [vmem:[%s3290 + $0x110] sm:$0xff]
    %v3326 = vld [vmem:[%s3290 + $0x118] sm:$0xff]
    %v3327 = vld [vmem:[%s3290 + $0x120] sm:$0xff]
    %v3328 = vld [vmem:[%s3290 + $0x128] sm:$0xff]
    %v3329 = vld [vmem:[%s3290 + $0x130] sm:$0xff]
    %v3330 = vld [vmem:[%s3290 + $0x138] sm:$0xff]
    %v3331 = vld [vmem:[%s3290 + $0x140] sm:$0xff]
    %v3332 = vld [vmem:[%s3290 + $0x148] sm:$0xff]
    %v3333 = vld [vmem:[%s3290 + $0x150] sm:$0xff]
    %v3334 = vld [vmem:[%s3290 + $0x158] sm:$0xff]
    %v3335 = vld [vmem:[%s3290 + $0x160] sm:$0xff]
    %v3336 = vld [vmem:[%s3290 + $0x168] sm:$0xff]
    %v3337 = vld [vmem:[%s3290 + $0x170] sm:$0xff]
    %v3338 = vld [vmem:[%s3290 + $0x178] sm:$0xff]
    %v3339 = vld [vmem:[%s3290 + $0x180] sm:$0xff]
    %v3340 = vld [vmem:[%s3290 + $0x188] sm:$0xff]
    %v3341 = vld [vmem:[%s3290 + $0x190] sm:$0xff]
    %v3342 = vld [vmem:[%s3290 + $0x198] sm:$0xff]
    %v3343 = vld [vmem:[%s3290 + $0x1a0] sm:$0xff]
    %v3344 = vld [vmem:[%s3290 + $0x1a8] sm:$0xff]
    %v3345 = vld [vmem:[%s3290 + $0x1b0] sm:$0xff]
    %v3346 = vld [vmem:[%s3290 + $0x1b8] sm:$0xff]
    %v3347 = vld [vmem:[%s3290 + $0x1c0] sm:$0xff]
    %v3348 = vld [vmem:[%s3290 + $0x1c8] sm:$0xff]
    %v3349 = vld [vmem:[%s3290 + $0x1d0] sm:$0xff]
    %v3350 = vld [vmem:[%s3290 + $0x1d8] sm:$0xff]
    %v3351 = vld [vmem:[%s3290 + $0x1e0] sm:$0xff]
    %v3352 = vld [vmem:[%s3290 + $0x1e8] sm:$0xff]
    %v3353 = vld [vmem:[%s3290 + $0x1f0] sm:$0xff]
    %v3354 = vld [vmem:[%s3290 + $0x1f8] sm:$0xff]
    %v3355 = vld [vmem:[%s3290 + $0x200] sm:$0xff]
    %v3356 = vld [vmem:[%s3290 + $0x208] sm:$0xff]
    %v3357 = vld [vmem:[%s3290 + $0x210] sm:$0xff]
    %v3358 = vld [vmem:[%s3290 + $0x218] sm:$0xff]
    %v3359 = vld [vmem:[%s3290 + $0x220] sm:$0xff]
    %v3360 = vld [vmem:[%s3290 + $0x228] sm:$0xff]
    %v3361 = vld [vmem:[%s3290 + $0x230] sm:$0xff]
    %v3362 = vld [vmem:[%s3290 + $0x238] sm:$0xff]
    %v3363 = vld [vmem:[%s3290 + $0x240] sm:$0xff]
    %v3364 = vld [vmem:[%s3290 + $0x248] sm:$0xff]
    %v3365 = vld [vmem:[%s3290 + $0x250] sm:$0xff]
    %v3366 = vld [vmem:[%s3290 + $0x258] sm:$0xff]
    %v3367 = vld [vmem:[%s3290 + $0x260] sm:$0xff]
    %v3368 = vld [vmem:[%s3290 + $0x268] sm:$0xff]
    %v3369 = vld [vmem:[%s3290 + $0x270] sm:$0xff]
    %v3370 = vld [vmem:[%s3290 + $0x278] sm:$0xff]
    %v3371 = vld [vmem:[%s3290 + $0x280] sm:$0xff]
    %v3372 = vld [vmem:[%s3290 + $0x288] sm:$0xff]
    %v3373 = vld [vmem:[%s3290 + $0x290] sm:$0xff]
    %v3374 = vld [vmem:[%s3290 + $0x298] sm:$0xff]
    %v3375 = vld [vmem:[%s3290 + $0x2a0] sm:$0xff]
    %v3376 = vld [vmem:[%s3290 + $0x2a8] sm:$0xff]
    %v3377 = vld [vmem:[%s3290 + $0x2b0] sm:$0xff]
    %v3378 = vld [vmem:[%s3290 + $0x2b8] sm:$0xff]
    %v3379 = vld [vmem:[%s3290 + $0x2c0] sm:$0xff]
    %v3380 = vld [vmem:[%s3290 + $0x2c8] sm:$0xff]
    %v3381 = vld [vmem:[%s3290 + $0x2d0] sm:$0xff]
    %v3382 = vld [vmem:[%s3290 + $0x2d8] sm:$0xff]
    %v3383 = vld [vmem:[%s3290 + $0x2e0] sm:$0xff]
    %v3384 = vld [vmem:[%s3290 + $0x2e8] sm:$0xff]
    %v3385 = vld [vmem:[%s3290 + $0x2f0] sm:$0xff]
    %v3386 = vld [vmem:[%s3290 + $0x2f8] sm:$0xff]
    %v3387 = vpack.c.bf16 %v3288, %v3286
    %v3388 = vpack.c.bf16 %v3289, %v3287
    %v3390 = vperm.slane %v3215, 0
    %v3391 = vperm.slane %v3215, 1
    %v3392 = vperm.slane %v3215, 2
    %v3393 = vperm.slane %v3215, 3
    %v3394 = vperm.slane %v3215, 4
    %v3395 = vperm.slane %v3215, 5
    %v3498 = vunpack.c.l.b16 %v3291
    %v3499 = vunpack.c.h.b16 %v3291
    %v3500 = vunpack.c.l.b16 %v3292
    %v3501 = vunpack.c.h.b16 %v3292
    %v3502 = vunpack.c.l.b16 %v3293
    %v3503 = vunpack.c.h.b16 %v3293
    %v3504 = vunpack.c.l.b16 %v3294
    %v3505 = vunpack.c.h.b16 %v3294
    %v3506 = vunpack.c.l.b16 %v3295
    %v3507 = vunpack.c.h.b16 %v3295
    %v3508 = vunpack.c.l.b16 %v3296
    %v3509 = vunpack.c.h.b16 %v3296
    %v3510 = vunpack.c.l.b16 %v3297
    %v3511 = vunpack.c.h.b16 %v3297
    %v3512 = vunpack.c.l.b16 %v3298
    %v3513 = vunpack.c.h.b16 %v3298
    %v3514 = vunpack.c.l.b16 %v3299
    %v3515 = vunpack.c.h.b16 %v3299
    %v3516 = vunpack.c.l.b16 %v3300
    %v3517 = vunpack.c.h.b16 %v3300
    %v3518 = vunpack.c.l.b16 %v3301
    %v3519 = vunpack.c.h.b16 %v3301
    %v3520 = vunpack.c.l.b16 %v3302
    %v3521 = vunpack.c.h.b16 %v3302
    %v3522 = vunpack.c.l.b16 %v3303
    %v3523 = vunpack.c.h.b16 %v3303
    %v3524 = vunpack.c.l.b16 %v3304
    %v3525 = vunpack.c.h.b16 %v3304
    %v3526 = vunpack.c.l.b16 %v3305
    %v3527 = vunpack.c.h.b16 %v3305
    %v3528 = vunpack.c.l.b16 %v3306
    %v3529 = vunpack.c.h.b16 %v3306
    %v3530 = vunpack.c.l.b16 %v3307
    %v3531 = vunpack.c.h.b16 %v3307
    %v3532 = vunpack.c.l.b16 %v3308
    %v3533 = vunpack.c.h.b16 %v3308
    %v3534 = vunpack.c.l.b16 %v3309
    %v3535 = vunpack.c.h.b16 %v3309
    %v3536 = vunpack.c.l.b16 %v3310
    %v3537 = vunpack.c.h.b16 %v3310
    %v3538 = vunpack.c.l.b16 %v3311
    %v3539 = vunpack.c.h.b16 %v3311
    %v3540 = vunpack.c.l.b16 %v3312
    %v3541 = vunpack.c.h.b16 %v3312
    %v3542 = vunpack.c.l.b16 %v3313
    %v3543 = vunpack.c.h.b16 %v3313
    %v3544 = vunpack.c.l.b16 %v3314
    %v3545 = vunpack.c.h.b16 %v3314
    %v3546 = vunpack.c.l.b16 %v3315
    %v3547 = vunpack.c.h.b16 %v3315
    %v3548 = vunpack.c.l.b16 %v3316
    %v3549 = vunpack.c.h.b16 %v3316
    %v3550 = vunpack.c.l.b16 %v3317
    %v3551 = vunpack.c.h.b16 %v3317
    %v3552 = vunpack.c.l.b16 %v3318
    %v3553 = vunpack.c.h.b16 %v3318
    %v3554 = vunpack.c.l.b16 %v3319
    %v3555 = vunpack.c.h.b16 %v3319
    %v3556 = vunpack.c.l.b16 %v3320
    %v3557 = vunpack.c.h.b16 %v3320
    %v3558 = vunpack.c.l.b16 %v3321
    %v3559 = vunpack.c.h.b16 %v3321
    %v3560 = vunpack.c.l.b16 %v3322
    %v3561 = vunpack.c.h.b16 %v3322
    %v3562 = vunpack.c.l.b16 %v3323
    %v3563 = vunpack.c.h.b16 %v3323
    %v3564 = vunpack.c.l.b16 %v3324
    %v3565 = vunpack.c.h.b16 %v3324
    %v3566 = vunpack.c.l.b16 %v3325
    %v3567 = vunpack.c.h.b16 %v3325
    %v3568 = vunpack.c.l.b16 %v3326
    %v3569 = vunpack.c.h.b16 %v3326
    %v3570 = vunpack.c.l.b16 %v3327
    %v3571 = vunpack.c.h.b16 %v3327
    %v3572 = vunpack.c.l.b16 %v3328
    %v3573 = vunpack.c.h.b16 %v3328
    %v3574 = vunpack.c.l.b16 %v3329
    %v3575 = vunpack.c.h.b16 %v3329
    %v3576 = vunpack.c.l.b16 %v3330
    %v3577 = vunpack.c.h.b16 %v3330
    %v3578 = vunpack.c.l.b16 %v3331
    %v3579 = vunpack.c.h.b16 %v3331
    %v3580 = vunpack.c.l.b16 %v3332
    %v3581 = vunpack.c.h.b16 %v3332
    %v3582 = vunpack.c.l.b16 %v3333
    %v3583 = vunpack.c.h.b16 %v3333
    %v3584 = vunpack.c.l.b16 %v3334
    %v3585 = vunpack.c.h.b16 %v3334
    %v3586 = vunpack.c.l.b16 %v3335
    %v3587 = vunpack.c.h.b16 %v3335
    %v3588 = vunpack.c.l.b16 %v3336
    %v3589 = vunpack.c.h.b16 %v3336
    %v3590 = vunpack.c.l.b16 %v3337
    %v3591 = vunpack.c.h.b16 %v3337
    %v3592 = vunpack.c.l.b16 %v3338
    %v3593 = vunpack.c.h.b16 %v3338
    %v3594 = vunpack.c.l.b16 %v3339
    %v3595 = vunpack.c.h.b16 %v3339
    %v3596 = vunpack.c.l.b16 %v3340
    %v3597 = vunpack.c.h.b16 %v3340
    %v3598 = vunpack.c.l.b16 %v3341
    %v3599 = vunpack.c.h.b16 %v3341
    %v3600 = vunpack.c.l.b16 %v3342
    %v3601 = vunpack.c.h.b16 %v3342
    %v3602 = vunpack.c.l.b16 %v3343
    %v3603 = vunpack.c.h.b16 %v3343
    %v3604 = vunpack.c.l.b16 %v3344
    %v3605 = vunpack.c.h.b16 %v3344
    %v3606 = vunpack.c.l.b16 %v3345
    %v3607 = vunpack.c.h.b16 %v3345
    %v3608 = vunpack.c.l.b16 %v3346
    %v3609 = vunpack.c.h.b16 %v3346
    %v3610 = vunpack.c.l.b16 %v3347
    %v3611 = vunpack.c.h.b16 %v3347
    %v3612 = vunpack.c.l.b16 %v3348
    %v3613 = vunpack.c.h.b16 %v3348
    %v3614 = vunpack.c.l.b16 %v3349
    %v3615 = vunpack.c.h.b16 %v3349
    %v3616 = vunpack.c.l.b16 %v3350
    %v3617 = vunpack.c.h.b16 %v3350
    %v3618 = vunpack.c.l.b16 %v3351
    %v3619 = vunpack.c.h.b16 %v3351
    %v3620 = vunpack.c.l.b16 %v3352
    %v3621 = vunpack.c.h.b16 %v3352
    %v3622 = vunpack.c.l.b16 %v3353
    %v3623 = vunpack.c.h.b16 %v3353
    %v3624 = vunpack.c.l.b16 %v3354
    %v3625 = vunpack.c.h.b16 %v3354
    %v3626 = vunpack.c.l.b16 %v3355
    %v3627 = vunpack.c.h.b16 %v3355
    %v3628 = vunpack.c.l.b16 %v3356
    %v3629 = vunpack.c.h.b16 %v3356
    %v3630 = vunpack.c.l.b16 %v3357
    %v3631 = vunpack.c.h.b16 %v3357
    %v3632 = vunpack.c.l.b16 %v3358
    %v3633 = vunpack.c.h.b16 %v3358
    %v3634 = vunpack.c.l.b16 %v3359
    %v3635 = vunpack.c.h.b16 %v3359
    %v3636 = vunpack.c.l.b16 %v3360
    %v3637 = vunpack.c.h.b16 %v3360
    %v3638 = vunpack.c.l.b16 %v3361
    %v3639 = vunpack.c.h.b16 %v3361
    %v3640 = vunpack.c.l.b16 %v3362
    %v3641 = vunpack.c.h.b16 %v3362
    %v3642 = vunpack.c.l.b16 %v3363
    %v3643 = vunpack.c.h.b16 %v3363
    %v3644 = vunpack.c.l.b16 %v3364
    %v3645 = vunpack.c.h.b16 %v3364
    %v3646 = vunpack.c.l.b16 %v3365
    %v3647 = vunpack.c.h.b16 %v3365
    %v3648 = vunpack.c.l.b16 %v3366
    %v3649 = vunpack.c.h.b16 %v3366
    %v3650 = vunpack.c.l.b16 %v3367
    %v3651 = vunpack.c.h.b16 %v3367
    %v3652 = vunpack.c.l.b16 %v3368
    %v3653 = vunpack.c.h.b16 %v3368
    %v3654 = vunpack.c.l.b16 %v3369
    %v3655 = vunpack.c.h.b16 %v3369
    %v3656 = vunpack.c.l.b16 %v3370
    %v3657 = vunpack.c.h.b16 %v3370
    %v3658 = vunpack.c.l.b16 %v3371
    %v3659 = vunpack.c.h.b16 %v3371
    %v3660 = vunpack.c.l.b16 %v3372
    %v3661 = vunpack.c.h.b16 %v3372
    %v3662 = vunpack.c.l.b16 %v3373
    %v3663 = vunpack.c.h.b16 %v3373
    %v3664 = vunpack.c.l.b16 %v3374
    %v3665 = vunpack.c.h.b16 %v3374
    %v3666 = vunpack.c.l.b16 %v3375
    %v3667 = vunpack.c.h.b16 %v3375
    %v3668 = vunpack.c.l.b16 %v3376
    %v3669 = vunpack.c.h.b16 %v3376
    %v3670 = vunpack.c.l.b16 %v3377
    %v3671 = vunpack.c.h.b16 %v3377
    %v3672 = vunpack.c.l.b16 %v3378
    %v3673 = vunpack.c.h.b16 %v3378
    %v3674 = vunpack.c.l.b16 %v3379
    %v3675 = vunpack.c.h.b16 %v3379
    %v3676 = vunpack.c.l.b16 %v3380
    %v3677 = vunpack.c.h.b16 %v3380
    %v3678 = vunpack.c.l.b16 %v3381
    %v3679 = vunpack.c.h.b16 %v3381
    %v3680 = vunpack.c.l.b16 %v3382
    %v3681 = vunpack.c.h.b16 %v3382
    %v3682 = vunpack.c.l.b16 %v3383
    %v3683 = vunpack.c.h.b16 %v3383
    %v3684 = vunpack.c.l.b16 %v3384
    %v3685 = vunpack.c.h.b16 %v3384
    %v3686 = vunpack.c.l.b16 %v3385
    %v3687 = vunpack.c.h.b16 %v3385
    %v3688 = vunpack.c.l.b16 %v3386
    %v3689 = vunpack.c.h.b16 %v3386
    %v3690 = vpack.c.b16 %v3504, %v3498
    %v3691 = vpack.c.b16 %v3505, %v3499
    %v3692 = vpack.c.b16 %v3506, %v3500
    %v3693 = vpack.c.b16 %v3507, %v3501
    %v3694 = vpack.c.b16 %v3508, %v3502
    %v3695 = vpack.c.b16 %v3509, %v3503
    %v3696 = vpack.c.b16 %v3516, %v3510
    %v3697 = vpack.c.b16 %v3517, %v3511
    %v3698 = vpack.c.b16 %v3518, %v3512
    %v3699 = vpack.c.b16 %v3519, %v3513
    %v3700 = vpack.c.b16 %v3520, %v3514
    %v3701 = vpack.c.b16 %v3521, %v3515
    %v3702 = vpack.c.b16 %v3528, %v3522
    %v3703 = vpack.c.b16 %v3529, %v3523
    %v3704 = vpack.c.b16 %v3530, %v3524
    %v3705 = vpack.c.b16 %v3531, %v3525
    %v3706 = vpack.c.b16 %v3532, %v3526
    %v3707 = vpack.c.b16 %v3533, %v3527
    %v3708 = vpack.c.b16 %v3540, %v3534
    %v3709 = vpack.c.b16 %v3541, %v3535
    %v3710 = vpack.c.b16 %v3542, %v3536
    %v3711 = vpack.c.b16 %v3543, %v3537
    %v3712 = vpack.c.b16 %v3544, %v3538
    %v3713 = vpack.c.b16 %v3545, %v3539
    %v3714 = vpack.c.b16 %v3552, %v3546
    %v3715 = vpack.c.b16 %v3553, %v3547
    %v3716 = vpack.c.b16 %v3554, %v3548
    %v3717 = vpack.c.b16 %v3555, %v3549
    %v3718 = vpack.c.b16 %v3556, %v3550
    %v3719 = vpack.c.b16 %v3557, %v3551
    %v3720 = vpack.c.b16 %v3564, %v3558
    %v3721 = vpack.c.b16 %v3565, %v3559
    %v3722 = vpack.c.b16 %v3566, %v3560
    %v3723 = vpack.c.b16 %v3567, %v3561
    %v3724 = vpack.c.b16 %v3568, %v3562
    %v3725 = vpack.c.b16 %v3569, %v3563
    %v3726 = vpack.c.b16 %v3576, %v3570
    %v3727 = vpack.c.b16 %v3577, %v3571
    %v3728 = vpack.c.b16 %v3578, %v3572
    %v3729 = vpack.c.b16 %v3579, %v3573
    %v3730 = vpack.c.b16 %v3580, %v3574
    %v3731 = vpack.c.b16 %v3581, %v3575
    %v3732 = vpack.c.b16 %v3588, %v3582
    %v3733 = vpack.c.b16 %v3589, %v3583
    %v3734 = vpack.c.b16 %v3590, %v3584
    %v3735 = vpack.c.b16 %v3591, %v3585
    %v3736 = vpack.c.b16 %v3592, %v3586
    %v3737 = vpack.c.b16 %v3593, %v3587
    %v3738 = vpack.c.b16 %v3600, %v3594
    %v3739 = vpack.c.b16 %v3601, %v3595
    %v3740 = vpack.c.b16 %v3602, %v3596
    %v3741 = vpack.c.b16 %v3603, %v3597
    %v3742 = vpack.c.b16 %v3604, %v3598
    %v3743 = vpack.c.b16 %v3605, %v3599
    %v3744 = vpack.c.b16 %v3612, %v3606
    %v3745 = vpack.c.b16 %v3613, %v3607
    %v3746 = vpack.c.b16 %v3614, %v3608
    %v3747 = vpack.c.b16 %v3615, %v3609
    %v3748 = vpack.c.b16 %v3616, %v3610
    %v3749 = vpack.c.b16 %v3617, %v3611
    %v3750 = vpack.c.b16 %v3624, %v3618
    %v3751 = vpack.c.b16 %v3625, %v3619
    %v3752 = vpack.c.b16 %v3626, %v3620
    %v3753 = vpack.c.b16 %v3627, %v3621
    %v3754 = vpack.c.b16 %v3628, %v3622
    %v3755 = vpack.c.b16 %v3629, %v3623
    %v3756 = vpack.c.b16 %v3636, %v3630
    %v3757 = vpack.c.b16 %v3637, %v3631
    %v3758 = vpack.c.b16 %v3638, %v3632
    %v3759 = vpack.c.b16 %v3639, %v3633
    %v3760 = vpack.c.b16 %v3640, %v3634
    %v3761 = vpack.c.b16 %v3641, %v3635
    %v3762 = vpack.c.b16 %v3648, %v3642
    %v3763 = vpack.c.b16 %v3649, %v3643
    %v3764 = vpack.c.b16 %v3650, %v3644
    %v3765 = vpack.c.b16 %v3651, %v3645
    %v3766 = vpack.c.b16 %v3652, %v3646
    %v3767 = vpack.c.b16 %v3653, %v3647
    %v3768 = vpack.c.b16 %v3660, %v3654
    %v3769 = vpack.c.b16 %v3661, %v3655
    %v3770 = vpack.c.b16 %v3662, %v3656
    %v3771 = vpack.c.b16 %v3663, %v3657
    %v3772 = vpack.c.b16 %v3664, %v3658
    %v3773 = vpack.c.b16 %v3665, %v3659
    %v3774 = vpack.c.b16 %v3672, %v3666
    %v3775 = vpack.c.b16 %v3673, %v3667
    %v3776 = vpack.c.b16 %v3674, %v3668
    %v3777 = vpack.c.b16 %v3675, %v3669
    %v3778 = vpack.c.b16 %v3676, %v3670
    %v3779 = vpack.c.b16 %v3677, %v3671
    %v3780 = vpack.c.b16 %v3684, %v3678
    %v3781 = vpack.c.b16 %v3685, %v3679
    %v3782 = vpack.c.b16 %v3686, %v3680
    %v3783 = vpack.c.b16 %v3687, %v3681
    %v3784 = vpack.c.b16 %v3688, %v3682
    %v3785 = vpack.c.b16 %v3689, %v3683
    %3882 = vmatpush.bf16.msra.mxu0 %v3732
    %3883 = vmatpush.bf16.msra.mxu0 %v3726
    %3884 = vmatpush.bf16.msra.mxu0 %v3720
    %3885 = vmatpush.bf16.msra.mxu0 %v3714
    %3886 = vmatpush.bf16.msra.mxu0 %v3708
    %3887 = vmatpush.bf16.msra.mxu0 %v3702
    %3888 = vmatpush.bf16.msra.mxu0 %v3696
    %3889 = vmatpush.bf16.msra.mxu0 %v3690
    %3890 = vmatmul.bf16.gmra.mxu0 %v3387
    %v3891 = vpop.f32.mrf.mxu0
    %v3892 = vadd.f32 %v3390, %v3891
    %v3893 = vpop.f32.mrf.mxu0
    %v3894 = vadd.f32 %v3390, %v3893
    %3895 = vdwg.mxu0
    %3896 = vmatpush.bf16.msra.mxu0 %v3780
    %3897 = vmatpush.bf16.msra.mxu0 %v3774
    %3898 = vmatpush.bf16.msra.mxu0 %v3768
    %3899 = vmatpush.bf16.msra.mxu0 %v3762
    %3900 = vmatpush.bf16.msra.mxu0 %v3756
    %3901 = vmatpush.bf16.msra.mxu0 %v3750
    %3902 = vmatpush.bf16.msra.mxu0 %v3744
    %3903 = vmatpush.bf16.msra.mxu0 %v3738
    %3904 = vmatmul.bf16.gmra.mxu0 %v3388
    %v3905 = vpop.f32.mrf.mxu0
    %v3906 = vadd.f32 %v3892, %v3905
    %v3907 = vpop.f32.mrf.mxu0
    %v3908 = vadd.f32 %v3894, %v3907
    %3909 = vdwg.mxu0
    %3910 = vmatpush.bf16.msra.mxu0 %v3733
    %3911 = vmatpush.bf16.msra.mxu0 %v3727
    %3912 = vmatpush.bf16.msra.mxu0 %v3721
    %3913 = vmatpush.bf16.msra.mxu0 %v3715
    %3914 = vmatpush.bf16.msra.mxu0 %v3709
    %3915 = vmatpush.bf16.msra.mxu0 %v3703
    %3916 = vmatpush.bf16.msra.mxu0 %v3697
    %3917 = vmatpush.bf16.msra.mxu0 %v3691
    %3918 = vmatmul.bf16.gmra.mxu0 %v3387
    %v3919 = vpop.f32.mrf.mxu0
    %v3920 = vadd.f32 %v3391, %v3919
    %v3921 = vpop.f32.mrf.mxu0
    %v3922 = vadd.f32 %v3391, %v3921
    %3923 = vdwg.mxu0
    %3924 = vmatpush.bf16.msra.mxu0 %v3781
    %3925 = vmatpush.bf16.msra.mxu0 %v3775
    %3926 = vmatpush.bf16.msra.mxu0 %v3769
    %3927 = vmatpush.bf16.msra.mxu0 %v3763
    %3928 = vmatpush.bf16.msra.mxu0 %v3757
    %3929 = vmatpush.bf16.msra.mxu0 %v3751
    %3930 = vmatpush.bf16.msra.mxu0 %v3745
    %3931 = vmatpush.bf16.msra.mxu0 %v3739
    %3932 = vmatmul.bf16.gmra.mxu0 %v3388
    %v3933 = vpop.f32.mrf.mxu0
    %v3934 = vadd.f32 %v3920, %v3933
    %v3935 = vpop.f32.mrf.mxu0
    %v3936 = vadd.f32 %v3922, %v3935
    %3937 = vdwg.mxu0
    %3938 = vmatpush.bf16.msra.mxu0 %v3734
    %3939 = vmatpush.bf16.msra.mxu0 %v3728
    %3940 = vmatpush.bf16.msra.mxu0 %v3722
    %3941 = vmatpush.bf16.msra.mxu0 %v3716
    %3942 = vmatpush.bf16.msra.mxu0 %v3710
    %3943 = vmatpush.bf16.msra.mxu0 %v3704
    %3944 = vmatpush.bf16.msra.mxu0 %v3698
    %3945 = vmatpush.bf16.msra.mxu0 %v3692
    %3946 = vmatmul.bf16.gmra.mxu0 %v3387
    %v3947 = vpop.f32.mrf.mxu0
    %v3948 = vadd.f32 %v3392, %v3947
    %v3949 = vpop.f32.mrf.mxu0
    %v3950 = vadd.f32 %v3392, %v3949
    %3951 = vdwg.mxu0
    %3952 = vmatpush.bf16.msra.mxu0 %v3782
    %3953 = vmatpush.bf16.msra.mxu0 %v3776
    %3954 = vmatpush.bf16.msra.mxu0 %v3770
    %3955 = vmatpush.bf16.msra.mxu0 %v3764
    %3956 = vmatpush.bf16.msra.mxu0 %v3758
    %3957 = vmatpush.bf16.msra.mxu0 %v3752
    %3958 = vmatpush.bf16.msra.mxu0 %v3746
    %3959 = vmatpush.bf16.msra.mxu0 %v3740
    %3960 = vmatmul.bf16.gmra.mxu0 %v3388
    %v3961 = vpop.f32.mrf.mxu0
    %v3962 = vadd.f32 %v3948, %v3961
    %v3963 = vpop.f32.mrf.mxu0
    %v3964 = vadd.f32 %v3950, %v3963
    %3965 = vdwg.mxu0
    %3966 = vmatpush.bf16.msra.mxu0 %v3735
    %3967 = vmatpush.bf16.msra.mxu0 %v3729
    %3968 = vmatpush.bf16.msra.mxu0 %v3723
    %3969 = vmatpush.bf16.msra.mxu0 %v3717
    %3970 = vmatpush.bf16.msra.mxu0 %v3711
    %3971 = vmatpush.bf16.msra.mxu0 %v3705
    %3972 = vmatpush.bf16.msra.mxu0 %v3699
    %3973 = vmatpush.bf16.msra.mxu0 %v3693
    %3974 = vmatmul.bf16.gmra.mxu0 %v3387
    %v3975 = vpop.f32.mrf.mxu0
    %v3976 = vadd.f32 %v3393, %v3975
    %v3977 = vpop.f32.mrf.mxu0
    %v3978 = vadd.f32 %v3393, %v3977
    %3979 = vdwg.mxu0
    %3980 = vmatpush.bf16.msra.mxu0 %v3783
    %3981 = vmatpush.bf16.msra.mxu0 %v3777
    %3982 = vmatpush.bf16.msra.mxu0 %v3771
    %3983 = vmatpush.bf16.msra.mxu0 %v3765
    %3984 = vmatpush.bf16.msra.mxu0 %v3759
    %3985 = vmatpush.bf16.msra.mxu0 %v3753
    %3986 = vmatpush.bf16.msra.mxu0 %v3747
    %3987 = vmatpush.bf16.msra.mxu0 %v3741
    %3988 = vmatmul.bf16.gmra.mxu0 %v3388
    %v3989 = vpop.f32.mrf.mxu0
    %v3990 = vadd.f32 %v3976, %v3989
    %v3991 = vpop.f32.mrf.mxu0
    %v3992 = vadd.f32 %v3978, %v3991
    %3993 = vdwg.mxu0
    %3994 = vmatpush.bf16.msra.mxu0 %v3736
    %3995 = vmatpush.bf16.msra.mxu0 %v3730
    %3996 = vmatpush.bf16.msra.mxu0 %v3724
    %3997 = vmatpush.bf16.msra.mxu0 %v3718
    %3998 = vmatpush.bf16.msra.mxu0 %v3712
    %3999 = vmatpush.bf16.msra.mxu0 %v3706
    %4000 = vmatpush.bf16.msra.mxu0 %v3700
    %4001 = vmatpush.bf16.msra.mxu0 %v3694
    %4002 = vmatmul.bf16.gmra.mxu0 %v3387
    %v4003 = vpop.f32.mrf.mxu0
    %v4004 = vadd.f32 %v3394, %v4003
    %v4005 = vpop.f32.mrf.mxu0
    %v4006 = vadd.f32 %v3394, %v4005
    %4007 = vdwg.mxu0
    %4008 = vmatpush.bf16.msra.mxu0 %v3784
    %4009 = vmatpush.bf16.msra.mxu0 %v3778
    %4010 = vmatpush.bf16.msra.mxu0 %v3772
    %4011 = vmatpush.bf16.msra.mxu0 %v3766
    %4012 = vmatpush.bf16.msra.mxu0 %v3760
    %4013 = vmatpush.bf16.msra.mxu0 %v3754
    %4014 = vmatpush.bf16.msra.mxu0 %v3748
    %4015 = vmatpush.bf16.msra.mxu0 %v3742
    %4016 = vmatmul.bf16.gmra.mxu0 %v3388
    %v4017 = vpop.f32.mrf.mxu0
    %v4018 = vadd.f32 %v4004, %v4017
    %v4019 = vpop.f32.mrf.mxu0
    %v4020 = vadd.f32 %v4006, %v4019
    %4021 = vdwg.mxu0
    %4022 = vmatpush.bf16.msra.mxu0 %v3737
    %4023 = vmatpush.bf16.msra.mxu0 %v3731
    %4024 = vmatpush.bf16.msra.mxu0 %v3725
    %4025 = vmatpush.bf16.msra.mxu0 %v3719
    %4026 = vmatpush.bf16.msra.mxu0 %v3713
    %4027 = vmatpush.bf16.msra.mxu0 %v3707
    %4028 = vmatpush.bf16.msra.mxu0 %v3701
    %4029 = vmatpush.bf16.msra.mxu0 %v3695
    %4030 = vmatmul.bf16.gmra.mxu0 %v3387
    %v4031 = vpop.f32.mrf.mxu0
    %v4032 = vadd.f32 %v3395, %v4031
    %v4033 = vpop.f32.mrf.mxu0
    %v4034 = vadd.f32 %v3395, %v4033
    %4035 = vdwg.mxu0
    %4036 = vmatpush.bf16.msra.mxu0 %v3785
    %4037 = vmatpush.bf16.msra.mxu0 %v3779
    %4038 = vmatpush.bf16.msra.mxu0 %v3773
    %4039 = vmatpush.bf16.msra.mxu0 %v3767
    %4040 = vmatpush.bf16.msra.mxu0 %v3761
    %4041 = vmatpush.bf16.msra.mxu0 %v3755
    %4042 = vmatpush.bf16.msra.mxu0 %v3749
    %4043 = vmatpush.bf16.msra.mxu0 %v3743
    %4044 = vmatmul.bf16.gmra.mxu0 %v3388
    %v4045 = vpop.f32.mrf.mxu0
    %v4046 = vadd.f32 %v4032, %v4045
    %v4047 = vpop.f32.mrf.mxu0
    %v4048 = vadd.f32 %v4034, %v4047
    %4049 = vdwg.mxu0
    %v4050 = vmul.f32 %v3906, %v3962
    %v4051 = vmul.f32 %v3934, %v3990
    %v4052 = vmul.f32 %v3908, %v3964
    %v4053 = vmul.f32 %v3936, %v3992
    %v4054 = vpack.c.bf16 %v4052, %v4050
    %v4055 = vpack.c.bf16 %v4053, %v4051
    %4056 = vmatpush.bf16.msra.mxu0 %v1270
    %4057 = vmatpush.bf16.msra.mxu0 %v1269
    %4058 = vmatpush.bf16.msra.mxu0 %v1268
    %4059 = vmatpush.bf16.msra.mxu0 %v1267
    %4060 = vmatpush.bf16.msra.mxu0 %v1266
    %4061 = vmatpush.bf16.msra.mxu0 %v1265
    %4062 = vmatpush.bf16.msra.mxu0 %v1264
    %4063 = vmatpush.bf16.msra.mxu0 %v1263
    %4064 = vmatmul.bf16.gmra.mxu0 %v4054
    %v4065 = vpop.f32.mrf.mxu0
    %v4066 = vadd.f32 0.0, %v4065
    %v4067 = vpop.f32.mrf.mxu0
    %v4068 = vadd.f32 0.0, %v4067
    %4069 = vdwg.mxu0
    %4070 = vmatpush.bf16.msra.mxu0 %v1278
    %4071 = vmatpush.bf16.msra.mxu0 %v1277
    %4072 = vmatpush.bf16.msra.mxu0 %v1276
    %4073 = vmatpush.bf16.msra.mxu0 %v1275
    %4074 = vmatpush.bf16.msra.mxu0 %v1274
    %4075 = vmatpush.bf16.msra.mxu0 %v1273
    %4076 = vmatpush.bf16.msra.mxu0 %v1272
    %4077 = vmatpush.bf16.msra.mxu0 %v1271
    %4078 = vmatmul.bf16.gmra.mxu0 %v4055
    %v4079 = vpop.f32.mrf.mxu0
    %v4080 = vadd.f32 %v4066, %v4079
    %v4081 = vpop.f32.mrf.mxu0
    %v4082 = vadd.f32 %v4068, %v4081
    %4083 = vdwg.mxu0
    %v4084 = vmul.f32 %v4080, 0.125
    %v4085 = vmul.f32 %v4082, 0.125
    %v4086 = vmul.f32 %v3906, %v3964
    %v4087 = vmul.f32 %v3934, %v3992
    %v4088 = vmul.f32 %v3908, %v3962
    %v4089 = vmul.f32 %v3936, %v3990
    %v4090 = vpack.c.bf16 %v4088, %v4086
    %v4091 = vpack.c.bf16 %v4089, %v4087
    %4092 = vmatpush.bf16.msra.mxu0 %v1270
    %4093 = vmatpush.bf16.msra.mxu0 %v1269
    %4094 = vmatpush.bf16.msra.mxu0 %v1268
    %4095 = vmatpush.bf16.msra.mxu0 %v1267
    %4096 = vmatpush.bf16.msra.mxu0 %v1266
    %4097 = vmatpush.bf16.msra.mxu0 %v1265
    %4098 = vmatpush.bf16.msra.mxu0 %v1264
    %4099 = vmatpush.bf16.msra.mxu0 %v1263
    %4100 = vmatmul.bf16.gmra.mxu0 %v4090
    %v4101 = vpop.f32.mrf.mxu0
    %v4102 = vadd.f32 0.0, %v4101
    %v4103 = vpop.f32.mrf.mxu0
    %v4104 = vadd.f32 0.0, %v4103
    %4105 = vdwg.mxu0
    %4106 = vmatpush.bf16.msra.mxu0 %v1278
    %4107 = vmatpush.bf16.msra.mxu0 %v1277
    %4108 = vmatpush.bf16.msra.mxu0 %v1276
    %4109 = vmatpush.bf16.msra.mxu0 %v1275
    %4110 = vmatpush.bf16.msra.mxu0 %v1274
    %4111 = vmatpush.bf16.msra.mxu0 %v1273
    %4112 = vmatpush.bf16.msra.mxu0 %v1272
    %4113 = vmatpush.bf16.msra.mxu0 %v1271
    %4114 = vmatmul.bf16.gmra.mxu0 %v4091
    %v4115 = vpop.f32.mrf.mxu0
    %v4116 = vadd.f32 %v4102, %v4115
    %v4117 = vpop.f32.mrf.mxu0
    %v4118 = vadd.f32 %v4104, %v4117
    %4119 = vdwg.mxu0
    %v4120 = vmul.f32 %v4116, 0.125
    %v4121 = vmul.f32 %v4118, 0.125
    %v4122 = vmax.f32 %v4084, %v4120
    %v4123 = vmax.f32 %v4085, %v4121
    %v4124 = vsub.f32 %v4084, %v4122
    %v4125 = vsub.f32 %v4085, %v4123
    %v4126 = vmul.f32 %v4124, 1.442695
    %v4127 = vpow.pop %v4126
    %v4128 = vmul.f32 %v4125, 1.442695
    %v4129 = vpow.pop %v4128
    %v4130 = vsub.f32 %v4120, %v4122
    %v4131 = vsub.f32 %v4121, %v4123
    %v4132 = vmul.f32 %v4130, 1.442695
    %v4133 = vpow.pop %v4132
    %v4134 = vmul.f32 %v4131, 1.442695
    %v4135 = vpow.pop %v4134
    %v4136 = vadd.f32 %v4127, %v4133
    %v4137 = vadd.f32 %v4129, %v4135
    %v4138 = vrcp.pop %v4136
    %v4139 = vrcp.pop %v4137
    %v4140 = vmul.f32 %v4127, %v4138
    %v4141 = vmul.f32 %v4129, %v4139
    %v4142 = vmul.f32 %v4133, %v4138
    %v4143 = vmul.f32 %v4135, %v4139
    %v4144 = vpack.c.bf16 %v4141, %v4140
    %4145 = vmatpush.bf16.msra.mxu0 %v1446
    %4146 = vmatpush.bf16.msra.mxu0 %v1444
    %4147 = vmatpush.bf16.msra.mxu0 %v1442
    %4148 = vmatpush.bf16.msra.mxu0 %v1440
    %4149 = vmatpush.bf16.msra.mxu0 %v1438
    %4150 = vmatpush.bf16.msra.mxu0 %v1436
    %4151 = vmatpush.bf16.msra.mxu0 %v1434
    %4152 = vmatpush.bf16.msra.mxu0 %v1432
    %4153 = vmatmul.bf16.gmra.mxu0 %v4144
    %v4154 = vpop.f32.mrf.mxu0
    %v4155 = vadd.f32 0.0, %v4154
    %v4156 = vpop.f32.mrf.mxu0
    %v4157 = vadd.f32 0.0, %v4156
    %4158 = vdwg.mxu0
    %4159 = vmatpush.bf16.msra.mxu0 %v1447
    %4160 = vmatpush.bf16.msra.mxu0 %v1445
    %4161 = vmatpush.bf16.msra.mxu0 %v1443
    %4162 = vmatpush.bf16.msra.mxu0 %v1441
    %4163 = vmatpush.bf16.msra.mxu0 %v1439
    %4164 = vmatpush.bf16.msra.mxu0 %v1437
    %4165 = vmatpush.bf16.msra.mxu0 %v1435
    %4166 = vmatpush.bf16.msra.mxu0 %v1433
    %4167 = vmatmul.bf16.gmra.mxu0 %v4144
    %v4168 = vpop.f32.mrf.mxu0
    %v4169 = vadd.f32 0.0, %v4168
    %v4170 = vpop.f32.mrf.mxu0
    %v4171 = vadd.f32 0.0, %v4170
    %4172 = vdwg.mxu0
    %v4173 = vmul.f32 %v4155, %v4018
    %v4174 = vmul.f32 %v4169, %v4046
    %v4175 = vmul.f32 %v4157, %v4020
    %v4176 = vmul.f32 %v4171, %v4048
    %v4177 = vpack.c.bf16 %v4143, %v4142
    %4178 = vmatpush.bf16.msra.mxu0 %v1446
    %4179 = vmatpush.bf16.msra.mxu0 %v1444
    %4180 = vmatpush.bf16.msra.mxu0 %v1442
    %4181 = vmatpush.bf16.msra.mxu0 %v1440
    %4182 = vmatpush.bf16.msra.mxu0 %v1438
    %4183 = vmatpush.bf16.msra.mxu0 %v1436
    %4184 = vmatpush.bf16.msra.mxu0 %v1434
    %4185 = vmatpush.bf16.msra.mxu0 %v1432
    %4186 = vmatmul.bf16.gmra.mxu0 %v4177
    %v4187 = vpop.f32.mrf.mxu0
    %v4188 = vadd.f32 0.0, %v4187
    %v4189 = vpop.f32.mrf.mxu0
    %v4190 = vadd.f32 0.0, %v4189
    %4191 = vdwg.mxu0
    %4192 = vmatpush.bf16.msra.mxu0 %v1447
    %4193 = vmatpush.bf16.msra.mxu0 %v1445
    %4194 = vmatpush.bf16.msra.mxu0 %v1443
    %4195 = vmatpush.bf16.msra.mxu0 %v1441
    %4196 = vmatpush.bf16.msra.mxu0 %v1439
    %4197 = vmatpush.bf16.msra.mxu0 %v1437
    %4198 = vmatpush.bf16.msra.mxu0 %v1435
    %4199 = vmatpush.bf16.msra.mxu0 %v1433
    %4200 = vmatmul.bf16.gmra.mxu0 %v4177
    %v4201 = vpop.f32.mrf.mxu0
    %v4202 = vadd.f32 0.0, %v4201
    %v4203 = vpop.f32.mrf.mxu0
    %v4204 = vadd.f32 0.0, %v4203
    %4205 = vdwg.mxu0
    %v4206 = vmul.f32 %v4188, %v4020
    %v4207 = vmul.f32 %v4202, %v4048
    %v4208 = vmul.f32 %v4190, %v4018
    %v4209 = vmul.f32 %v4204, %v4046
    %v4210 = vadd.f32 %v4173, %v4206
    %v4211 = vadd.f32 %v4174, %v4207
    %v4212 = vadd.f32 %v4175, %v4208
    %v4213 = vadd.f32 %v4176, %v4209
    %s4214 = scalar_lea.vmem [#allocation14], 256
    %v4215 = vld [vmem:[%s4214] sm:$0xff]
    %v4216 = vld [vmem:[%s4214 + $0x8] sm:$0xff]
    %v4217 = vld [vmem:[%s4214 + $0x10] sm:$0xff]
    %v4218 = vld [vmem:[%s4214 + $0x18] sm:$0xff]
    %v4219 = vld [vmem:[%s4214 + $0x20] sm:$0xff]
    %v4220 = vld [vmem:[%s4214 + $0x28] sm:$0xff]
    %v4221 = vld [vmem:[%s4214 + $0x30] sm:$0xff]
    %v4222 = vld [vmem:[%s4214 + $0x38] sm:$0xff]
    %v4223 = vld [vmem:[%s4214 + $0x40] sm:$0xff]
    %v4224 = vld [vmem:[%s4214 + $0x48] sm:$0xff]
    %v4225 = vld [vmem:[%s4214 + $0x50] sm:$0xff]
    %v4226 = vld [vmem:[%s4214 + $0x58] sm:$0xff]
    %v4227 = vld [vmem:[%s4214 + $0x60] sm:$0xff]
    %v4228 = vld [vmem:[%s4214 + $0x68] sm:$0xff]
    %v4229 = vld [vmem:[%s4214 + $0x70] sm:$0xff]
    %v4230 = vld [vmem:[%s4214 + $0x78] sm:$0xff]
    %v4231 = vld [vmem:[%s4214 + $0x80] sm:$0xff]
    %v4232 = vld [vmem:[%s4214 + $0x88] sm:$0xff]
    %v4233 = vld [vmem:[%s4214 + $0x90] sm:$0xff]
    %v4234 = vld [vmem:[%s4214 + $0x98] sm:$0xff]
    %v4235 = vld [vmem:[%s4214 + $0xa0] sm:$0xff]
    %v4236 = vld [vmem:[%s4214 + $0xa8] sm:$0xff]
    %v4237 = vld [vmem:[%s4214 + $0xb0] sm:$0xff]
    %v4238 = vld [vmem:[%s4214 + $0xb8] sm:$0xff]
    %v4239 = vld [vmem:[%s4214 + $0xc0] sm:$0xff]
    %v4240 = vld [vmem:[%s4214 + $0xc8] sm:$0xff]
    %v4241 = vld [vmem:[%s4214 + $0xd0] sm:$0xff]
    %v4242 = vld [vmem:[%s4214 + $0xd8] sm:$0xff]
    %v4243 = vld [vmem:[%s4214 + $0xe0] sm:$0xff]
    %v4244 = vld [vmem:[%s4214 + $0xe8] sm:$0xff]
    %v4245 = vld [vmem:[%s4214 + $0xf0] sm:$0xff]
    %v4246 = vld [vmem:[%s4214 + $0xf8] sm:$0xff]
    %v4247 = vpack.c.bf16 %v4212, %v4210
    %v4248 = vpack.c.bf16 %v4213, %v4211
    %v4281 = vunpack.c.l.b16 %v4215
    %v4282 = vunpack.c.h.b16 %v4215
    %v4283 = vunpack.c.l.b16 %v4216
    %v4284 = vunpack.c.h.b16 %v4216
    %v4285 = vunpack.c.l.b16 %v4217
    %v4286 = vunpack.c.h.b16 %v4217
    %v4287 = vunpack.c.l.b16 %v4218
    %v4288 = vunpack.c.h.b16 %v4218
    %v4289 = vunpack.c.l.b16 %v4219
    %v4290 = vunpack.c.h.b16 %v4219
    %v4291 = vunpack.c.l.b16 %v4220
    %v4292 = vunpack.c.h.b16 %v4220
    %v4293 = vunpack.c.l.b16 %v4221
    %v4294 = vunpack.c.h.b16 %v4221
    %v4295 = vunpack.c.l.b16 %v4222
    %v4296 = vunpack.c.h.b16 %v4222
    %v4297 = vunpack.c.l.b16 %v4223
    %v4298 = vunpack.c.h.b16 %v4223
    %v4299 = vunpack.c.l.b16 %v4224
    %v4300 = vunpack.c.h.b16 %v4224
    %v4301 = vunpack.c.l.b16 %v4225
    %v4302 = vunpack.c.h.b16 %v4225
    %v4303 = vunpack.c.l.b16 %v4226
    %v4304 = vunpack.c.h.b16 %v4226
    %v4305 = vunpack.c.l.b16 %v4227
    %v4306 = vunpack.c.h.b16 %v4227
    %v4307 = vunpack.c.l.b16 %v4228
    %v4308 = vunpack.c.h.b16 %v4228
    %v4309 = vunpack.c.l.b16 %v4229
    %v4310 = vunpack.c.h.b16 %v4229
    %v4311 = vunpack.c.l.b16 %v4230
    %v4312 = vunpack.c.h.b16 %v4230
    %v4313 = vunpack.c.l.b16 %v4231
    %v4314 = vunpack.c.h.b16 %v4231
    %v4315 = vunpack.c.l.b16 %v4232
    %v4316 = vunpack.c.h.b16 %v4232
    %v4317 = vunpack.c.l.b16 %v4233
    %v4318 = vunpack.c.h.b16 %v4233
    %v4319 = vunpack.c.l.b16 %v4234
    %v4320 = vunpack.c.h.b16 %v4234
    %v4321 = vunpack.c.l.b16 %v4235
    %v4322 = vunpack.c.h.b16 %v4235
    %v4323 = vunpack.c.l.b16 %v4236
    %v4324 = vunpack.c.h.b16 %v4236
    %v4325 = vunpack.c.l.b16 %v4237
    %v4326 = vunpack.c.h.b16 %v4237
    %v4327 = vunpack.c.l.b16 %v4238
    %v4328 = vunpack.c.h.b16 %v4238
    %v4329 = vunpack.c.l.b16 %v4239
    %v4330 = vunpack.c.h.b16 %v4239
    %v4331 = vunpack.c.l.b16 %v4240
    %v4332 = vunpack.c.h.b16 %v4240
    %v4333 = vunpack.c.l.b16 %v4241
    %v4334 = vunpack.c.h.b16 %v4241
    %v4335 = vunpack.c.l.b16 %v4242
    %v4336 = vunpack.c.h.b16 %v4242
    %v4337 = vunpack.c.l.b16 %v4243
    %v4338 = vunpack.c.h.b16 %v4243
    %v4339 = vunpack.c.l.b16 %v4244
    %v4340 = vunpack.c.h.b16 %v4244
    %v4341 = vunpack.c.l.b16 %v4245
    %v4342 = vunpack.c.h.b16 %v4245
    %v4343 = vunpack.c.l.b16 %v4246
    %v4344 = vunpack.c.h.b16 %v4246
    %v4345 = vpack.c.b16 %v4283, %v4281
    %v4346 = vpack.c.b16 %v4284, %v4282
    %v4347 = vpack.c.b16 %v4287, %v4285
    %v4348 = vpack.c.b16 %v4288, %v4286
    %v4349 = vpack.c.b16 %v4291, %v4289
    %v4350 = vpack.c.b16 %v4292, %v4290
    %v4351 = vpack.c.b16 %v4295, %v4293
    %v4352 = vpack.c.b16 %v4296, %v4294
    %v4353 = vpack.c.b16 %v4299, %v4297
    %v4354 = vpack.c.b16 %v4300, %v4298
    %v4355 = vpack.c.b16 %v4303, %v4301
    %v4356 = vpack.c.b16 %v4304, %v4302
    %v4357 = vpack.c.b16 %v4307, %v4305
    %v4358 = vpack.c.b16 %v4308, %v4306
    %v4359 = vpack.c.b16 %v4311, %v4309
    %v4360 = vpack.c.b16 %v4312, %v4310
    %v4361 = vpack.c.b16 %v4315, %v4313
    %v4362 = vpack.c.b16 %v4316, %v4314
    %v4363 = vpack.c.b16 %v4319, %v4317
    %v4364 = vpack.c.b16 %v4320, %v4318
    %v4365 = vpack.c.b16 %v4323, %v4321
    %v4366 = vpack.c.b16 %v4324, %v4322
    %v4367 = vpack.c.b16 %v4327, %v4325
    %v4368 = vpack.c.b16 %v4328, %v4326
    %v4369 = vpack.c.b16 %v4331, %v4329
    %v4370 = vpack.c.b16 %v4332, %v4330
    %v4371 = vpack.c.b16 %v4335, %v4333
    %v4372 = vpack.c.b16 %v4336, %v4334
    %v4373 = vpack.c.b16 %v4339, %v4337
    %v4374 = vpack.c.b16 %v4340, %v4338
    %v4375 = vpack.c.b16 %v4343, %v4341
    %v4376 = vpack.c.b16 %v4344, %v4342
    %4409 = vmatpush.bf16.msra.mxu0 %v4359
    %4410 = vmatpush.bf16.msra.mxu0 %v4357
    %4411 = vmatpush.bf16.msra.mxu0 %v4355
    %4412 = vmatpush.bf16.msra.mxu0 %v4353
    %4413 = vmatpush.bf16.msra.mxu0 %v4351
    %4414 = vmatpush.bf16.msra.mxu0 %v4349
    %4415 = vmatpush.bf16.msra.mxu0 %v4347
    %4416 = vmatpush.bf16.msra.mxu0 %v4345
    %4417 = vmatmul.bf16.gmra.mxu0 %v4247
    %v4418 = vpop.f32.mrf.mxu0
    %v4419 = vadd.f32 0.0, %v4418
    %v4420 = vpop.f32.mrf.mxu0
    %v4421 = vadd.f32 0.0, %v4420
    %4422 = vdwg.mxu0
    %4423 = vmatpush.bf16.msra.mxu0 %v4375
    %4424 = vmatpush.bf16.msra.mxu0 %v4373
    %4425 = vmatpush.bf16.msra.mxu0 %v4371
    %4426 = vmatpush.bf16.msra.mxu0 %v4369
    %4427 = vmatpush.bf16.msra.mxu0 %v4367
    %4428 = vmatpush.bf16.msra.mxu0 %v4365
    %4429 = vmatpush.bf16.msra.mxu0 %v4363
    %4430 = vmatpush.bf16.msra.mxu0 %v4361
    %4431 = vmatmul.bf16.gmra.mxu0 %v4248
    %v4432 = vpop.f32.mrf.mxu0
    %v4433 = vadd.f32 %v4419, %v4432
    %v4434 = vpop.f32.mrf.mxu0
    %v4435 = vadd.f32 %v4421, %v4434
    %4436 = vdwg.mxu0
    %4437 = vmatpush.bf16.msra.mxu0 %v4360
    %4438 = vmatpush.bf16.msra.mxu0 %v4358
    %4439 = vmatpush.bf16.msra.mxu0 %v4356
    %4440 = vmatpush.bf16.msra.mxu0 %v4354
    %4441 = vmatpush.bf16.msra.mxu0 %v4352
    %4442 = vmatpush.bf16.msra.mxu0 %v4350
    %4443 = vmatpush.bf16.msra.mxu0 %v4348
    %4444 = vmatpush.bf16.msra.mxu0 %v4346
    %4445 = vmatmul.bf16.gmra.mxu0 %v4247
    %v4446 = vpop.f32.mrf.mxu0
    %v4447 = vadd.f32 0.0, %v4446
    %v4448 = vpop.f32.mrf.mxu0
    %v4449 = vadd.f32 0.0, %v4448
    %4450 = vdwg.mxu0
    %4451 = vmatpush.bf16.msra.mxu0 %v4376
    %4452 = vmatpush.bf16.msra.mxu0 %v4374
    %4453 = vmatpush.bf16.msra.mxu0 %v4372
    %4454 = vmatpush.bf16.msra.mxu0 %v4370
    %4455 = vmatpush.bf16.msra.mxu0 %v4368
    %4456 = vmatpush.bf16.msra.mxu0 %v4366
    %4457 = vmatpush.bf16.msra.mxu0 %v4364
    %4458 = vmatpush.bf16.msra.mxu0 %v4362
    %4459 = vmatmul.bf16.gmra.mxu0 %v4248
    %v4460 = vpop.f32.mrf.mxu0
    %v4461 = vadd.f32 %v4447, %v4460
    %v4462 = vpop.f32.mrf.mxu0
    %v4463 = vadd.f32 %v4449, %v4462
    %4464 = vdwg.mxu0
    %v4465 = vadd.f32 %v3200, %v4433
    %v4466 = vadd.f32 %v3201, %v4461
    %v4467 = vadd.f32 %v3202, %v4435
    %v4468 = vadd.f32 %v3203, %v4463
    %v4470 = vperm.slane %v3217, 0
    %v4471 = vperm.slane %v3217, 1
    %v4474 = vadd.f32 %v4465, %v4470
    %v4475 = vadd.f32 %v4466, %v4471
    %v4476 = vadd.f32 %v4467, %v4470
    %v4477 = vadd.f32 %v4468, %v4471
    %v4478 = vadd.f32 %v4474, %v4475
    %4479 = vadd.xlane.f32.xlu0 %v4478
    %v4480 = vpop.xlane.xlu0 %4479
    %v4481 = vadd.f32 %v4476, %v4477
    %4482 = vadd.xlane.f32.xlu0 %v4481
    %v4483 = vpop.xlane.xlu0 %4482
    %v4484 = vmul.f32 %v4480, %v371
    %v4485 = vmul.f32 %v4483, %v371
    %v4486 = vsub.f32 %v4474, %v4484
    %v4487 = vsub.f32 %v4475, %v4484
    %v4488 = vsub.f32 %v4476, %v4485
    %v4489 = vsub.f32 %v4477, %v4485
    %v4490 = vmul.f32 %v4486, %v4486
    %v4491 = vmul.f32 %v4487, %v4487
    %v4492 = vmul.f32 %v4488, %v4488
    %v4493 = vmul.f32 %v4489, %v4489
    %v4494 = vadd.f32 %v4490, %v4491
    %4495 = vadd.xlane.f32.xlu0 %v4494
    %v4496 = vpop.xlane.xlu0 %4495
    %v4497 = vadd.f32 %v4492, %v4493
    %4498 = vadd.xlane.f32.xlu0 %v4497
    %v4499 = vpop.xlane.xlu0 %4498
    %v4500 = vmul.f32 %v4496, %v371
    %v4501 = vmul.f32 %v4499, %v371
    %v4502 = vadd.f32 %v4500, 1e-05
    %v4503 = vadd.f32 %v4501, 1e-05
    %v4504 = vrsqrt.pop %v4502
    %v4505 = vmul.f32 %v4504, %v4502
    %v4506 = vmul.f32 %v4505, %v4504
    %v4507 = vmul.f32 0.5, %v4506
    %v4508 = vsub.f32 1.5, %v4507
    %v4509 = vmul.f32 %v4504, %v4508
    %vm4510 = vweird.f32 %v4502
    %vm4511 = vweird.f32 %v4504
    %vm4512 = vmor %vm4510, %vm4511
    %v4513 = vsel %vm4512, %v4504, %v4509
    %v4514 = vrsqrt.pop %v4503
    %v4515 = vmul.f32 %v4514, %v4503
    %v4516 = vmul.f32 %v4515, %v4514
    %v4517 = vmul.f32 0.5, %v4516
    %v4518 = vsub.f32 1.5, %v4517
    %v4519 = vmul.f32 %v4514, %v4518
    %vm4520 = vweird.f32 %v4503
    %vm4521 = vweird.f32 %v4514
    %vm4522 = vmor %vm4520, %vm4521
    %v4523 = vsel %vm4522, %v4514, %v4519
    %v4524 = vmul.f32 %v4486, %v4513
    %v4525 = vmul.f32 %v4487, %v4513
    %v4526 = vmul.f32 %v4488, %v4523
    %v4527 = vmul.f32 %v4489, %v4523
    %v4529 = vperm.slane %v3209, 0
    %v4530 = vperm.slane %v3209, 1
    %v4533 = vmul.f32 %v4524, %v4529
    %v4534 = vmul.f32 %v4525, %v4530
    %v4535 = vmul.f32 %v4526, %v4529
    %v4536 = vmul.f32 %v4527, %v4530
    %v4538 = vperm.slane %v3211, 0
    %v4539 = vperm.slane %v3211, 1
    %v4542 = vadd.f32 %v4533, %v4538
    %v4543 = vadd.f32 %v4534, %v4539
    %v4544 = vadd.f32 %v4535, %v4538
    %v4545 = vadd.f32 %v4536, %v4539
    %s4546 = scalar_lea.vmem [#allocation16], 512
    %v4547 = vld [vmem:[%s4546] sm:$0xff]
    %v4548 = vld [vmem:[%s4546 + $0x8] sm:$0xff]
    %v4549 = vld [vmem:[%s4546 + $0x10] sm:$0xff]
    %v4550 = vld [vmem:[%s4546 + $0x18] sm:$0xff]
    %v4551 = vld [vmem:[%s4546 + $0x20] sm:$0xff]
    %v4552 = vld [vmem:[%s4546 + $0x28] sm:$0xff]
    %v4553 = vld [vmem:[%s4546 + $0x30] sm:$0xff]
    %v4554 = vld [vmem:[%s4546 + $0x38] sm:$0xff]
    %v4555 = vld [vmem:[%s4546 + $0x40] sm:$0xff]
    %v4556 = vld [vmem:[%s4546 + $0x48] sm:$0xff]
    %v4557 = vld [vmem:[%s4546 + $0x50] sm:$0xff]
    %v4558 = vld [vmem:[%s4546 + $0x58] sm:$0xff]
    %v4559 = vld [vmem:[%s4546 + $0x60] sm:$0xff]
    %v4560 = vld [vmem:[%s4546 + $0x68] sm:$0xff]
    %v4561 = vld [vmem:[%s4546 + $0x70] sm:$0xff]
    %v4562 = vld [vmem:[%s4546 + $0x78] sm:$0xff]
    %v4563 = vld [vmem:[%s4546 + $0x80] sm:$0xff]
    %v4564 = vld [vmem:[%s4546 + $0x88] sm:$0xff]
    %v4565 = vld [vmem:[%s4546 + $0x90] sm:$0xff]
    %v4566 = vld [vmem:[%s4546 + $0x98] sm:$0xff]
    %v4567 = vld [vmem:[%s4546 + $0xa0] sm:$0xff]
    %v4568 = vld [vmem:[%s4546 + $0xa8] sm:$0xff]
    %v4569 = vld [vmem:[%s4546 + $0xb0] sm:$0xff]
    %v4570 = vld [vmem:[%s4546 + $0xb8] sm:$0xff]
    %v4571 = vld [vmem:[%s4546 + $0xc0] sm:$0xff]
    %v4572 = vld [vmem:[%s4546 + $0xc8] sm:$0xff]
    %v4573 = vld [vmem:[%s4546 + $0xd0] sm:$0xff]
    %v4574 = vld [vmem:[%s4546 + $0xd8] sm:$0xff]
    %v4575 = vld [vmem:[%s4546 + $0xe0] sm:$0xff]
    %v4576 = vld [vmem:[%s4546 + $0xe8] sm:$0xff]
    %v4577 = vld [vmem:[%s4546 + $0xf0] sm:$0xff]
    %v4578 = vld [vmem:[%s4546 + $0xf8] sm:$0xff]
    %v4579 = vld [vmem:[%s4546 + $0x100] sm:$0xff]
    %v4580 = vld [vmem:[%s4546 + $0x108] sm:$0xff]
    %v4581 = vld [vmem:[%s4546 + $0x110] sm:$0xff]
    %v4582 = vld [vmem:[%s4546 + $0x118] sm:$0xff]
    %v4583 = vld [vmem:[%s4546 + $0x120] sm:$0xff]
    %v4584 = vld [vmem:[%s4546 + $0x128] sm:$0xff]
    %v4585 = vld [vmem:[%s4546 + $0x130] sm:$0xff]
    %v4586 = vld [vmem:[%s4546 + $0x138] sm:$0xff]
    %v4587 = vld [vmem:[%s4546 + $0x140] sm:$0xff]
    %v4588 = vld [vmem:[%s4546 + $0x148] sm:$0xff]
    %v4589 = vld [vmem:[%s4546 + $0x150] sm:$0xff]
    %v4590 = vld [vmem:[%s4546 + $0x158] sm:$0xff]
    %v4591 = vld [vmem:[%s4546 + $0x160] sm:$0xff]
    %v4592 = vld [vmem:[%s4546 + $0x168] sm:$0xff]
    %v4593 = vld [vmem:[%s4546 + $0x170] sm:$0xff]
    %v4594 = vld [vmem:[%s4546 + $0x178] sm:$0xff]
    %v4595 = vld [vmem:[%s4546 + $0x180] sm:$0xff]
    %v4596 = vld [vmem:[%s4546 + $0x188] sm:$0xff]
    %v4597 = vld [vmem:[%s4546 + $0x190] sm:$0xff]
    %v4598 = vld [vmem:[%s4546 + $0x198] sm:$0xff]
    %v4599 = vld [vmem:[%s4546 + $0x1a0] sm:$0xff]
    %v4600 = vld [vmem:[%s4546 + $0x1a8] sm:$0xff]
    %v4601 = vld [vmem:[%s4546 + $0x1b0] sm:$0xff]
    %v4602 = vld [vmem:[%s4546 + $0x1b8] sm:$0xff]
    %v4603 = vld [vmem:[%s4546 + $0x1c0] sm:$0xff]
    %v4604 = vld [vmem:[%s4546 + $0x1c8] sm:$0xff]
    %v4605 = vld [vmem:[%s4546 + $0x1d0] sm:$0xff]
    %v4606 = vld [vmem:[%s4546 + $0x1d8] sm:$0xff]
    %v4607 = vld [vmem:[%s4546 + $0x1e0] sm:$0xff]
    %v4608 = vld [vmem:[%s4546 + $0x1e8] sm:$0xff]
    %v4609 = vld [vmem:[%s4546 + $0x1f0] sm:$0xff]
    %v4610 = vld [vmem:[%s4546 + $0x1f8] sm:$0xff]
    %v4611 = vpack.c.bf16 %v4544, %v4542
    %v4612 = vpack.c.bf16 %v4545, %v4543
    %v4614 = vperm.slane %v3219, 0
    %v4615 = vperm.slane %v3219, 1
    %v4616 = vperm.slane %v3219, 2
    %v4617 = vperm.slane %v3219, 3
    %v4686 = vunpack.c.l.b16 %v4547
    %v4687 = vunpack.c.h.b16 %v4547
    %v4688 = vunpack.c.l.b16 %v4548
    %v4689 = vunpack.c.h.b16 %v4548
    %v4690 = vunpack.c.l.b16 %v4549
    %v4691 = vunpack.c.h.b16 %v4549
    %v4692 = vunpack.c.l.b16 %v4550
    %v4693 = vunpack.c.h.b16 %v4550
    %v4694 = vunpack.c.l.b16 %v4551
    %v4695 = vunpack.c.h.b16 %v4551
    %v4696 = vunpack.c.l.b16 %v4552
    %v4697 = vunpack.c.h.b16 %v4552
    %v4698 = vunpack.c.l.b16 %v4553
    %v4699 = vunpack.c.h.b16 %v4553
    %v4700 = vunpack.c.l.b16 %v4554
    %v4701 = vunpack.c.h.b16 %v4554
    %v4702 = vunpack.c.l.b16 %v4555
    %v4703 = vunpack.c.h.b16 %v4555
    %v4704 = vunpack.c.l.b16 %v4556
    %v4705 = vunpack.c.h.b16 %v4556
    %v4706 = vunpack.c.l.b16 %v4557
    %v4707 = vunpack.c.h.b16 %v4557
    %v4708 = vunpack.c.l.b16 %v4558
    %v4709 = vunpack.c.h.b16 %v4558
    %v4710 = vunpack.c.l.b16 %v4559
    %v4711 = vunpack.c.h.b16 %v4559
    %v4712 = vunpack.c.l.b16 %v4560
    %v4713 = vunpack.c.h.b16 %v4560
    %v4714 = vunpack.c.l.b16 %v4561
    %v4715 = vunpack.c.h.b16 %v4561
    %v4716 = vunpack.c.l.b16 %v4562
    %v4717 = vunpack.c.h.b16 %v4562
    %v4718 = vunpack.c.l.b16 %v4563
    %v4719 = vunpack.c.h.b16 %v4563
    %v4720 = vunpack.c.l.b16 %v4564
    %v4721 = vunpack.c.h.b16 %v4564
    %v4722 = vunpack.c.l.b16 %v4565
    %v4723 = vunpack.c.h.b16 %v4565
    %v4724 = vunpack.c.l.b16 %v4566
    %v4725 = vunpack.c.h.b16 %v4566
    %v4726 = vunpack.c.l.b16 %v4567
    %v4727 = vunpack.c.h.b16 %v4567
    %v4728 = vunpack.c.l.b16 %v4568
    %v4729 = vunpack.c.h.b16 %v4568
    %v4730 = vunpack.c.l.b16 %v4569
    %v4731 = vunpack.c.h.b16 %v4569
    %v4732 = vunpack.c.l.b16 %v4570
    %v4733 = vunpack.c.h.b16 %v4570
    %v4734 = vunpack.c.l.b16 %v4571
    %v4735 = vunpack.c.h.b16 %v4571
    %v4736 = vunpack.c.l.b16 %v4572
    %v4737 = vunpack.c.h.b16 %v4572
    %v4738 = vunpack.c.l.b16 %v4573
    %v4739 = vunpack.c.h.b16 %v4573
    %v4740 = vunpack.c.l.b16 %v4574
    %v4741 = vunpack.c.h.b16 %v4574
    %v4742 = vunpack.c.l.b16 %v4575
    %v4743 = vunpack.c.h.b16 %v4575
    %v4744 = vunpack.c.l.b16 %v4576
    %v4745 = vunpack.c.h.b16 %v4576
    %v4746 = vunpack.c.l.b16 %v4577
    %v4747 = vunpack.c.h.b16 %v4577
    %v4748 = vunpack.c.l.b16 %v4578
    %v4749 = vunpack.c.h.b16 %v4578
    %v4750 = vunpack.c.l.b16 %v4579
    %v4751 = vunpack.c.h.b16 %v4579
    %v4752 = vunpack.c.l.b16 %v4580
    %v4753 = vunpack.c.h.b16 %v4580
    %v4754 = vunpack.c.l.b16 %v4581
    %v4755 = vunpack.c.h.b16 %v4581
    %v4756 = vunpack.c.l.b16 %v4582
    %v4757 = vunpack.c.h.b16 %v4582
    %v4758 = vunpack.c.l.b16 %v4583
    %v4759 = vunpack.c.h.b16 %v4583
    %v4760 = vunpack.c.l.b16 %v4584
    %v4761 = vunpack.c.h.b16 %v4584
    %v4762 = vunpack.c.l.b16 %v4585
    %v4763 = vunpack.c.h.b16 %v4585
    %v4764 = vunpack.c.l.b16 %v4586
    %v4765 = vunpack.c.h.b16 %v4586
    %v4766 = vunpack.c.l.b16 %v4587
    %v4767 = vunpack.c.h.b16 %v4587
    %v4768 = vunpack.c.l.b16 %v4588
    %v4769 = vunpack.c.h.b16 %v4588
    %v4770 = vunpack.c.l.b16 %v4589
    %v4771 = vunpack.c.h.b16 %v4589
    %v4772 = vunpack.c.l.b16 %v4590
    %v4773 = vunpack.c.h.b16 %v4590
    %v4774 = vunpack.c.l.b16 %v4591
    %v4775 = vunpack.c.h.b16 %v4591
    %v4776 = vunpack.c.l.b16 %v4592
    %v4777 = vunpack.c.h.b16 %v4592
    %v4778 = vunpack.c.l.b16 %v4593
    %v4779 = vunpack.c.h.b16 %v4593
    %v4780 = vunpack.c.l.b16 %v4594
    %v4781 = vunpack.c.h.b16 %v4594
    %v4782 = vunpack.c.l.b16 %v4595
    %v4783 = vunpack.c.h.b16 %v4595
    %v4784 = vunpack.c.l.b16 %v4596
    %v4785 = vunpack.c.h.b16 %v4596
    %v4786 = vunpack.c.l.b16 %v4597
    %v4787 = vunpack.c.h.b16 %v4597
    %v4788 = vunpack.c.l.b16 %v4598
    %v4789 = vunpack.c.h.b16 %v4598
    %v4790 = vunpack.c.l.b16 %v4599
    %v4791 = vunpack.c.h.b16 %v4599
    %v4792 = vunpack.c.l.b16 %v4600
    %v4793 = vunpack.c.h.b16 %v4600
    %v4794 = vunpack.c.l.b16 %v4601
    %v4795 = vunpack.c.h.b16 %v4601
    %v4796 = vunpack.c.l.b16 %v4602
    %v4797 = vunpack.c.h.b16 %v4602
    %v4798 = vunpack.c.l.b16 %v4603
    %v4799 = vunpack.c.h.b16 %v4603
    %v4800 = vunpack.c.l.b16 %v4604
    %v4801 = vunpack.c.h.b16 %v4604
    %v4802 = vunpack.c.l.b16 %v4605
    %v4803 = vunpack.c.h.b16 %v4605
    %v4804 = vunpack.c.l.b16 %v4606
    %v4805 = vunpack.c.h.b16 %v4606
    %v4806 = vunpack.c.l.b16 %v4607
    %v4807 = vunpack.c.h.b16 %v4607
    %v4808 = vunpack.c.l.b16 %v4608
    %v4809 = vunpack.c.h.b16 %v4608
    %v4810 = vunpack.c.l.b16 %v4609
    %v4811 = vunpack.c.h.b16 %v4609
    %v4812 = vunpack.c.l.b16 %v4610
    %v4813 = vunpack.c.h.b16 %v4610
    %v4814 = vpack.c.b16 %v4690, %v4686
    %v4815 = vpack.c.b16 %v4691, %v4687
    %v4816 = vpack.c.b16 %v4692, %v4688
    %v4817 = vpack.c.b16 %v4693, %v4689
    %v4818 = vpack.c.b16 %v4698, %v4694
    %v4819 = vpack.c.b16 %v4699, %v4695
    %v4820 = vpack.c.b16 %v4700, %v4696
    %v4821 = vpack.c.b16 %v4701, %v4697
    %v4822 = vpack.c.b16 %v4706, %v4702
    %v4823 = vpack.c.b16 %v4707, %v4703
    %v4824 = vpack.c.b16 %v4708, %v4704
    %v4825 = vpack.c.b16 %v4709, %v4705
    %v4826 = vpack.c.b16 %v4714, %v4710
    %v4827 = vpack.c.b16 %v4715, %v4711
    %v4828 = vpack.c.b16 %v4716, %v4712
    %v4829 = vpack.c.b16 %v4717, %v4713
    %v4830 = vpack.c.b16 %v4722, %v4718
    %v4831 = vpack.c.b16 %v4723, %v4719
    %v4832 = vpack.c.b16 %v4724, %v4720
    %v4833 = vpack.c.b16 %v4725, %v4721
    %v4834 = vpack.c.b16 %v4730, %v4726
    %v4835 = vpack.c.b16 %v4731, %v4727
    %v4836 = vpack.c.b16 %v4732, %v4728
    %v4837 = vpack.c.b16 %v4733, %v4729
    %v4838 = vpack.c.b16 %v4738, %v4734
    %v4839 = vpack.c.b16 %v4739, %v4735
    %v4840 = vpack.c.b16 %v4740, %v4736
    %v4841 = vpack.c.b16 %v4741, %v4737
    %v4842 = vpack.c.b16 %v4746, %v4742
    %v4843 = vpack.c.b16 %v4747, %v4743
    %v4844 = vpack.c.b16 %v4748, %v4744
    %v4845 = vpack.c.b16 %v4749, %v4745
    %v4846 = vpack.c.b16 %v4754, %v4750
    %v4847 = vpack.c.b16 %v4755, %v4751
    %v4848 = vpack.c.b16 %v4756, %v4752
    %v4849 = vpack.c.b16 %v4757, %v4753
    %v4850 = vpack.c.b16 %v4762, %v4758
    %v4851 = vpack.c.b16 %v4763, %v4759
    %v4852 = vpack.c.b16 %v4764, %v4760
    %v4853 = vpack.c.b16 %v4765, %v4761
    %v4854 = vpack.c.b16 %v4770, %v4766
    %v4855 = vpack.c.b16 %v4771, %v4767
    %v4856 = vpack.c.b16 %v4772, %v4768
    %v4857 = vpack.c.b16 %v4773, %v4769
    %v4858 = vpack.c.b16 %v4778, %v4774
    %v4859 = vpack.c.b16 %v4779, %v4775
    %v4860 = vpack.c.b16 %v4780, %v4776
    %v4861 = vpack.c.b16 %v4781, %v4777
    %v4862 = vpack.c.b16 %v4786, %v4782
    %v4863 = vpack.c.b16 %v4787, %v4783
    %v4864 = vpack.c.b16 %v4788, %v4784
    %v4865 = vpack.c.b16 %v4789, %v4785
    %v4866 = vpack.c.b16 %v4794, %v4790
    %v4867 = vpack.c.b16 %v4795, %v4791
    %v4868 = vpack.c.b16 %v4796, %v4792
    %v4869 = vpack.c.b16 %v4797, %v4793
    %v4870 = vpack.c.b16 %v4802, %v4798
    %v4871 = vpack.c.b16 %v4803, %v4799
    %v4872 = vpack.c.b16 %v4804, %v4800
    %v4873 = vpack.c.b16 %v4805, %v4801
    %v4874 = vpack.c.b16 %v4810, %v4806
    %v4875 = vpack.c.b16 %v4811, %v4807
    %v4876 = vpack.c.b16 %v4812, %v4808
    %v4877 = vpack.c.b16 %v4813, %v4809
    %4942 = vmatpush.bf16.msra.mxu0 %v4842
    %4943 = vmatpush.bf16.msra.mxu0 %v4838
    %4944 = vmatpush.bf16.msra.mxu0 %v4834
    %4945 = vmatpush.bf16.msra.mxu0 %v4830
    %4946 = vmatpush.bf16.msra.mxu0 %v4826
    %4947 = vmatpush.bf16.msra.mxu0 %v4822
    %4948 = vmatpush.bf16.msra.mxu0 %v4818
    %4949 = vmatpush.bf16.msra.mxu0 %v4814
    %4950 = vmatmul.bf16.gmra.mxu0 %v4611
    %v4951 = vpop.f32.mrf.mxu0
    %v4952 = vadd.f32 %v4614, %v4951
    %v4953 = vpop.f32.mrf.mxu0
    %v4954 = vadd.f32 %v4614, %v4953
    %4955 = vdwg.mxu0
    %4956 = vmatpush.bf16.msra.mxu0 %v4874
    %4957 = vmatpush.bf16.msra.mxu0 %v4870
    %4958 = vmatpush.bf16.msra.mxu0 %v4866
    %4959 = vmatpush.bf16.msra.mxu0 %v4862
    %4960 = vmatpush.bf16.msra.mxu0 %v4858
    %4961 = vmatpush.bf16.msra.mxu0 %v4854
    %4962 = vmatpush.bf16.msra.mxu0 %v4850
    %4963 = vmatpush.bf16.msra.mxu0 %v4846
    %4964 = vmatmul.bf16.gmra.mxu0 %v4612
    %v4965 = vpop.f32.mrf.mxu0
    %v4966 = vadd.f32 %v4952, %v4965
    %v4967 = vpop.f32.mrf.mxu0
    %v4968 = vadd.f32 %v4954, %v4967
    %4969 = vdwg.mxu0
    %4970 = vmatpush.bf16.msra.mxu0 %v4843
    %4971 = vmatpush.bf16.msra.mxu0 %v4839
    %4972 = vmatpush.bf16.msra.mxu0 %v4835
    %4973 = vmatpush.bf16.msra.mxu0 %v4831
    %4974 = vmatpush.bf16.msra.mxu0 %v4827
    %4975 = vmatpush.bf16.msra.mxu0 %v4823
    %4976 = vmatpush.bf16.msra.mxu0 %v4819
    %4977 = vmatpush.bf16.msra.mxu0 %v4815
    %4978 = vmatmul.bf16.gmra.mxu0 %v4611
    %v4979 = vpop.f32.mrf.mxu0
    %v4980 = vadd.f32 %v4615, %v4979
    %v4981 = vpop.f32.mrf.mxu0
    %v4982 = vadd.f32 %v4615, %v4981
    %4983 = vdwg.mxu0
    %4984 = vmatpush.bf16.msra.mxu0 %v4875
    %4985 = vmatpush.bf16.msra.mxu0 %v4871
    %4986 = vmatpush.bf16.msra.mxu0 %v4867
    %4987 = vmatpush.bf16.msra.mxu0 %v4863
    %4988 = vmatpush.bf16.msra.mxu0 %v4859
    %4989 = vmatpush.bf16.msra.mxu0 %v4855
    %4990 = vmatpush.bf16.msra.mxu0 %v4851
    %4991 = vmatpush.bf16.msra.mxu0 %v4847
    %4992 = vmatmul.bf16.gmra.mxu0 %v4612
    %v4993 = vpop.f32.mrf.mxu0
    %v4994 = vadd.f32 %v4980, %v4993
    %v4995 = vpop.f32.mrf.mxu0
    %v4996 = vadd.f32 %v4982, %v4995
    %4997 = vdwg.mxu0
    %4998 = vmatpush.bf16.msra.mxu0 %v4844
    %4999 = vmatpush.bf16.msra.mxu0 %v4840
    %5000 = vmatpush.bf16.msra.mxu0 %v4836
    %5001 = vmatpush.bf16.msra.mxu0 %v4832
    %5002 = vmatpush.bf16.msra.mxu0 %v4828
    %5003 = vmatpush.bf16.msra.mxu0 %v4824
    %5004 = vmatpush.bf16.msra.mxu0 %v4820
    %5005 = vmatpush.bf16.msra.mxu0 %v4816
    %5006 = vmatmul.bf16.gmra.mxu0 %v4611
    %v5007 = vpop.f32.mrf.mxu0
    %v5008 = vadd.f32 %v4616, %v5007
    %v5009 = vpop.f32.mrf.mxu0
    %v5010 = vadd.f32 %v4616, %v5009
    %5011 = vdwg.mxu0
    %5012 = vmatpush.bf16.msra.mxu0 %v4876
    %5013 = vmatpush.bf16.msra.mxu0 %v4872
    %5014 = vmatpush.bf16.msra.mxu0 %v4868
    %5015 = vmatpush.bf16.msra.mxu0 %v4864
    %5016 = vmatpush.bf16.msra.mxu0 %v4860
    %5017 = vmatpush.bf16.msra.mxu0 %v4856
    %5018 = vmatpush.bf16.msra.mxu0 %v4852
    %5019 = vmatpush.bf16.msra.mxu0 %v4848
    %5020 = vmatmul.bf16.gmra.mxu0 %v4612
    %v5021 = vpop.f32.mrf.mxu0
    %v5022 = vadd.f32 %v5008, %v5021
    %v5023 = vpop.f32.mrf.mxu0
    %v5024 = vadd.f32 %v5010, %v5023
    %5025 = vdwg.mxu0
    %5026 = vmatpush.bf16.msra.mxu0 %v4845
    %5027 = vmatpush.bf16.msra.mxu0 %v4841
    %5028 = vmatpush.bf16.msra.mxu0 %v4837
    %5029 = vmatpush.bf16.msra.mxu0 %v4833
    %5030 = vmatpush.bf16.msra.mxu0 %v4829
    %5031 = vmatpush.bf16.msra.mxu0 %v4825
    %5032 = vmatpush.bf16.msra.mxu0 %v4821
    %5033 = vmatpush.bf16.msra.mxu0 %v4817
    %5034 = vmatmul.bf16.gmra.mxu0 %v4611
    %v5035 = vpop.f32.mrf.mxu0
    %v5036 = vadd.f32 %v4617, %v5035
    %v5037 = vpop.f32.mrf.mxu0
    %v5038 = vadd.f32 %v4617, %v5037
    %5039 = vdwg.mxu0
    %5040 = vmatpush.bf16.msra.mxu0 %v4877
    %5041 = vmatpush.bf16.msra.mxu0 %v4873
    %5042 = vmatpush.bf16.msra.mxu0 %v4869
    %5043 = vmatpush.bf16.msra.mxu0 %v4865
    %5044 = vmatpush.bf16.msra.mxu0 %v4861
    %5045 = vmatpush.bf16.msra.mxu0 %v4857
    %5046 = vmatpush.bf16.msra.mxu0 %v4853
    %5047 = vmatpush.bf16.msra.mxu0 %v4849
    %5048 = vmatmul.bf16.gmra.mxu0 %v4612
    %v5049 = vpop.f32.mrf.mxu0
    %v5050 = vadd.f32 %v5036, %v5049
    %v5051 = vpop.f32.mrf.mxu0
    %v5052 = vadd.f32 %v5038, %v5051
    %5053 = vdwg.mxu0
    %v5054 = vmul.f32 %v4966, 0.5
    %v5055 = vmul.f32 %v4994, 0.5
    %v5056 = vmul.f32 %v5022, 0.5
    %v5057 = vmul.f32 %v5050, 0.5
    %v5058 = vmul.f32 %v4968, 0.5
    %v5059 = vmul.f32 %v4996, 0.5
    %v5060 = vmul.f32 %v5024, 0.5
    %v5061 = vmul.f32 %v5052, 0.5
    %v5062 = vmul.f32 %v4966, 0.70710677
    %v5063 = vmul.f32 %v4994, 0.70710677
    %v5064 = vmul.f32 %v5022, 0.70710677
    %v5065 = vmul.f32 %v5050, 0.70710677
    %v5066 = vmul.f32 %v4968, 0.70710677
    %v5067 = vmul.f32 %v4996, 0.70710677
    %v5068 = vmul.f32 %v5024, 0.70710677
    %v5069 = vmul.f32 %v5052, 0.70710677
    %v5070 = vand.u32 2147483647, %v5062
    %v5071 = vand.u32 2147483647, %v5063
    %v5072 = vand.u32 2147483647, %v5064
    %v5073 = vand.u32 2147483647, %v5065
    %v5074 = vand.u32 2147483647, %v5066
    %v5075 = vand.u32 2147483647, %v5067
    %v5076 = vand.u32 2147483647, %v5068
    %v5077 = vand.u32 2147483647, %v5069
    %v5078 = vmul.f32 %v5070, 0.3275911
    %v5079 = vmul.f32 %v5071, 0.3275911
    %v5080 = vmul.f32 %v5072, 0.3275911
    %v5081 = vmul.f32 %v5073, 0.3275911
    %v5082 = vmul.f32 %v5074, 0.3275911
    %v5083 = vmul.f32 %v5075, 0.3275911
    %v5084 = vmul.f32 %v5076, 0.3275911
    %v5085 = vmul.f32 %v5077, 0.3275911
    %v5086 = vadd.f32 %v5078, 1.0
    %v5087 = vadd.f32 %v5079, 1.0
    %v5088 = vadd.f32 %v5080, 1.0
    %v5089 = vadd.f32 %v5081, 1.0
    %v5090 = vadd.f32 %v5082, 1.0
    %v5091 = vadd.f32 %v5083, 1.0
    %v5092 = vadd.f32 %v5084, 1.0
    %v5093 = vadd.f32 %v5085, 1.0
    %v5094 = vrcp.pop %v5086
    %v5095 = vmul.f32 %v5086, %v5094
    %v5096 = vsub.f32 1.0, %v5095
    %v5097 = vmul.f32 %v5094, %v5096
    %v5098 = vadd.f32 %v5094, %v5097
    %vm5099 = vweird.f32 %v5086
    %vm5100 = vweird.f32 %v5094
    %vm5101 = vmor %vm5099, %vm5100
    %v5102 = vsel %vm5101, %v5094, %v5098
    %v5103 = vand.u32 2147483647, %v5086
    %vm5104 = vcmp.eq.f32.partialorder %v5103, 8.507059e+37
    %v5105 = vand.u32 %v5086, 2147483648
    %v5106 = vor.u32 1.1754944e-38, %v5105
    %v5107 = vsel %vm5104, %v5106, %v5102
    %v5108 = vmul.f32 1.0, %v5107
    %v5109 = vrcp.pop %v5087
    %v5110 = vmul.f32 %v5087, %v5109
    %v5111 = vsub.f32 1.0, %v5110
    %v5112 = vmul.f32 %v5109, %v5111
    %v5113 = vadd.f32 %v5109, %v5112
    %vm5114 = vweird.f32 %v5087
    %vm5115 = vweird.f32 %v5109
    %vm5116 = vmor %vm5114, %vm5115
    %v5117 = vsel %vm5116, %v5109, %v5113
    %v5118 = vand.u32 2147483647, %v5087
    %vm5119 = vcmp.eq.f32.partialorder %v5118, 8.507059e+37
    %v5120 = vand.u32 %v5087, 2147483648
    %v5121 = vor.u32 1.1754944e-38, %v5120
    %v5122 = vsel %vm5119, %v5121, %v5117
    %v5123 = vmul.f32 1.0, %v5122
    %v5124 = vrcp.pop %v5088
    %v5125 = vmul.f32 %v5088, %v5124
    %v5126 = vsub.f32 1.0, %v5125
    %v5127 = vmul.f32 %v5124, %v5126
    %v5128 = vadd.f32 %v5124, %v5127
    %vm5129 = vweird.f32 %v5088
    %vm5130 = vweird.f32 %v5124
    %vm5131 = vmor %vm5129, %vm5130
    %v5132 = vsel %vm5131, %v5124, %v5128
    %v5133 = vand.u32 2147483647, %v5088
    %vm5134 = vcmp.eq.f32.partialorder %v5133, 8.507059e+37
    %v5135 = vand.u32 %v5088, 2147483648
    %v5136 = vor.u32 1.1754944e-38, %v5135
    %v5137 = vsel %vm5134, %v5136, %v5132
    %v5138 = vmul.f32 1.0, %v5137
    %v5139 = vrcp.pop %v5089
    %v5140 = vmul.f32 %v5089, %v5139
    %v5141 = vsub.f32 1.0, %v5140
    %v5142 = vmul.f32 %v5139, %v5141
    %v5143 = vadd.f32 %v5139, %v5142
    %vm5144 = vweird.f32 %v5089
    %vm5145 = vweird.f32 %v5139
    %vm5146 = vmor %vm5144, %vm5145
    %v5147 = vsel %vm5146, %v5139, %v5143
    %v5148 = vand.u32 2147483647, %v5089
    %vm5149 = vcmp.eq.f32.partialorder %v5148, 8.507059e+37
    %v5150 = vand.u32 %v5089, 2147483648
    %v5151 = vor.u32 1.1754944e-38, %v5150
    %v5152 = vsel %vm5149, %v5151, %v5147
    %v5153 = vmul.f32 1.0, %v5152
    %v5154 = vrcp.pop %v5090
    %v5155 = vmul.f32 %v5090, %v5154
    %v5156 = vsub.f32 1.0, %v5155
    %v5157 = vmul.f32 %v5154, %v5156
    %v5158 = vadd.f32 %v5154, %v5157
    %vm5159 = vweird.f32 %v5090
    %vm5160 = vweird.f32 %v5154
    %vm5161 = vmor %vm5159, %vm5160
    %v5162 = vsel %vm5161, %v5154, %v5158
    %v5163 = vand.u32 2147483647, %v5090
    %vm5164 = vcmp.eq.f32.partialorder %v5163, 8.507059e+37
    %v5165 = vand.u32 %v5090, 2147483648
    %v5166 = vor.u32 1.1754944e-38, %v5165
    %v5167 = vsel %vm5164, %v5166, %v5162
    %v5168 = vmul.f32 1.0, %v5167
    %v5169 = vrcp.pop %v5091
    %v5170 = vmul.f32 %v5091, %v5169
    %v5171 = vsub.f32 1.0, %v5170
    %v5172 = vmul.f32 %v5169, %v5171
    %v5173 = vadd.f32 %v5169, %v5172
    %vm5174 = vweird.f32 %v5091
    %vm5175 = vweird.f32 %v5169
    %vm5176 = vmor %vm5174, %vm5175
    %v5177 = vsel %vm5176, %v5169, %v5173
    %v5178 = vand.u32 2147483647, %v5091
    %vm5179 = vcmp.eq.f32.partialorder %v5178, 8.507059e+37
    %v5180 = vand.u32 %v5091, 2147483648
    %v5181 = vor.u32 1.1754944e-38, %v5180
    %v5182 = vsel %vm5179, %v5181, %v5177
    %v5183 = vmul.f32 1.0, %v5182
    %v5184 = vrcp.pop %v5092
    %v5185 = vmul.f32 %v5092, %v5184
    %v5186 = vsub.f32 1.0, %v5185
    %v5187 = vmul.f32 %v5184, %v5186
    %v5188 = vadd.f32 %v5184, %v5187
    %vm5189 = vweird.f32 %v5092
    %vm5190 = vweird.f32 %v5184
    %vm5191 = vmor %vm5189, %vm5190
    %v5192 = vsel %vm5191, %v5184, %v5188
    %v5193 = vand.u32 2147483647, %v5092
    %vm5194 = vcmp.eq.f32.partialorder %v5193, 8.507059e+37
    %v5195 = vand.u32 %v5092, 2147483648
    %v5196 = vor.u32 1.1754944e-38, %v5195
    %v5197 = vsel %vm5194, %v5196, %v5192
    %v5198 = vmul.f32 1.0, %v5197
    %v5199 = vrcp.pop %v5093
    %v5200 = vmul.f32 %v5093, %v5199
    %v5201 = vsub.f32 1.0, %v5200
    %v5202 = vmul.f32 %v5199, %v5201
    %v5203 = vadd.f32 %v5199, %v5202
    %vm5204 = vweird.f32 %v5093
    %vm5205 = vweird.f32 %v5199
    %vm5206 = vmor %vm5204, %vm5205
    %v5207 = vsel %vm5206, %v5199, %v5203
    %v5208 = vand.u32 2147483647, %v5093
    %vm5209 = vcmp.eq.f32.partialorder %v5208, 8.507059e+37
    %v5210 = vand.u32 %v5093, 2147483648
    %v5211 = vor.u32 1.1754944e-38, %v5210
    %v5212 = vsel %vm5209, %v5211, %v5207
    %v5213 = vmul.f32 1.0, %v5212
    %v5214 = vmul.f32 %v5108, 1.0614054
    %v5215 = vmul.f32 %v5123, 1.0614054
    %v5216 = vmul.f32 %v5138, 1.0614054
    %v5217 = vmul.f32 %v5153, 1.0614054
    %v5218 = vmul.f32 %v5168, 1.0614054
    %v5219 = vmul.f32 %v5183, 1.0614054
    %v5220 = vmul.f32 %v5198, 1.0614054
    %v5221 = vmul.f32 %v5213, 1.0614054
    %v5222 = vadd.f32 %v5214, -1.4531521
    %v5223 = vadd.f32 %v5215, -1.4531521
    %v5224 = vadd.f32 %v5216, -1.4531521
    %v5225 = vadd.f32 %v5217, -1.4531521
    %v5226 = vadd.f32 %v5218, -1.4531521
    %v5227 = vadd.f32 %v5219, -1.4531521
    %v5228 = vadd.f32 %v5220, -1.4531521
    %v5229 = vadd.f32 %v5221, -1.4531521
    %v5230 = vmul.f32 %v5108, %v5222
    %v5231 = vmul.f32 %v5123, %v5223
    %v5232 = vmul.f32 %v5138, %v5224
    %v5233 = vmul.f32 %v5153, %v5225
    %v5234 = vmul.f32 %v5168, %v5226
    %v5235 = vmul.f32 %v5183, %v5227
    %v5236 = vmul.f32 %v5198, %v5228
    %v5237 = vmul.f32 %v5213, %v5229
    %v5238 = vadd.f32 %v5230, 1.4214138
    %v5239 = vadd.f32 %v5231, 1.4214138
    %v5240 = vadd.f32 %v5232, 1.4214138
    %v5241 = vadd.f32 %v5233, 1.4214138
    %v5242 = vadd.f32 %v5234, 1.4214138
    %v5243 = vadd.f32 %v5235, 1.4214138
    %v5244 = vadd.f32 %v5236, 1.4214138
    %v5245 = vadd.f32 %v5237, 1.4214138
    %v5246 = vmul.f32 %v5108, %v5238
    %v5247 = vmul.f32 %v5123, %v5239
    %v5248 = vmul.f32 %v5138, %v5240
    %v5249 = vmul.f32 %v5153, %v5241
    %v5250 = vmul.f32 %v5168, %v5242
    %v5251 = vmul.f32 %v5183, %v5243
    %v5252 = vmul.f32 %v5198, %v5244
    %v5253 = vmul.f32 %v5213, %v5245
    %v5254 = vadd.f32 %v5246, -0.28449672
    %v5255 = vadd.f32 %v5247, -0.28449672
    %v5256 = vadd.f32 %v5248, -0.28449672
    %v5257 = vadd.f32 %v5249, -0.28449672
    %v5258 = vadd.f32 %v5250, -0.28449672
    %v5259 = vadd.f32 %v5251, -0.28449672
    %v5260 = vadd.f32 %v5252, -0.28449672
    %v5261 = vadd.f32 %v5253, -0.28449672
    %v5262 = vmul.f32 %v5108, %v5254
    %v5263 = vmul.f32 %v5123, %v5255
    %v5264 = vmul.f32 %v5138, %v5256
    %v5265 = vmul.f32 %v5153, %v5257
    %v5266 = vmul.f32 %v5168, %v5258
    %v5267 = vmul.f32 %v5183, %v5259
    %v5268 = vmul.f32 %v5198, %v5260
    %v5269 = vmul.f32 %v5213, %v5261
    %v5270 = vadd.f32 %v5262, 0.2548296
    %v5271 = vadd.f32 %v5263, 0.2548296
    %v5272 = vadd.f32 %v5264, 0.2548296
    %v5273 = vadd.f32 %v5265, 0.2548296
    %v5274 = vadd.f32 %v5266, 0.2548296
    %v5275 = vadd.f32 %v5267, 0.2548296
    %v5276 = vadd.f32 %v5268, 0.2548296
    %v5277 = vadd.f32 %v5269, 0.2548296
    %v5278 = vmul.f32 %v5108, %v5270
    %v5279 = vmul.f32 %v5123, %v5271
    %v5280 = vmul.f32 %v5138, %v5272
    %v5281 = vmul.f32 %v5153, %v5273
    %v5282 = vmul.f32 %v5168, %v5274
    %v5283 = vmul.f32 %v5183, %v5275
    %v5284 = vmul.f32 %v5198, %v5276
    %v5285 = vmul.f32 %v5213, %v5277
    %v5286 = vsub.f32 0.0, %v5070
    %v5287 = vsub.f32 0.0, %v5071
    %v5288 = vsub.f32 0.0, %v5072
    %v5289 = vsub.f32 0.0, %v5073
    %v5290 = vsub.f32 0.0, %v5074
    %v5291 = vsub.f32 0.0, %v5075
    %v5292 = vsub.f32 0.0, %v5076
    %v5293 = vsub.f32 0.0, %v5077
    %v5294 = vmul.f32 %v5286, %v5070
    %v5295 = vmul.f32 %v5287, %v5071
    %v5296 = vmul.f32 %v5288, %v5072
    %v5297 = vmul.f32 %v5289, %v5073
    %v5298 = vmul.f32 %v5290, %v5074
    %v5299 = vmul.f32 %v5291, %v5075
    %v5300 = vmul.f32 %v5292, %v5076
    %v5301 = vmul.f32 %v5293, %v5077
    %v5302 = vmul.f32 %v5294, 1.442695
    %v5303 = vpow.pop %v5302
    %v5304 = vmul.f32 %v5295, 1.442695
    %v5305 = vpow.pop %v5304
    %v5306 = vmul.f32 %v5296, 1.442695
    %v5307 = vpow.pop %v5306
    %v5308 = vmul.f32 %v5297, 1.442695
    %v5309 = vpow.pop %v5308
    %v5310 = vmul.f32 %v5298, 1.442695
    %v5311 = vpow.pop %v5310
    %v5312 = vmul.f32 %v5299, 1.442695
    %v5313 = vpow.pop %v5312
    %v5314 = vmul.f32 %v5300, 1.442695
    %v5315 = vpow.pop %v5314
    %v5316 = vmul.f32 %v5301, 1.442695
    %v5317 = vpow.pop %v5316
    %v5318 = vmul.f32 %v5278, %v5303
    %v5319 = vmul.f32 %v5279, %v5305
    %v5320 = vmul.f32 %v5280, %v5307
    %v5321 = vmul.f32 %v5281, %v5309
    %v5322 = vmul.f32 %v5282, %v5311
    %v5323 = vmul.f32 %v5283, %v5313
    %v5324 = vmul.f32 %v5284, %v5315
    %v5325 = vmul.f32 %v5285, %v5317
    %v5326 = vsub.f32 1.0, %v5318
    %v5327 = vsub.f32 1.0, %v5319
    %v5328 = vsub.f32 1.0, %v5320
    %v5329 = vsub.f32 1.0, %v5321
    %v5330 = vsub.f32 1.0, %v5322
    %v5331 = vsub.f32 1.0, %v5323
    %v5332 = vsub.f32 1.0, %v5324
    %v5333 = vsub.f32 1.0, %v5325
    %vm5334 = vcmp.ge.f32.partialorder %v5062, 0.0
    %vm5335 = vcmp.ge.f32.partialorder %v5063, 0.0
    %vm5336 = vcmp.ge.f32.partialorder %v5064, 0.0
    %vm5337 = vcmp.ge.f32.partialorder %v5065, 0.0
    %vm5338 = vcmp.ge.f32.partialorder %v5066, 0.0
    %vm5339 = vcmp.ge.f32.partialorder %v5067, 0.0
    %vm5340 = vcmp.ge.f32.partialorder %v5068, 0.0
    %vm5341 = vcmp.ge.f32.partialorder %v5069, 0.0
    %v5342 = vsub.f32 0.0, %v5326
    %v5343 = vsub.f32 0.0, %v5327
    %v5344 = vsub.f32 0.0, %v5328
    %v5345 = vsub.f32 0.0, %v5329
    %v5346 = vsub.f32 0.0, %v5330
    %v5347 = vsub.f32 0.0, %v5331
    %v5348 = vsub.f32 0.0, %v5332
    %v5349 = vsub.f32 0.0, %v5333
    %v5350 = vsel %vm5334, %v5326, %v5342
    %v5351 = vsel %vm5335, %v5327, %v5343
    %v5352 = vsel %vm5336, %v5328, %v5344
    %v5353 = vsel %vm5337, %v5329, %v5345
    %v5354 = vsel %vm5338, %v5330, %v5346
    %v5355 = vsel %vm5339, %v5331, %v5347
    %v5356 = vsel %vm5340, %v5332, %v5348
    %v5357 = vsel %vm5341, %v5333, %v5349
    %v5358 = vadd.f32 %v5350, 1.0
    %v5359 = vadd.f32 %v5351, 1.0
    %v5360 = vadd.f32 %v5352, 1.0
    %v5361 = vadd.f32 %v5353, 1.0
    %v5362 = vadd.f32 %v5354, 1.0
    %v5363 = vadd.f32 %v5355, 1.0
    %v5364 = vadd.f32 %v5356, 1.0
    %v5365 = vadd.f32 %v5357, 1.0
    %v5366 = vmul.f32 %v5054, %v5358
    %v5367 = vmul.f32 %v5055, %v5359
    %v5368 = vmul.f32 %v5056, %v5360
    %v5369 = vmul.f32 %v5057, %v5361
    %v5370 = vmul.f32 %v5058, %v5362
    %v5371 = vmul.f32 %v5059, %v5363
    %v5372 = vmul.f32 %v5060, %v5364
    %v5373 = vmul.f32 %v5061, %v5365
    %s5374 = scalar_lea.vmem [#allocation17], 512
    %v5375 = vld [vmem:[%s5374] sm:$0xff]
    %v5376 = vld [vmem:[%s5374 + $0x8] sm:$0xff]
    %v5377 = vld [vmem:[%s5374 + $0x10] sm:$0xff]
    %v5378 = vld [vmem:[%s5374 + $0x18] sm:$0xff]
    %v5379 = vld [vmem:[%s5374 + $0x20] sm:$0xff]
    %v5380 = vld [vmem:[%s5374 + $0x28] sm:$0xff]
    %v5381 = vld [vmem:[%s5374 + $0x30] sm:$0xff]
    %v5382 = vld [vmem:[%s5374 + $0x38] sm:$0xff]
    %v5383 = vld [vmem:[%s5374 + $0x40] sm:$0xff]
    %v5384 = vld [vmem:[%s5374 + $0x48] sm:$0xff]
    %v5385 = vld [vmem:[%s5374 + $0x50] sm:$0xff]
    %v5386 = vld [vmem:[%s5374 + $0x58] sm:$0xff]
    %v5387 = vld [vmem:[%s5374 + $0x60] sm:$0xff]
    %v5388 = vld [vmem:[%s5374 + $0x68] sm:$0xff]
    %v5389 = vld [vmem:[%s5374 + $0x70] sm:$0xff]
    %v5390 = vld [vmem:[%s5374 + $0x78] sm:$0xff]
    %v5391 = vld [vmem:[%s5374 + $0x80] sm:$0xff]
    %v5392 = vld [vmem:[%s5374 + $0x88] sm:$0xff]
    %v5393 = vld [vmem:[%s5374 + $0x90] sm:$0xff]
    %v5394 = vld [vmem:[%s5374 + $0x98] sm:$0xff]
    %v5395 = vld [vmem:[%s5374 + $0xa0] sm:$0xff]
    %v5396 = vld [vmem:[%s5374 + $0xa8] sm:$0xff]
    %v5397 = vld [vmem:[%s5374 + $0xb0] sm:$0xff]
    %v5398 = vld [vmem:[%s5374 + $0xb8] sm:$0xff]
    %v5399 = vld [vmem:[%s5374 + $0xc0] sm:$0xff]
    %v5400 = vld [vmem:[%s5374 + $0xc8] sm:$0xff]
    %v5401 = vld [vmem:[%s5374 + $0xd0] sm:$0xff]
    %v5402 = vld [vmem:[%s5374 + $0xd8] sm:$0xff]
    %v5403 = vld [vmem:[%s5374 + $0xe0] sm:$0xff]
    %v5404 = vld [vmem:[%s5374 + $0xe8] sm:$0xff]
    %v5405 = vld [vmem:[%s5374 + $0xf0] sm:$0xff]
    %v5406 = vld [vmem:[%s5374 + $0xf8] sm:$0xff]
    %v5407 = vld [vmem:[%s5374 + $0x100] sm:$0xff]
    %v5408 = vld [vmem:[%s5374 + $0x108] sm:$0xff]
    %v5409 = vld [vmem:[%s5374 + $0x110] sm:$0xff]
    %v5410 = vld [vmem:[%s5374 + $0x118] sm:$0xff]
    %v5411 = vld [vmem:[%s5374 + $0x120] sm:$0xff]
    %v5412 = vld [vmem:[%s5374 + $0x128] sm:$0xff]
    %v5413 = vld [vmem:[%s5374 + $0x130] sm:$0xff]
    %v5414 = vld [vmem:[%s5374 + $0x138] sm:$0xff]
    %v5415 = vld [vmem:[%s5374 + $0x140] sm:$0xff]
    %v5416 = vld [vmem:[%s5374 + $0x148] sm:$0xff]
    %v5417 = vld [vmem:[%s5374 + $0x150] sm:$0xff]
    %v5418 = vld [vmem:[%s5374 + $0x158] sm:$0xff]
    %v5419 = vld [vmem:[%s5374 + $0x160] sm:$0xff]
    %v5420 = vld [vmem:[%s5374 + $0x168] sm:$0xff]
    %v5421 = vld [vmem:[%s5374 + $0x170] sm:$0xff]
    %v5422 = vld [vmem:[%s5374 + $0x178] sm:$0xff]
    %v5423 = vld [vmem:[%s5374 + $0x180] sm:$0xff]
    %v5424 = vld [vmem:[%s5374 + $0x188] sm:$0xff]
    %v5425 = vld [vmem:[%s5374 + $0x190] sm:$0xff]
    %v5426 = vld [vmem:[%s5374 + $0x198] sm:$0xff]
    %v5427 = vld [vmem:[%s5374 + $0x1a0] sm:$0xff]
    %v5428 = vld [vmem:[%s5374 + $0x1a8] sm:$0xff]
    %v5429 = vld [vmem:[%s5374 + $0x1b0] sm:$0xff]
    %v5430 = vld [vmem:[%s5374 + $0x1b8] sm:$0xff]
    %v5431 = vld [vmem:[%s5374 + $0x1c0] sm:$0xff]
    %v5432 = vld [vmem:[%s5374 + $0x1c8] sm:$0xff]
    %v5433 = vld [vmem:[%s5374 + $0x1d0] sm:$0xff]
    %v5434 = vld [vmem:[%s5374 + $0x1d8] sm:$0xff]
    %v5435 = vld [vmem:[%s5374 + $0x1e0] sm:$0xff]
    %v5436 = vld [vmem:[%s5374 + $0x1e8] sm:$0xff]
    %v5437 = vld [vmem:[%s5374 + $0x1f0] sm:$0xff]
    %v5438 = vld [vmem:[%s5374 + $0x1f8] sm:$0xff]
    %v5439 = vpack.c.bf16 %v5370, %v5366
    %v5440 = vpack.c.bf16 %v5371, %v5367
    %v5441 = vpack.c.bf16 %v5372, %v5368
    %v5442 = vpack.c.bf16 %v5373, %v5369
    %v5507 = vunpack.c.l.b16 %v5375
    %v5508 = vunpack.c.h.b16 %v5375
    %v5509 = vunpack.c.l.b16 %v5376
    %v5510 = vunpack.c.h.b16 %v5376
    %v5511 = vunpack.c.l.b16 %v5377
    %v5512 = vunpack.c.h.b16 %v5377
    %v5513 = vunpack.c.l.b16 %v5378
    %v5514 = vunpack.c.h.b16 %v5378
    %v5515 = vunpack.c.l.b16 %v5379
    %v5516 = vunpack.c.h.b16 %v5379
    %v5517 = vunpack.c.l.b16 %v5380
    %v5518 = vunpack.c.h.b16 %v5380
    %v5519 = vunpack.c.l.b16 %v5381
    %v5520 = vunpack.c.h.b16 %v5381
    %v5521 = vunpack.c.l.b16 %v5382
    %v5522 = vunpack.c.h.b16 %v5382
    %v5523 = vunpack.c.l.b16 %v5383
    %v5524 = vunpack.c.h.b16 %v5383
    %v5525 = vunpack.c.l.b16 %v5384
    %v5526 = vunpack.c.h.b16 %v5384
    %v5527 = vunpack.c.l.b16 %v5385
    %v5528 = vunpack.c.h.b16 %v5385
    %v5529 = vunpack.c.l.b16 %v5386
    %v5530 = vunpack.c.h.b16 %v5386
    %v5531 = vunpack.c.l.b16 %v5387
    %v5532 = vunpack.c.h.b16 %v5387
    %v5533 = vunpack.c.l.b16 %v5388
    %v5534 = vunpack.c.h.b16 %v5388
    %v5535 = vunpack.c.l.b16 %v5389
    %v5536 = vunpack.c.h.b16 %v5389
    %v5537 = vunpack.c.l.b16 %v5390
    %v5538 = vunpack.c.h.b16 %v5390
    %v5539 = vunpack.c.l.b16 %v5391
    %v5540 = vunpack.c.h.b16 %v5391
    %v5541 = vunpack.c.l.b16 %v5392
    %v5542 = vunpack.c.h.b16 %v5392
    %v5543 = vunpack.c.l.b16 %v5393
    %v5544 = vunpack.c.h.b16 %v5393
    %v5545 = vunpack.c.l.b16 %v5394
    %v5546 = vunpack.c.h.b16 %v5394
    %v5547 = vunpack.c.l.b16 %v5395
    %v5548 = vunpack.c.h.b16 %v5395
    %v5549 = vunpack.c.l.b16 %v5396
    %v5550 = vunpack.c.h.b16 %v5396
    %v5551 = vunpack.c.l.b16 %v5397
    %v5552 = vunpack.c.h.b16 %v5397
    %v5553 = vunpack.c.l.b16 %v5398
    %v5554 = vunpack.c.h.b16 %v5398
    %v5555 = vunpack.c.l.b16 %v5399
    %v5556 = vunpack.c.h.b16 %v5399
    %v5557 = vunpack.c.l.b16 %v5400
    %v5558 = vunpack.c.h.b16 %v5400
    %v5559 = vunpack.c.l.b16 %v5401
    %v5560 = vunpack.c.h.b16 %v5401
    %v5561 = vunpack.c.l.b16 %v5402
    %v5562 = vunpack.c.h.b16 %v5402
    %v5563 = vunpack.c.l.b16 %v5403
    %v5564 = vunpack.c.h.b16 %v5403
    %v5565 = vunpack.c.l.b16 %v5404
    %v5566 = vunpack.c.h.b16 %v5404
    %v5567 = vunpack.c.l.b16 %v5405
    %v5568 = vunpack.c.h.b16 %v5405
    %v5569 = vunpack.c.l.b16 %v5406
    %v5570 = vunpack.c.h.b16 %v5406
    %v5571 = vunpack.c.l.b16 %v5407
    %v5572 = vunpack.c.h.b16 %v5407
    %v5573 = vunpack.c.l.b16 %v5408
    %v5574 = vunpack.c.h.b16 %v5408
    %v5575 = vunpack.c.l.b16 %v5409
    %v5576 = vunpack.c.h.b16 %v5409
    %v5577 = vunpack.c.l.b16 %v5410
    %v5578 = vunpack.c.h.b16 %v5410
    %v5579 = vunpack.c.l.b16 %v5411
    %v5580 = vunpack.c.h.b16 %v5411
    %v5581 = vunpack.c.l.b16 %v5412
    %v5582 = vunpack.c.h.b16 %v5412
    %v5583 = vunpack.c.l.b16 %v5413
    %v5584 = vunpack.c.h.b16 %v5413
    %v5585 = vunpack.c.l.b16 %v5414
    %v5586 = vunpack.c.h.b16 %v5414
    %v5587 = vunpack.c.l.b16 %v5415
    %v5588 = vunpack.c.h.b16 %v5415
    %v5589 = vunpack.c.l.b16 %v5416
    %v5590 = vunpack.c.h.b16 %v5416
    %v5591 = vunpack.c.l.b16 %v5417
    %v5592 = vunpack.c.h.b16 %v5417
    %v5593 = vunpack.c.l.b16 %v5418
    %v5594 = vunpack.c.h.b16 %v5418
    %v5595 = vunpack.c.l.b16 %v5419
    %v5596 = vunpack.c.h.b16 %v5419
    %v5597 = vunpack.c.l.b16 %v5420
    %v5598 = vunpack.c.h.b16 %v5420
    %v5599 = vunpack.c.l.b16 %v5421
    %v5600 = vunpack.c.h.b16 %v5421
    %v5601 = vunpack.c.l.b16 %v5422
    %v5602 = vunpack.c.h.b16 %v5422
    %v5603 = vunpack.c.l.b16 %v5423
    %v5604 = vunpack.c.h.b16 %v5423
    %v5605 = vunpack.c.l.b16 %v5424
    %v5606 = vunpack.c.h.b16 %v5424
    %v5607 = vunpack.c.l.b16 %v5425
    %v5608 = vunpack.c.h.b16 %v5425
    %v5609 = vunpack.c.l.b16 %v5426
    %v5610 = vunpack.c.h.b16 %v5426
    %v5611 = vunpack.c.l.b16 %v5427
    %v5612 = vunpack.c.h.b16 %v5427
    %v5613 = vunpack.c.l.b16 %v5428
    %v5614 = vunpack.c.h.b16 %v5428
    %v5615 = vunpack.c.l.b16 %v5429
    %v5616 = vunpack.c.h.b16 %v5429
    %v5617 = vunpack.c.l.b16 %v5430
    %v5618 = vunpack.c.h.b16 %v5430
    %v5619 = vunpack.c.l.b16 %v5431
    %v5620 = vunpack.c.h.b16 %v5431
    %v5621 = vunpack.c.l.b16 %v5432
    %v5622 = vunpack.c.h.b16 %v5432
    %v5623 = vunpack.c.l.b16 %v5433
    %v5624 = vunpack.c.h.b16 %v5433
    %v5625 = vunpack.c.l.b16 %v5434
    %v5626 = vunpack.c.h.b16 %v5434
    %v5627 = vunpack.c.l.b16 %v5435
    %v5628 = vunpack.c.h.b16 %v5435
    %v5629 = vunpack.c.l.b16 %v5436
    %v5630 = vunpack.c.h.b16 %v5436
    %v5631 = vunpack.c.l.b16 %v5437
    %v5632 = vunpack.c.h.b16 %v5437
    %v5633 = vunpack.c.l.b16 %v5438
    %v5634 = vunpack.c.h.b16 %v5438
    %v5635 = vpack.c.b16 %v5509, %v5507
    %v5636 = vpack.c.b16 %v5510, %v5508
    %v5637 = vpack.c.b16 %v5513, %v5511
    %v5638 = vpack.c.b16 %v5514, %v5512
    %v5639 = vpack.c.b16 %v5517, %v5515
    %v5640 = vpack.c.b16 %v5518, %v5516
    %v5641 = vpack.c.b16 %v5521, %v5519
    %v5642 = vpack.c.b16 %v5522, %v5520
    %v5643 = vpack.c.b16 %v5525, %v5523
    %v5644 = vpack.c.b16 %v5526, %v5524
    %v5645 = vpack.c.b16 %v5529, %v5527
    %v5646 = vpack.c.b16 %v5530, %v5528
    %v5647 = vpack.c.b16 %v5533, %v5531
    %v5648 = vpack.c.b16 %v5534, %v5532
    %v5649 = vpack.c.b16 %v5537, %v5535
    %v5650 = vpack.c.b16 %v5538, %v5536
    %v5651 = vpack.c.b16 %v5541, %v5539
    %v5652 = vpack.c.b16 %v5542, %v5540
    %v5653 = vpack.c.b16 %v5545, %v5543
    %v5654 = vpack.c.b16 %v5546, %v5544
    %v5655 = vpack.c.b16 %v5549, %v5547
    %v5656 = vpack.c.b16 %v5550, %v5548
    %v5657 = vpack.c.b16 %v5553, %v5551
    %v5658 = vpack.c.b16 %v5554, %v5552
    %v5659 = vpack.c.b16 %v5557, %v5555
    %v5660 = vpack.c.b16 %v5558, %v5556
    %v5661 = vpack.c.b16 %v5561, %v5559
    %v5662 = vpack.c.b16 %v5562, %v5560
    %v5663 = vpack.c.b16 %v5565, %v5563
    %v5664 = vpack.c.b16 %v5566, %v5564
    %v5665 = vpack.c.b16 %v5569, %v5567
    %v5666 = vpack.c.b16 %v5570, %v5568
    %v5667 = vpack.c.b16 %v5573, %v5571
    %v5668 = vpack.c.b16 %v5574, %v5572
    %v5669 = vpack.c.b16 %v5577, %v5575
    %v5670 = vpack.c.b16 %v5578, %v5576
    %v5671 = vpack.c.b16 %v5581, %v5579
    %v5672 = vpack.c.b16 %v5582, %v5580
    %v5673 = vpack.c.b16 %v5585, %v5583
    %v5674 = vpack.c.b16 %v5586, %v5584
    %v5675 = vpack.c.b16 %v5589, %v5587
    %v5676 = vpack.c.b16 %v5590, %v5588
    %v5677 = vpack.c.b16 %v5593, %v5591
    %v5678 = vpack.c.b16 %v5594, %v5592
    %v5679 = vpack.c.b16 %v5597, %v5595
    %v5680 = vpack.c.b16 %v5598, %v5596
    %v5681 = vpack.c.b16 %v5601, %v5599
    %v5682 = vpack.c.b16 %v5602, %v5600
    %v5683 = vpack.c.b16 %v5605, %v5603
    %v5684 = vpack.c.b16 %v5606, %v5604
    %v5685 = vpack.c.b16 %v5609, %v5607
    %v5686 = vpack.c.b16 %v5610, %v5608
    %v5687 = vpack.c.b16 %v5613, %v5611
    %v5688 = vpack.c.b16 %v5614, %v5612
    %v5689 = vpack.c.b16 %v5617, %v5615
    %v5690 = vpack.c.b16 %v5618, %v5616
    %v5691 = vpack.c.b16 %v5621, %v5619
    %v5692 = vpack.c.b16 %v5622, %v5620
    %v5693 = vpack.c.b16 %v5625, %v5623
    %v5694 = vpack.c.b16 %v5626, %v5624
    %v5695 = vpack.c.b16 %v5629, %v5627
    %v5696 = vpack.c.b16 %v5630, %v5628
    %v5697 = vpack.c.b16 %v5633, %v5631
    %v5698 = vpack.c.b16 %v5634, %v5632
    %5763 = vmatpush.bf16.msra.mxu0 %v5649
    %5764 = vmatpush.bf16.msra.mxu0 %v5647
    %5765 = vmatpush.bf16.msra.mxu0 %v5645
    %5766 = vmatpush.bf16.msra.mxu0 %v5643
    %5767 = vmatpush.bf16.msra.mxu0 %v5641
    %5768 = vmatpush.bf16.msra.mxu0 %v5639
    %5769 = vmatpush.bf16.msra.mxu0 %v5637
    %5770 = vmatpush.bf16.msra.mxu0 %v5635
    %5771 = vmatmul.bf16.gmra.mxu0 %v5439
    %v5772 = vpop.f32.mrf.mxu0
    %v5773 = vpop.f32.mrf.mxu0
    %v5774 = vadd.f32 0.0, %v5773
    %5775 = vdwg.mxu0
    %5776 = vmatpush.bf16.msra.mxu0 %v5665
    %5777 = vmatpush.bf16.msra.mxu0 %v5663
    %5778 = vmatpush.bf16.msra.mxu0 %v5661
    %5779 = vmatpush.bf16.msra.mxu0 %v5659
    %5780 = vmatpush.bf16.msra.mxu0 %v5657
    %5781 = vmatpush.bf16.msra.mxu0 %v5655
    %5782 = vmatpush.bf16.msra.mxu0 %v5653
    %5783 = vmatpush.bf16.msra.mxu0 %v5651
    %5784 = vmatmul.bf16.gmra.mxu0 %v5440
    %v5785 = vpop.f32.mrf.mxu0
    %v5786 = vpop.f32.mrf.mxu0
    %v5787 = vadd.f32 %v5774, %v5786
    %5788 = vdwg.mxu0
    %5789 = vmatpush.bf16.msra.mxu0 %v5681
    %5790 = vmatpush.bf16.msra.mxu0 %v5679
    %5791 = vmatpush.bf16.msra.mxu0 %v5677
    %5792 = vmatpush.bf16.msra.mxu0 %v5675
    %5793 = vmatpush.bf16.msra.mxu0 %v5673
    %5794 = vmatpush.bf16.msra.mxu0 %v5671
    %5795 = vmatpush.bf16.msra.mxu0 %v5669
    %5796 = vmatpush.bf16.msra.mxu0 %v5667
    %5797 = vmatmul.bf16.gmra.mxu0 %v5441
    %v5798 = vpop.f32.mrf.mxu0
    %v5799 = vpop.f32.mrf.mxu0
    %v5800 = vadd.f32 %v5787, %v5799
    %5801 = vdwg.mxu0
    %5802 = vmatpush.bf16.msra.mxu0 %v5697
    %5803 = vmatpush.bf16.msra.mxu0 %v5695
    %5804 = vmatpush.bf16.msra.mxu0 %v5693
    %5805 = vmatpush.bf16.msra.mxu0 %v5691
    %5806 = vmatpush.bf16.msra.mxu0 %v5689
    %5807 = vmatpush.bf16.msra.mxu0 %v5687
    %5808 = vmatpush.bf16.msra.mxu0 %v5685
    %5809 = vmatpush.bf16.msra.mxu0 %v5683
    %5810 = vmatmul.bf16.gmra.mxu0 %v5442
    %v5811 = vpop.f32.mrf.mxu0
    %v5812 = vpop.f32.mrf.mxu0
    %v5813 = vadd.f32 %v5800, %v5812
    %5814 = vdwg.mxu0
    %5815 = vmatpush.bf16.msra.mxu0 %v5650
    %5816 = vmatpush.bf16.msra.mxu0 %v5648
    %5817 = vmatpush.bf16.msra.mxu0 %v5646
    %5818 = vmatpush.bf16.msra.mxu0 %v5644
    %5819 = vmatpush.bf16.msra.mxu0 %v5642
    %5820 = vmatpush.bf16.msra.mxu0 %v5640
    %5821 = vmatpush.bf16.msra.mxu0 %v5638
    %5822 = vmatpush.bf16.msra.mxu0 %v5636
    %5823 = vmatmul.bf16.gmra.mxu0 %v5439
    %v5824 = vpop.f32.mrf.mxu0
    %v5825 = vpop.f32.mrf.mxu0
    %v5826 = vadd.f32 0.0, %v5825
    %5827 = vdwg.mxu0
    %5828 = vmatpush.bf16.msra.mxu0 %v5666
    %5829 = vmatpush.bf16.msra.mxu0 %v5664
    %5830 = vmatpush.bf16.msra.mxu0 %v5662
    %5831 = vmatpush.bf16.msra.mxu0 %v5660
    %5832 = vmatpush.bf16.msra.mxu0 %v5658
    %5833 = vmatpush.bf16.msra.mxu0 %v5656
    %5834 = vmatpush.bf16.msra.mxu0 %v5654
    %5835 = vmatpush.bf16.msra.mxu0 %v5652
    %5836 = vmatmul.bf16.gmra.mxu0 %v5440
    %v5837 = vpop.f32.mrf.mxu0
    %v5838 = vpop.f32.mrf.mxu0
    %v5839 = vadd.f32 %v5826, %v5838
    %5840 = vdwg.mxu0
    %5841 = vmatpush.bf16.msra.mxu0 %v5682
    %5842 = vmatpush.bf16.msra.mxu0 %v5680
    %5843 = vmatpush.bf16.msra.mxu0 %v5678
    %5844 = vmatpush.bf16.msra.mxu0 %v5676
    %5845 = vmatpush.bf16.msra.mxu0 %v5674
    %5846 = vmatpush.bf16.msra.mxu0 %v5672
    %5847 = vmatpush.bf16.msra.mxu0 %v5670
    %5848 = vmatpush.bf16.msra.mxu0 %v5668
    %5849 = vmatmul.bf16.gmra.mxu0 %v5441
    %v5850 = vpop.f32.mrf.mxu0
    %v5851 = vpop.f32.mrf.mxu0
    %v5852 = vadd.f32 %v5839, %v5851
    %5853 = vdwg.mxu0
    %5854 = vmatpush.bf16.msra.mxu0 %v5698
    %5855 = vmatpush.bf16.msra.mxu0 %v5696
    %5856 = vmatpush.bf16.msra.mxu0 %v5694
    %5857 = vmatpush.bf16.msra.mxu0 %v5692
    %5858 = vmatpush.bf16.msra.mxu0 %v5690
    %5859 = vmatpush.bf16.msra.mxu0 %v5688
    %5860 = vmatpush.bf16.msra.mxu0 %v5686
    %5861 = vmatpush.bf16.msra.mxu0 %v5684
    %5862 = vmatmul.bf16.gmra.mxu0 %v5442
    %v5863 = vpop.f32.mrf.mxu0
    %v5864 = vpop.f32.mrf.mxu0
    %v5865 = vadd.f32 %v5852, %v5864
    %5866 = vdwg.mxu0
    %v5867 = vadd.f32 %v4476, %v5813
    %v5868 = vadd.f32 %v4477, %v5865
    %v5870 = vperm.slane %v3221, 0
    %v5871 = vperm.slane %v3221, 1
    %v5874 = vadd.f32 %v5867, %v5870
    %v5875 = vadd.f32 %v5868, %v5871
    %s5876 = scalar_lea.vmem [#allocation11], 96
    %v5877 = vld [vmem:[%s5876] ss:$0 sm:$0xff]
    %v5878 = vld [vmem:[#allocation19] sm:$0xf]
    %v5879 = vld [vmem:[#allocation19 + $0x4] sm:$0xf]
    %v5880 = vld [vmem:[#allocation19 + $0x8] sm:$0xf]
    %v5881 = vld [vmem:[#allocation19 + $0xc] sm:$0xf]
    %v5882 = vld [vmem:[#allocation19 + $0x10] sm:$0xf]
    %v5883 = vld [vmem:[#allocation19 + $0x14] sm:$0xf]
    %v5884 = vld [vmem:[#allocation19 + $0x18] sm:$0xf]
    %v5885 = vld [vmem:[#allocation19 + $0x1c] sm:$0xf]
    %v5886 = vld [vmem:[#allocation19 + $0x20] sm:$0xf]
    %v5887 = vld [vmem:[#allocation19 + $0x24] sm:$0xf]
    %v5888 = vld [vmem:[#allocation19 + $0x28] sm:$0xf]
    %v5889 = vld [vmem:[#allocation19 + $0x2c] sm:$0xf]
    %v5890 = vld [vmem:[#allocation19 + $0x30] sm:$0xf]
    %v5891 = vld [vmem:[#allocation19 + $0x34] sm:$0xf]
    %v5892 = vld [vmem:[#allocation19 + $0x38] sm:$0xf]
    %v5893 = vld [vmem:[#allocation19 + $0x3c] sm:$0xf]
    %v5894 = vld [vmem:[#allocation19 + $0x40] sm:$0xf]
    %v5895 = vld [vmem:[#allocation19 + $0x44] sm:$0xf]
    %v5896 = vld [vmem:[#allocation19 + $0x48] sm:$0xf]
    %v5897 = vld [vmem:[#allocation19 + $0x4c] sm:$0xf]
    %v5898 = vld [vmem:[#allocation19 + $0x50] sm:$0xf]
    %v5899 = vld [vmem:[#allocation19 + $0x54] sm:$0xf]
    %v5900 = vld [vmem:[#allocation19 + $0x58] sm:$0xf]
    %v5901 = vld [vmem:[#allocation19 + $0x5c] sm:$0xf]
    %v5902 = vld [vmem:[#allocation19 + $0x60] sm:$0xf]
    %v5903 = vld [vmem:[#allocation19 + $0x64] sm:$0xf]
    %v5904 = vld [vmem:[#allocation19 + $0x68] sm:$0xf]
    %v5905 = vld [vmem:[#allocation19 + $0x6c] sm:$0xf]
    %v5906 = vld [vmem:[#allocation19 + $0x70] sm:$0xf]
    %v5907 = vld [vmem:[#allocation19 + $0x74] sm:$0xf]
    %v5908 = vld [vmem:[#allocation19 + $0x78] sm:$0xf]
    %v5909 = vld [vmem:[#allocation19 + $0x7c] sm:$0xf]
    %v5910 = vpack.c.bf16 %v5874, %v5874
    %v5911 = vpack.c.bf16 %v5875, %v5875
    %v5944 = vunpack.c.l.b16 %v5878
    %v5945 = vunpack.c.l.b16 %v5879
    %v5946 = vunpack.c.l.b16 %v5880
    %v5947 = vunpack.c.l.b16 %v5881
    %v5948 = vunpack.c.l.b16 %v5882
    %v5949 = vunpack.c.l.b16 %v5883
    %v5950 = vunpack.c.l.b16 %v5884
    %v5951 = vunpack.c.l.b16 %v5885
    %v5952 = vunpack.c.l.b16 %v5886
    %v5953 = vunpack.c.l.b16 %v5887
    %v5954 = vunpack.c.l.b16 %v5888
    %v5955 = vunpack.c.l.b16 %v5889
    %v5956 = vunpack.c.l.b16 %v5890
    %v5957 = vunpack.c.l.b16 %v5891
    %v5958 = vunpack.c.l.b16 %v5892
    %v5959 = vunpack.c.l.b16 %v5893
    %v5960 = vunpack.c.l.b16 %v5894
    %v5961 = vunpack.c.l.b16 %v5895
    %v5962 = vunpack.c.l.b16 %v5896
    %v5963 = vunpack.c.l.b16 %v5897
    %v5964 = vunpack.c.l.b16 %v5898
    %v5965 = vunpack.c.l.b16 %v5899
    %v5966 = vunpack.c.l.b16 %v5900
    %v5967 = vunpack.c.l.b16 %v5901
    %v5968 = vunpack.c.l.b16 %v5902
    %v5969 = vunpack.c.l.b16 %v5903
    %v5970 = vunpack.c.l.b16 %v5904
    %v5971 = vunpack.c.l.b16 %v5905
    %v5972 = vunpack.c.l.b16 %v5906
    %v5973 = vunpack.c.l.b16 %v5907
    %v5974 = vunpack.c.l.b16 %v5908
    %v5975 = vunpack.c.l.b16 %v5909
    %v5976 = vpack.c.b16 %v5945, %v5944
    %v5977 = vpack.c.b16 %v5947, %v5946
    %v5978 = vpack.c.b16 %v5949, %v5948
    %v5979 = vpack.c.b16 %v5951, %v5950
    %v5980 = vpack.c.b16 %v5953, %v5952
    %v5981 = vpack.c.b16 %v5955, %v5954
    %v5982 = vpack.c.b16 %v5957, %v5956
    %v5983 = vpack.c.b16 %v5959, %v5958
    %v5984 = vpack.c.b16 %v5961, %v5960
    %v5985 = vpack.c.b16 %v5963, %v5962
    %v5986 = vpack.c.b16 %v5965, %v5964
    %v5987 = vpack.c.b16 %v5967, %v5966
    %v5988 = vpack.c.b16 %v5969, %v5968
    %v5989 = vpack.c.b16 %v5971, %v5970
    %v5990 = vpack.c.b16 %v5973, %v5972
    %v5991 = vpack.c.b16 %v5975, %v5974
    %6008 = vmatpush.bf16.msra.mxu0 %v5983
    %6009 = vmatpush.bf16.msra.mxu0 %v5982
    %6010 = vmatpush.bf16.msra.mxu0 %v5981
    %6011 = vmatpush.bf16.msra.mxu0 %v5980
    %6012 = vmatpush.bf16.msra.mxu0 %v5979
    %6013 = vmatpush.bf16.msra.mxu0 %v5978
    %6014 = vmatpush.bf16.msra.mxu0 %v5977
    %6015 = vmatpush.bf16.msra.mxu0 %v5976
    %6016 = vmatmul.bf16.gmra.mxu0 %v5910
    %v6017 = vpop.f32.mrf.mxu0
    %v6018 = vadd.f32 %v5877, %v6017
    %v6019 = vpop.f32.mrf.mxu0
    %6020 = vdwg.mxu0
    %6021 = vmatpush.bf16.msra.mxu0 %v5991
    %6022 = vmatpush.bf16.msra.mxu0 %v5990
    %6023 = vmatpush.bf16.msra.mxu0 %v5989
    %6024 = vmatpush.bf16.msra.mxu0 %v5988
    %6025 = vmatpush.bf16.msra.mxu0 %v5987
    %6026 = vmatpush.bf16.msra.mxu0 %v5986
    %6027 = vmatpush.bf16.msra.mxu0 %v5985
    %6028 = vmatpush.bf16.msra.mxu0 %v5984
    %6029 = vmatmul.bf16.gmra.mxu0 %v5911
    %v6030 = vpop.f32.mrf.mxu0
    %v6031 = vadd.f32 %v6018, %v6030
    %v6032 = vpop.f32.mrf.mxu0
    %6033 = vdwg.mxu0
    %6034 = vst [vmem:[#allocation20] sm:$0xff] %v6031
    // Predicated region
    $region90: #{tpu_custom_call.1} parent=1 // pred_check
      _
    $region91: #{tpu_custom_call.1} parent=1 // pred_check_branch
      %6036 = sbr.rel (0) target = $region93
    $region92: #{tpu_custom_call.1} parent=1 // pred_region
      %6038 = vsyncadd [#allocation4], 0
      %s6040 = sshll.u32 [#allocation20], 4
      %s6041 = int_to_ptr.vmem [resolvable:$true] %s6040
      %s6042 = sshll.u32 %s11, 4
      %s6043 = int_to_ptr.hbm [resolvable:$true] %s6042
      %6045 = dma.vmem_to_hbm [thread:$0]  %s6041, 128, %s6043, [#allocation4]
    $region93: #{tpu_custom_call.1} parent=1 // pred_fallthru
      _
    // Predicated region
    $region94: #{tpu_custom_call.1} parent=1 // pred_check
      _
    $region95: #{tpu_custom_call.1} parent=1 // pred_check_branch
      %6047 = sbr.rel (0) target = $region97
    $region96: #{tpu_custom_call.1} parent=1 // pred_region
      %6049 = dma.done [#allocation4], 128
    $region97: #{tpu_custom_call.1} parent=1 // pred_fallthru
      _
    %6050 = vsyncpa [#allocation3], 1
    %6051 = vsyncpa [#allocation6], 1
    %6052 = vsyncpa [#allocation9], 1
    %6053 = vsyncpa [#allocation12], 1
    %6054 = vsyncpa [#allocation15], 1
    %6055 = vsyncpa [#allocation18], 1
    %6056 = vsyncpa [#allocation4], 1

</llo_original>
